<compile_context>
chip_gen: v7x
topology: tpu7x:2x2x1
jax: 0.10.0
libtpu: 0.0.40
codegen_flags: <defaults>
</compile_context>

<pallas_src>
import functools

import jax
import jax.numpy as jnp
from jax import lax
from jax.experimental import pallas as pl
from jax.experimental.pallas import tpu as pltpu


LANE = 128  # TPU lane width; channel axes are padded to a multiple of this.
# TODO(synk): for a tiny first-layer Cin (e.g. 3/4), pad the combined 9*Cin
# contraction to 128 instead of 9*round_up(Cin,128) to avoid 32x zero K-work.


def _round_up(x, m):
    return ((x + m - 1) // m) * m


def _pick_strip(h2, target):
    """Largest divisor of h2 that is <= target (strip rows per grid step)."""
    target = max(1, min(target, h2))
    for s in range(target, 0, -1):
        if h2 % s == 0:
            return s
    return h2


def _vmem_limit_bytes():
    try:
        phys = int(pltpu.get_tpu_info().vmem_capacity_bytes)
    except Exception:
        phys = 64 * 1024 * 1024          # conservative (v7x physical)
    return min(phys * 3 // 4, 96 * 1024 * 1024)


# ----------------------------------------------------------------------------
# Fused kernel: 2x2 max-pool -> [conv3x3 + folded-BN + ReLU] x 2, one
# (batch, row-strip) tile per grid step.  Pooled + mid activations stay in VMEM.
# ----------------------------------------------------------------------------
def _down_fused_kernel(x4_ref, halo_ref, w1_ref, s1_ref, b1_ref,
                       w2_ref, s2_ref, b2_ref, o_ref, pad1, pad2,
                       *, S, W2, C_in, C_mid, C_out):
    s = pl.program_id(1)
    n_strips = pl.num_programs(1)

    # ---- 2x2 max-pool (the four stride-2 phases were pre-split by the wrapper) ----
    pooled_main = jnp.maximum(jnp.maximum(x4_ref[0, 0], x4_ref[0, 1]),
                              jnp.maximum(x4_ref[0, 2], x4_ref[0, 3]))   # (S, W2, C_in)
    pooled_halo = jnp.maximum(jnp.maximum(halo_ref[0, 0, 0], halo_ref[0, 0, 1]),
                              jnp.maximum(halo_ref[0, 0, 2], halo_ref[0, 0, 3]))  # (4, W2, C_in)

    # ---- stage pooled strip (+2-row halo each side) into W-zero-padded VMEM.
    # Only the 1-pixel W border is zeroed; every interior element is written. ----
    zcol1 = jnp.zeros((S + 4, 1, C_in), pad1.dtype)
    pad1[:, 0:1, :] = zcol1
    pad1[:, W2 + 1:W2 + 2, :] = zcol1
    pad1[0:2, 1:W2 + 1, :] = pooled_halo[0:2]          # rows r0-2, r0-1 (0 off-image)
    pad1[2:S + 2, 1:W2 + 1, :] = pooled_main           # rows r0 .. r0+S-1
    pad1[S + 2:S + 4, 1:W2 + 1, :] = pooled_halo[2:4]  # rows r0+S, r0+S+1 (0 off-image)

    def conv3x3(pad_ref, w_ref, rows, cin):
        # 3 accumulated MXU matmuls, one per kernel row; K = 3*cin (>=384 fills
        # the 256-deep MXU on v6e/v7x).  No materialized im2col buffer.
        acc = None
        for ky in range(3):
            cols = jnp.concatenate(
                [pad_ref[ky:ky + rows, kx:kx + W2, :] for kx in range(3)],
                axis=-1)                                            # (rows, W2, 3*cin)
            part = jnp.dot(cols.reshape(rows * W2, 3 * cin),
                           w_ref[3 * cin * ky:3 * cin * (ky + 1), :],
                           preferred_element_type=jnp.float32)
            acc = part if acc is None else acc + part
        return acc

    # ---- conv1 + folded BN + ReLU over S+2 rows (output strip + 1-row y1 halo) ----
    y1 = conv3x3(pad1, w1_ref, S + 2, C_in)
    y1 = jnp.maximum(y1 * s1_ref[...] + b1_ref[...], 0.0)
    y1 = y1.reshape(S + 2, W2, C_mid).astype(pad2.dtype)

    zcol2 = jnp.zeros((S + 2, 1, C_mid), pad2.dtype)
    pad2[:, 0:1, :] = zcol2
    pad2[:, W2 + 1:W2 + 2, :] = zcol2
    pad2[:, 1:W2 + 1, :] = y1

    # conv2's "same" zero rows at the true image boundary: the y1 halo rows
    # computed there came from zero-padded pooled rows and are ReLU(BN(0)) != 0,
    # so overwrite them with zeros.
    @pl.when(s == 0)
    def _():
        pad2[0:1, :, :] = jnp.zeros((1, W2 + 2, C_mid), pad2.dtype)

    @pl.when(s == n_strips - 1)
    def _():
        pad2[S + 1:S + 2, :, :] = jnp.zeros((1, W2 + 2, C_mid), pad2.dtype)

    # ---- conv2 + folded BN + ReLU over the S output rows ----
    y2 = conv3x3(pad2, w2_ref, S, C_mid)
    y2 = jnp.maximum(y2 * s2_ref[...] + b2_ref[...], 0.0)
    o_ref[0] = y2.reshape(S, W2, C_out).astype(o_ref.dtype)


# ----------------------------------------------------------------------------
# Parameter packing / wrapper
# ----------------------------------------------------------------------------
def fold_bn(gamma, beta, running_mean, running_var, eps=1e-5):
    scale = gamma / jnp.sqrt(running_var + eps)
    shift = beta - running_mean * scale
    return scale, shift


def _pack_conv_weight(w_oihw, cp_in, cp_out, dtype):
    """PyTorch OIHW conv weight -> zero-padded (9*cp_in, cp_out) im2col layout."""
    cout, cin, kh, kw = w_oihw.shape
    w = jnp.transpose(w_oihw, (2, 3, 1, 0))                                  # -> HWIO
    w = jnp.pad(w, ((0, 0), (0, 0), (0, cp_in - cin), (0, cp_out - cout)))
    return w.reshape(kh * kw * cp_in, cp_out).astype(dtype)


def _pack_bn(bn, cp, c):
    # Invariant: pad lanes carry zero scale AND zero shift so padded output
    # channels stay exactly zero (downstream conv pad lanes also have zero weights).
    scale, shift = fold_bn(*bn)
    scale = jnp.pad(scale, (0, cp - c)).reshape(1, cp).astype(jnp.float32)
    shift = jnp.pad(shift, (0, cp - c)).reshape(1, cp).astype(jnp.float32)
    return scale, shift


def down_forward(params, x_nchw, *, matmul_dtype=jnp.bfloat16, strip_rows=64):
    """Down.forward: maxpool(2) -> conv3x3/BN/ReLU -> conv3x3/BN/ReLU (NCHW in/out).

    matmul_dtype=bf16 (default) keeps f32 accumulation + f32 BN/ReLU but feeds
    the MXU bf16 inputs (native on all TPU gens) -> small divergence vs the f32
    PyTorch module (documented tolerance ~1e-1 abs worst case at unit-scale
    activations).  matmul_dtype=jnp.float32 matches the module to ~1e-5.
    """
    N, Cin, H, W = x_nchw.shape
    # TODO(synk): PyTorch MaxPool2d(2) floors odd spatial sizes; only even H/W here.
    assert H % 2 == 0 and W % 2 == 0, "even spatial dims required"
    H2, W2 = H // 2, W // 2
    Cmid = params["w1"].shape[0]
    Cout = params["w2"].shape[0]
    assert params["w1"].shape[1] == Cin

    cp_in, cp_mid, cp_out = (_round_up(c, LANE) for c in (Cin, Cmid, Cout))

    # Row-strip tiling of the pooled H axis (bounds VMEM per step, gives the
    # v7x megacore N*n_strips parallel work units).
    S = _pick_strip(H2, strip_rows)
    n_strips = H2 // S

    # Single relayout pass over x: NCHW -> NHWC, cast to the matmul dtype,
    # channel-pad to lane width, split the four 2x2 pool phases.
    x = jnp.transpose(x_nchw, (0, 2, 3, 1)).astype(matmul_dtype)
    x = jnp.pad(x, ((0, 0), (0, 0), (0, 0), (0, cp_in - Cin)))
    x4 = (x.reshape(N, H2, 2, W2, 2, cp_in)
            .transpose(0, 2, 4, 1, 3, 5)
            .reshape(N, 4, H2, W2, cp_in))               # (N, 4, H2, W2, cp_in)

    # Per-strip 2-row pooled halo slabs (rows r0-2, r0-1, r0+S, r0+S+1; zero
    # off-image) gathered once on the wrapper side so the kernel needs no
    # overlapping / manual-DMA input blocks.
    xp = jnp.pad(x4, ((0, 0), (0, 0), (2, 2), (0, 0), (0, 0)))
    s_idx = jnp.arange(n_strips) * S
    row_idx = jnp.stack([s_idx, s_idx + 1, s_idx + S + 2, s_idx + S + 3], axis=1)
    halo = jnp.transpose(xp[:, :, row_idx], (0, 2, 1, 3, 4, 5))  # (N, ns, 4, 4, W2, cp_in)

    w1 = _pack_conv_weight(params["w1"], cp_in, cp_mid, matmul_dtype)
    w2 = _pack_conv_weight(params["w2"], cp_mid, cp_out, matmul_dtype)
    s1, b1 = _pack_bn(params["bn1"], cp_mid, Cmid)
    s2, b2 = _pack_bn(params["bn2"], cp_out, Cout)

    kernel = functools.partial(_down_fused_kernel, S=S, W2=W2,
                               C_in=cp_in, C_mid=cp_mid, C_out=cp_out)

    def run(single_buffer_consts):
        def const_spec(shape):
            kw = ({"pipeline_mode": pl.Buffered(1)}   # weights never change -> 1 buffer
                  if single_buffer_consts else {})
            return pl.BlockSpec(shape, lambda n, st: (0,) * len(shape), **kw)

        return pl.pallas_call(
            kernel,
            out_shape=jax.ShapeDtypeStruct((N, H2, W2, cp_out), x_nchw.dtype),
            grid=(N, n_strips),
            in_specs=[
                pl.BlockSpec((1, 4, S, W2, cp_in), lambda n, st: (n, 0, st, 0, 0)),
                pl.BlockSpec((1, 1, 4, 4, W2, cp_in),
                             lambda n, st: (n, st, 0, 0, 0, 0)),
                const_spec((9 * cp_in, cp_mid)),
                const_spec((1, cp_mid)),
                const_spec((1, cp_mid)),
                const_spec((9 * cp_mid, cp_out)),
                const_spec((1, cp_out)),
                const_spec((1, cp_out)),
            ],
            out_specs=pl.BlockSpec((1, S, W2, cp_out), lambda n, st: (n, st, 0, 0)),
            scratch_shapes=[
                pltpu.VMEM((S + 4, W2 + 2, cp_in), matmul_dtype),   # padded pooled strip
                pltpu.VMEM((S + 2, W2 + 2, cp_mid), matmul_dtype),  # padded mid strip
            ],
            compiler_params=pltpu.CompilerParams(
                dimension_semantics=("parallel", "parallel"),
                vmem_limit_bytes=_vmem_limit_bytes(),
            ),
        )(x4, halo, w1, s1, b1, w2, s2, b2)

    try:
        out = run(True)
    except Exception:
        # pl.Buffered(1) pipeline_mode not accepted by this jax version; the
        # constant inputs fall back to default double-buffering.
        out = run(False)

    # Drop channel padding; back to NCHW (module boundary contract).
    return jnp.transpose(out[..., :Cout], (0, 3, 1, 2))


# ----------------------------------------------------------------------------
# Parameters (PyTorch-style OIHW conv weights, inference-mode BN stats)
# ----------------------------------------------------------------------------
def init_down_params(key, in_channels, out_channels):
    mid_channels = out_channels  # DoubleConv default: mid = out
    ks = jax.random.split(key, 10)

    def n(k, shape):
        return jax.random.normal(k, shape, jnp.float32)

    p = {}
    p["w1"] = 0.1 * n(ks[0], (mid_channels, in_channels, 3, 3))   # OIHW
    p["w2"] = 0.1 * n(ks[1], (out_channels, mid_channels, 3, 3))  # OIHW
    p["bn1"] = (1.0 + 0.1 * n(ks[2], (mid_channels,)),            # gamma
                0.05 * n(ks[3], (mid_channels,)),                 # beta
                0.02 * n(ks[4], (mid_channels,)),                 # running_mean
                1.0 + 0.1 * jnp.abs(n(ks[5], (mid_channels,))))   # running_var
    p["bn2"] = (1.0 + 0.1 * n(ks[6], (out_channels,)),
                0.05 * n(ks[7], (out_channels,)),
                0.02 * n(ks[8], (out_channels,)),
                1.0 + 0.1 * jnp.abs(n(ks[9], (out_channels,))))
    return p


# ----------------------------------------------------------------------------
# Pure-JAX reference (correctness check only), NCHW end-to-end.
# ----------------------------------------------------------------------------
def down_forward_ref(params, x_nchw):
    N, C, H, W = x_nchw.shape
    x = x_nchw.reshape(N, C, H // 2, 2, W // 2, 2).max(axis=(3, 5))

    def conv_bn_relu_ref(x, w_oihw, bn):
        y = lax.conv_general_dilated(
            x, w_oihw, window_strides=(1, 1), padding="SAME",
            dimension_numbers=("NCHW", "OIHW", "NCHW"))
        s, b = fold_bn(*bn)
        return jnp.maximum(y * s[None, :, None, None] + b[None, :, None, None], 0.0)

    x = conv_bn_relu_ref(x, params["w1"], params["bn1"])
    x = conv_bn_relu_ref(x, params["w2"], params["bn2"])
    return x


if __name__ == "__main__":
    key = jax.random.PRNGKey(0)
    kx, kp = jax.random.split(key)

    N, Cin, Hin, Win = 2, 4, 16, 16
    Cout = 8
    x = jax.random.normal(kx, (N, Cin, Hin, Win), jnp.float32)   # NCHW like PyTorch
    params = init_down_params(kp, Cin, Cout)

    ref = down_forward_ref(params, x)

    # f32 matmul path, multi-strip (2 strips): exact-semantics check.
    out_f32 = jax.block_until_ready(
        down_forward(params, x, matmul_dtype=jnp.float32, strip_rows=4))
    assert out_f32.shape == (N, Cout, Hin // 2, Win // 2), out_f32.shape
    err = float(jnp.max(jnp.abs(out_f32 - ref)))
    assert jnp.allclose(out_f32, ref, rtol=1e-4, atol=1e-4), err

    # f32 matmul path, single strip (whole image per step).
    out_f32_1 = jax.block_until_ready(
        down_forward(params, x, matmul_dtype=jnp.float32))
    err1 = float(jnp.max(jnp.abs(out_f32_1 - ref)))
    assert jnp.allclose(out_f32_1, ref, rtol=1e-4, atol=1e-4), err1

    # Default bf16 MXU-input path (f32 accumulation): documented looser tolerance.
    out_bf16 = jax.block_until_ready(down_forward(params, x, strip_rows=4))
    err_bf16 = float(jnp.max(jnp.abs(out_bf16 - ref)))
    assert jnp.allclose(out_bf16, ref, rtol=5e-2, atol=1.5e-1), err_bf16

    print("KERNEL_OK")
</pallas_src>

<mosaic_0001>
module attributes {stable_mosaic.version = 11 : i64} {
  func.func @_down_fused_kernel(%arg0: i32, %arg1: i32, %arg2: memref<1x4x4x8x128xf32, #tpu.memory_space<vmem>>, %arg3: memref<1x1x4x4x8x128xf32, #tpu.memory_space<vmem>>, %arg4: memref<1152x128xf32, #tpu.memory_space<vmem>>, %arg5: memref<1x128xf32, #tpu.memory_space<vmem>>, %arg6: memref<1x128xf32, #tpu.memory_space<vmem>>, %arg7: memref<1152x128xf32, #tpu.memory_space<vmem>>, %arg8: memref<1x128xf32, #tpu.memory_space<vmem>>, %arg9: memref<1x128xf32, #tpu.memory_space<vmem>>, %arg10: memref<1x4x8x128xf32, #tpu.memory_space<vmem>>, %arg11: memref<8x10x128xf32, #tpu.memory_space<vmem>>, %arg12: memref<6x10x128xf32, #tpu.memory_space<vmem>>) attributes {dimension_semantics = [#tpu.dimension_semantics<parallel>, #tpu.dimension_semantics<parallel>], iteration_bounds = array<i64: 2, 2>, scalar_prefetch = 0 : i64, scratch_operands = 2 : i64, tpu.core_type = #tpu.core_type<tc>, window_params = [{transform_indices = @transform_0, window_bounds = array<i64: 1, 4, 4, 8, 128>}, {transform_indices = @transform_1, window_bounds = array<i64: 1, 1, 4, 4, 8, 128>}, {pipeline_mode = #tpu.pipeline_mode<synchronous>, transform_indices = @transform_2, window_bounds = array<i64: 1152, 128>}, {pipeline_mode = #tpu.pipeline_mode<synchronous>, transform_indices = @transform_3, window_bounds = array<i64: 1, 128>}, {pipeline_mode = #tpu.pipeline_mode<synchronous>, transform_indices = @transform_4, window_bounds = array<i64: 1, 128>}, {pipeline_mode = #tpu.pipeline_mode<synchronous>, transform_indices = @transform_5, window_bounds = array<i64: 1152, 128>}, {pipeline_mode = #tpu.pipeline_mode<synchronous>, transform_indices = @transform_6, window_bounds = array<i64: 1, 128>}, {pipeline_mode = #tpu.pipeline_mode<synchronous>, transform_indices = @transform_7, window_bounds = array<i64: 1, 128>}, {transform_indices = @transform_8, window_bounds = array<i64: 1, 4, 8, 128>}]} {
    %c0 = arith.constant 0 : index
    %c0_0 = arith.constant 0 : index
    %c0_1 = arith.constant 0 : index
    %c0_2 = arith.constant 0 : index
    %c0_3 = arith.constant 0 : index
    %0 = vector.load %arg2[%c0, %c0_0, %c0_1, %c0_2, %c0_3] : memref<1x4x4x8x128xf32, #tpu.memory_space<vmem>>, vector<1x1x4x8x128xf32>
    %1 = vector.shape_cast %0 : vector<1x1x4x8x128xf32> to vector<4x8x128xf32>
    %c0_4 = arith.constant 0 : index
    %c1 = arith.constant 1 : index
    %c0_5 = arith.constant 0 : index
    %c0_6 = arith.constant 0 : index
    %c0_7 = arith.constant 0 : index
    %2 = vector.load %arg2[%c0_4, %c1, %c0_5, %c0_6, %c0_7] : memref<1x4x4x8x128xf32, #tpu.memory_space<vmem>>, vector<1x1x4x8x128xf32>
    %3 = vector.shape_cast %2 : vector<1x1x4x8x128xf32> to vector<4x8x128xf32>
    %4 = arith.maximumf %1, %3 : vector<4x8x128xf32>
    %c0_8 = arith.constant 0 : index
    %c2 = arith.constant 2 : index
    %c0_9 = arith.constant 0 : index
    %c0_10 = arith.constant 0 : index
    %c0_11 = arith.constant 0 : index
    %5 = vector.load %arg2[%c0_8, %c2, %c0_9, %c0_10, %c0_11] : memref<1x4x4x8x128xf32, #tpu.memory_space<vmem>>, vector<1x1x4x8x128xf32>
    %6 = vector.shape_cast %5 : vector<1x1x4x8x128xf32> to vector<4x8x128xf32>
    %c0_12 = arith.constant 0 : index
    %c3 = arith.constant 3 : index
    %c0_13 = arith.constant 0 : index
    %c0_14 = arith.constant 0 : index
    %c0_15 = arith.constant 0 : index
    %7 = vector.load %arg2[%c0_12, %c3, %c0_13, %c0_14, %c0_15] : memref<1x4x4x8x128xf32, #tpu.memory_space<vmem>>, vector<1x1x4x8x128xf32>
    %8 = vector.shape_cast %7 : vector<1x1x4x8x128xf32> to vector<4x8x128xf32>
    %9 = arith.maximumf %6, %8 : vector<4x8x128xf32>
    %10 = arith.maximumf %4, %9 : vector<4x8x128xf32>
    %c0_16 = arith.constant 0 : index
    %c0_17 = arith.constant 0 : index
    %c0_18 = arith.constant 0 : index
    %c0_19 = arith.constant 0 : index
    %c0_20 = arith.constant 0 : index
    %c0_21 = arith.constant 0 : index
    %11 = vector.load %arg3[%c0_16, %c0_17, %c0_18, %c0_19, %c0_20, %c0_21] : memref<1x1x4x4x8x128xf32, #tpu.memory_space<vmem>>, vector<1x1x1x4x8x128xf32>
    %12 = vector.shape_cast %11 : vector<1x1x1x4x8x128xf32> to vector<4x8x128xf32>
    %c0_22 = arith.constant 0 : index
    %c0_23 = arith.constant 0 : index
    %c1_24 = arith.constant 1 : index
    %c0_25 = arith.constant 0 : index
    %c0_26 = arith.constant 0 : index
    %c0_27 = arith.constant 0 : index
    %13 = vector.load %arg3[%c0_22, %c0_23, %c1_24, %c0_25, %c0_26, %c0_27] : memref<1x1x4x4x8x128xf32, #tpu.memory_space<vmem>>, vector<1x1x1x4x8x128xf32>
    %14 = vector.shape_cast %13 : vector<1x1x1x4x8x128xf32> to vector<4x8x128xf32>
    %15 = arith.maximumf %12, %14 : vector<4x8x128xf32>
    %c0_28 = arith.constant 0 : index
    %c0_29 = arith.constant 0 : index
    %c2_30 = arith.constant 2 : index
    %c0_31 = arith.constant 0 : index
    %c0_32 = arith.constant 0 : index
    %c0_33 = arith.constant 0 : index
    %16 = vector.load %arg3[%c0_28, %c0_29, %c2_30, %c0_31, %c0_32, %c0_33] : memref<1x1x4x4x8x128xf32, #tpu.memory_space<vmem>>, vector<1x1x1x4x8x128xf32>
    %17 = vector.shape_cast %16 : vector<1x1x1x4x8x128xf32> to vector<4x8x128xf32>
    %c0_34 = arith.constant 0 : index
    %c0_35 = arith.constant 0 : index
    %c3_36 = arith.constant 3 : index
    %c0_37 = arith.constant 0 : index
    %c0_38 = arith.constant 0 : index
    %c0_39 = arith.constant 0 : index
    %18 = vector.load %arg3[%c0_34, %c0_35, %c3_36, %c0_37, %c0_38, %c0_39] : memref<1x1x4x4x8x128xf32, #tpu.memory_space<vmem>>, vector<1x1x1x4x8x128xf32>
    %19 = vector.shape_cast %18 : vector<1x1x1x4x8x128xf32> to vector<4x8x128xf32>
    %20 = arith.maximumf %17, %19 : vector<4x8x128xf32>
    %21 = arith.maximumf %15, %20 : vector<4x8x128xf32>
    %cst = arith.constant 0.000000e+00 : f32
    %22 = vector.broadcast %cst : f32 to vector<8x1x128xf32>
    %c0_40 = arith.constant 0 : index
    %c0_41 = arith.constant 0 : index
    %c0_42 = arith.constant 0 : index
    %23 = vector.load %arg11[%c0_40, %c0_41, %c0_42] : memref<8x10x128xf32, #tpu.memory_space<vmem>>, vector<8x1x128xf32>
    tpu.vector_store %arg11[%c0_40, %c0_41, %c0_42], %22 {strides = array<i32>} : memref<8x10x128xf32, #tpu.memory_space<vmem>>, vector<8x1x128xf32>,
    %c0_43 = arith.constant 0 : index
    %c9 = arith.constant 9 : index
    %c0_44 = arith.constant 0 : index
    %24 = vector.load %arg11[%c0_43, %c9, %c0_44] : memref<8x10x128xf32, #tpu.memory_space<vmem>>, vector<8x1x128xf32>
    tpu.vector_store %arg11[%c0_43, %c9, %c0_44], %22 {strides = array<i32>} : memref<8x10x128xf32, #tpu.memory_space<vmem>>, vector<8x1x128xf32>,
    %25 = vector.extract_strided_slice %21 {offsets = [0, 0, 0], sizes = [2, 8, 128], strides = [1, 1, 1]} : vector<4x8x128xf32> to vector<2x8x128xf32>
    %c0_45 = arith.constant 0 : index
    %c1_46 = arith.constant 1 : index
    %c0_47 = arith.constant 0 : index
    %26 = vector.load %arg11[%c0_45, %c1_46, %c0_47] : memref<8x10x128xf32, #tpu.memory_space<vmem>>, vector<2x8x128xf32>
    tpu.vector_store %arg11[%c0_45, %c1_46, %c0_47], %25 {strides = array<i32>} : memref<8x10x128xf32, #tpu.memory_space<vmem>>, vector<2x8x128xf32>,
    %c2_48 = arith.constant 2 : index
    %c1_49 = arith.constant 1 : index
    %c0_50 = arith.constant 0 : index
    %27 = vector.load %arg11[%c2_48, %c1_49, %c0_50] : memref<8x10x128xf32, #tpu.memory_space<vmem>>, vector<4x8x128xf32>
    tpu.vector_store %arg11[%c2_48, %c1_49, %c0_50], %10 {strides = array<i32>} : memref<8x10x128xf32, #tpu.memory_space<vmem>>, vector<4x8x128xf32>,
    %28 = vector.extract_strided_slice %21 {offsets = [2, 0, 0], sizes = [2, 8, 128], strides = [1, 1, 1]} : vector<4x8x128xf32> to vector<2x8x128xf32>
    %c6 = arith.constant 6 : index
    %c1_51 = arith.constant 1 : index
    %c0_52 = arith.constant 0 : index
    %29 = vector.load %arg11[%c6, %c1_51, %c0_52] : memref<8x10x128xf32, #tpu.memory_space<vmem>>, vector<2x8x128xf32>
    tpu.vector_store %arg11[%c6, %c1_51, %c0_52], %28 {strides = array<i32>} : memref<8x10x128xf32, #tpu.memory_space<vmem>>, vector<2x8x128xf32>,
    %c0_53 = arith.constant 0 : index
    %c0_54 = arith.constant 0 : index
    %c0_55 = arith.constant 0 : index
    %30 = vector.load %arg11[%c0_53, %c0_54, %c0_55] : memref<8x10x128xf32, #tpu.memory_space<vmem>>, vector<6x8x128xf32>
    %c0_56 = arith.constant 0 : index
    %c1_57 = arith.constant 1 : index
    %c0_58 = arith.constant 0 : index
    %31 = vector.load %arg11[%c0_56, %c1_57, %c0_58] : memref<8x10x128xf32, #tpu.memory_space<vmem>>, vector<6x8x128xf32>
    %c0_59 = arith.constant 0 : index
    %c2_60 = arith.constant 2 : index
    %c0_61 = arith.constant 0 : index
    %32 = vector.load %arg11[%c0_59, %c2_60, %c0_61] : memref<8x10x128xf32, #tpu.memory_space<vmem>>, vector<6x8x128xf32>
    %33 = tpu.concatenate %30, %31, %32 in 2 : vector<6x8x128xf32>, vector<6x8x128xf32>, vector<6x8x128xf32> -> vector<6x8x384xf32>
    %34 = vector.shape_cast %33 : vector<6x8x384xf32> to vector<48x384xf32>
    %c0_62 = arith.constant 0 : index
    %c0_63 = arith.constant 0 : index
    %35 = vector.load %arg4[%c0_62, %c0_63] : memref<1152x128xf32, #tpu.memory_space<vmem>>, vector<384x128xf32>
    %cst_64 = arith.constant dense<0.000000e+00> : vector<48x128xf32>
    %36 = tpu.matmul %34, %35, %cst_64 {dimension_numbers = #tpu.dot_dimension_numbers<[1], [0], [0], [1], [0, 0, 1, 1], [], []>} : vector<48x384xf32>, vector<384x128xf32>, vector<48x128xf32> -> vector<48x128xf32>
    %c1_65 = arith.constant 1 : index
    %c0_66 = arith.constant 0 : index
    %c0_67 = arith.constant 0 : index
    %37 = vector.load %arg11[%c1_65, %c0_66, %c0_67] : memref<8x10x128xf32, #tpu.memory_space<vmem>>, vector<6x8x128xf32>
    %c1_68 = arith.constant 1 : index
    %c1_69 = arith.constant 1 : index
    %c0_70 = arith.constant 0 : index
    %38 = vector.load %arg11[%c1_68, %c1_69, %c0_70] : memref<8x10x128xf32, #tpu.memory_space<vmem>>, vector<6x8x128xf32>
    %c1_71 = arith.constant 1 : index
    %c2_72 = arith.constant 2 : index
    %c0_73 = arith.constant 0 : index
    %39 = vector.load %arg11[%c1_71, %c2_72, %c0_73] : memref<8x10x128xf32, #tpu.memory_space<vmem>>, vector<6x8x128xf32>
    %40 = tpu.concatenate %37, %38, %39 in 2 : vector<6x8x128xf32>, vector<6x8x128xf32>, vector<6x8x128xf32> -> vector<6x8x384xf32>
    %41 = vector.shape_cast %40 : vector<6x8x384xf32> to vector<48x384xf32>
    %c384 = arith.constant 384 : index
    %c0_74 = arith.constant 0 : index
    %42 = vector.load %arg4[%c384, %c0_74] : memref<1152x128xf32, #tpu.memory_space<vmem>>, vector<384x128xf32>
    %cst_75 = arith.constant dense<0.000000e+00> : vector<48x128xf32>
    %43 = tpu.matmul %41, %42, %cst_75 {dimension_numbers = #tpu.dot_dimension_numbers<[1], [0], [0], [1], [0, 0, 1, 1], [], []>} : vector<48x384xf32>, vector<384x128xf32>, vector<48x128xf32> -> vector<48x128xf32>
    %44 = arith.addf %36, %43 : vector<48x128xf32>
    %c2_76 = arith.constant 2 : index
    %c0_77 = arith.constant 0 : index
    %c0_78 = arith.constant 0 : index
    %45 = vector.load %arg11[%c2_76, %c0_77, %c0_78] : memref<8x10x128xf32, #tpu.memory_space<vmem>>, vector<6x8x128xf32>
    %c2_79 = arith.constant 2 : index
    %c1_80 = arith.constant 1 : index
    %c0_81 = arith.constant 0 : index
    %46 = vector.load %arg11[%c2_79, %c1_80, %c0_81] : memref<8x10x128xf32, #tpu.memory_space<vmem>>, vector<6x8x128xf32>
    %c2_82 = arith.constant 2 : index
    %c2_83 = arith.constant 2 : index
    %c0_84 = arith.constant 0 : index
    %47 = vector.load %arg11[%c2_82, %c2_83, %c0_84] : memref<8x10x128xf32, #tpu.memory_space<vmem>>, vector<6x8x128xf32>
    %48 = tpu.concatenate %45, %46, %47 in 2 : vector<6x8x128xf32>, vector<6x8x128xf32>, vector<6x8x128xf32> -> vector<6x8x384xf32>
    %49 = vector.shape_cast %48 : vector<6x8x384xf32> to vector<48x384xf32>
    %c768 = arith.constant 768 : index
    %c0_85 = arith.constant 0 : index
    %50 = vector.load %arg4[%c768, %c0_85] : memref<1152x128xf32, #tpu.memory_space<vmem>>, vector<384x128xf32>
    %cst_86 = arith.constant dense<0.000000e+00> : vector<48x128xf32>
    %51 = tpu.matmul %49, %50, %cst_86 {dimension_numbers = #tpu.dot_dimension_numbers<[1], [0], [0], [1], [0, 0, 1, 1], [], []>} : vector<48x384xf32>, vector<384x128xf32>, vector<48x128xf32> -> vector<48x128xf32>
    %52 = arith.addf %44, %51 : vector<48x128xf32>
    %c0_87 = arith.constant 0 : index
    %c0_88 = arith.constant 0 : index
    %53 = vector.load %arg5[%c0_87, %c0_88] : memref<1x128xf32, #tpu.memory_space<vmem>>, vector<1x128xf32>
    %54 = vector.broadcast %53 : vector<1x128xf32> to vector<48x128xf32>
    %55 = arith.mulf %52, %54 : vector<48x128xf32>
    %c0_89 = arith.constant 0 : index
    %c0_90 = arith.constant 0 : index
    %56 = vector.load %arg6[%c0_89, %c0_90] : memref<1x128xf32, #tpu.memory_space<vmem>>, vector<1x128xf32>
    %57 = vector.broadcast %56 : vector<1x128xf32> to vector<48x128xf32>
    %58 = arith.addf %55, %57 : vector<48x128xf32>
    %cst_91 = arith.constant 0.000000e+00 : f32
    %59 = vector.broadcast %cst_91 : f32 to vector<48x128xf32>
    %60 = arith.maximumf %58, %59 : vector<48x128xf32>
    %61 = vector.shape_cast %60 : vector<48x128xf32> to vector<6x8x128xf32>
    %cst_92 = arith.constant 0.000000e+00 : f32
    %62 = vector.broadcast %cst_92 : f32 to vector<6x1x128xf32>
    %c0_93 = arith.constant 0 : index
    %c0_94 = arith.constant 0 : index
    %c0_95 = arith.constant 0 : index
    %63 = vector.load %arg12[%c0_93, %c0_94, %c0_95] : memref<6x10x128xf32, #tpu.memory_space<vmem>>, vector<6x1x128xf32>
    tpu.vector_store %arg12[%c0_93, %c0_94, %c0_95], %62 {strides = array<i32>} : memref<6x10x128xf32, #tpu.memory_space<vmem>>, vector<6x1x128xf32>,
    %c0_96 = arith.constant 0 : index
    %c9_97 = arith.constant 9 : index
    %c0_98 = arith.constant 0 : index
    %64 = vector.load %arg12[%c0_96, %c9_97, %c0_98] : memref<6x10x128xf32, #tpu.memory_space<vmem>>, vector<6x1x128xf32>
    tpu.vector_store %arg12[%c0_96, %c9_97, %c0_98], %62 {strides = array<i32>} : memref<6x10x128xf32, #tpu.memory_space<vmem>>, vector<6x1x128xf32>,
    %c0_99 = arith.constant 0 : index
    %c1_100 = arith.constant 1 : index
    %c0_101 = arith.constant 0 : index
    %65 = vector.load %arg12[%c0_99, %c1_100, %c0_101] : memref<6x10x128xf32, #tpu.memory_space<vmem>>, vector<6x8x128xf32>
    tpu.vector_store %arg12[%c0_99, %c1_100, %c0_101], %61 {strides = array<i32>} : memref<6x10x128xf32, #tpu.memory_space<vmem>>, vector<6x8x128xf32>,
    %c0_i32 = arith.constant 0 : i32
    %66 = arith.cmpi eq, %arg1, %c0_i32 : i32
    %67 = arith.extui %66 : i1 to i32
    %c0_i32_102 = arith.constant 0 : i32
    %68 = arith.cmpi ne, %67, %c0_i32_102 : i32
    scf.if %68 {
      %cst_149 = arith.constant 0.000000e+00 : f32
      %107 = vector.broadcast %cst_149 : f32 to vector<1x10x128xf32>
      %c0_150 = arith.constant 0 : index
      %c0_151 = arith.constant 0 : index
      %c0_152 = arith.constant 0 : index
      %108 = vector.load %arg12[%c0_150, %c0_151, %c0_152] : memref<6x10x128xf32, #tpu.memory_space<vmem>>, vector<1x10x128xf32>
      tpu.vector_store %arg12[%c0_150, %c0_151, %c0_152], %107 {strides = array<i32>} : memref<6x10x128xf32, #tpu.memory_space<vmem>>, vector<1x10x128xf32>,
    } else {
    }
    %c1_i32 = arith.constant 1 : i32
    %69 = arith.cmpi eq, %arg1, %c1_i32 : i32
    %70 = arith.extui %69 : i1 to i32
    %c0_i32_103 = arith.constant 0 : i32
    %71 = arith.cmpi ne, %70, %c0_i32_103 : i32
    scf.if %71 {
      %cst_149 = arith.constant 0.000000e+00 : f32
      %107 = vector.broadcast %cst_149 : f32 to vector<1x10x128xf32>
      %c5 = arith.constant 5 : index
      %c0_150 = arith.constant 0 : index
      %c0_151 = arith.constant 0 : index
      %108 = vector.load %arg12[%c5, %c0_150, %c0_151] : memref<6x10x128xf32, #tpu.memory_space<vmem>>, vector<1x10x128xf32>
      tpu.vector_store %arg12[%c5, %c0_150, %c0_151], %107 {strides = array<i32>} : memref<6x10x128xf32, #tpu.memory_space<vmem>>, vector<1x10x128xf32>,
    } else {
    }
    %c0_104 = arith.constant 0 : index
    %c0_105 = arith.constant 0 : index
    %c0_106 = arith.constant 0 : index
    %72 = vector.load %arg12[%c0_104, %c0_105, %c0_106] : memref<6x10x128xf32, #tpu.memory_space<vmem>>, vector<4x8x128xf32>
    %c0_107 = arith.constant 0 : index
    %c1_108 = arith.constant 1 : index
    %c0_109 = arith.constant 0 : index
    %73 = vector.load %arg12[%c0_107, %c1_108, %c0_109] : memref<6x10x128xf32, #tpu.memory_space<vmem>>, vector<4x8x128xf32>
    %c0_110 = arith.constant 0 : index
    %c2_111 = arith.constant 2 : index
    %c0_112 = arith.constant 0 : index
    %74 = vector.load %arg12[%c0_110, %c2_111, %c0_112] : memref<6x10x128xf32, #tpu.memory_space<vmem>>, vector<4x8x128xf32>
    %75 = tpu.concatenate %72, %73, %74 in 2 : vector<4x8x128xf32>, vector<4x8x128xf32>, vector<4x8x128xf32> -> vector<4x8x384xf32>
    %76 = vector.shape_cast %75 : vector<4x8x384xf32> to vector<32x384xf32>
    %c0_113 = arith.constant 0 : index
    %c0_114 = arith.constant 0 : index
    %77 = vector.load %arg7[%c0_113, %c0_114] : memref<1152x128xf32, #tpu.memory_space<vmem>>, vector<384x128xf32>
    %cst_115 = arith.constant dense<0.000000e+00> : vector<32x128xf32>
    %78 = tpu.matmul %76, %77, %cst_115 {dimension_numbers = #tpu.dot_dimension_numbers<[1], [0], [0], [1], [0, 0, 1, 1], [], []>} : vector<32x384xf32>, vector<384x128xf32>, vector<32x128xf32> -> vector<32x128xf32>
    %c1_116 = arith.constant 1 : index
    %c0_117 = arith.constant 0 : index
    %c0_118 = arith.constant 0 : index
    %79 = vector.load %arg12[%c1_116, %c0_117, %c0_118] : memref<6x10x128xf32, #tpu.memory_space<vmem>>, vector<4x8x128xf32>
    %c1_119 = arith.constant 1 : index
    %c1_120 = arith.constant 1 : index
    %c0_121 = arith.constant 0 : index
    %80 = vector.load %arg12[%c1_119, %c1_120, %c0_121] : memref<6x10x128xf32, #tpu.memory_space<vmem>>, vector<4x8x128xf32>
    %c1_122 = arith.constant 1 : index
    %c2_123 = arith.constant 2 : index
    %c0_124 = arith.constant 0 : index
    %81 = vector.load %arg12[%c1_122, %c2_123, %c0_124] : memref<6x10x128xf32, #tpu.memory_space<vmem>>, vector<4x8x128xf32>
    %82 = tpu.concatenate %79, %80, %81 in 2 : vector<4x8x128xf32>, vector<4x8x128xf32>, vector<4x8x128xf32> -> vector<4x8x384xf32>
    %83 = vector.shape_cast %82 : vector<4x8x384xf32> to vector<32x384xf32>
    %c384_125 = arith.constant 384 : index
    %c0_126 = arith.constant 0 : index
    %84 = vector.load %arg7[%c384_125, %c0_126] : memref<1152x128xf32, #tpu.memory_space<vmem>>, vector<384x128xf32>
    %cst_127 = arith.constant dense<0.000000e+00> : vector<32x128xf32>
    %85 = tpu.matmul %83, %84, %cst_127 {dimension_numbers = #tpu.dot_dimension_numbers<[1], [0], [0], [1], [0, 0, 1, 1], [], []>} : vector<32x384xf32>, vector<384x128xf32>, vector<32x128xf32> -> vector<32x128xf32>
    %86 = arith.addf %78, %85 : vector<32x128xf32>
    %c2_128 = arith.constant 2 : index
    %c0_129 = arith.constant 0 : index
    %c0_130 = arith.constant 0 : index
    %87 = vector.load %arg12[%c2_128, %c0_129, %c0_130] : memref<6x10x128xf32, #tpu.memory_space<vmem>>, vector<4x8x128xf32>
    %c2_131 = arith.constant 2 : index
    %c1_132 = arith.constant 1 : index
    %c0_133 = arith.constant 0 : index
    %88 = vector.load %arg12[%c2_131, %c1_132, %c0_133] : memref<6x10x128xf32, #tpu.memory_space<vmem>>, vector<4x8x128xf32>
    %c2_134 = arith.constant 2 : index
    %c2_135 = arith.constant 2 : index
    %c0_136 = arith.constant 0 : index
    %89 = vector.load %arg12[%c2_134, %c2_135, %c0_136] : memref<6x10x128xf32, #tpu.memory_space<vmem>>, vector<4x8x128xf32>
    %90 = tpu.concatenate %87, %88, %89 in 2 : vector<4x8x128xf32>, vector<4x8x128xf32>, vector<4x8x128xf32> -> vector<4x8x384xf32>
    %91 = vector.shape_cast %90 : vector<4x8x384xf32> to vector<32x384xf32>
    %c768_137 = arith.constant 768 : index
    %c0_138 = arith.constant 0 : index
    %92 = vector.load %arg7[%c768_137, %c0_138] : memref<1152x128xf32, #tpu.memory_space<vmem>>, vector<384x128xf32>
    %cst_139 = arith.constant dense<0.000000e+00> : vector<32x128xf32>
    %93 = tpu.matmul %91, %92, %cst_139 {dimension_numbers = #tpu.dot_dimension_numbers<[1], [0], [0], [1], [0, 0, 1, 1], [], []>} : vector<32x384xf32>, vector<384x128xf32>, vector<32x128xf32> -> vector<32x128xf32>
    %94 = arith.addf %86, %93 : vector<32x128xf32>
    %c0_140 = arith.constant 0 : index
    %c0_141 = arith.constant 0 : index
    %95 = vector.load %arg8[%c0_140, %c0_141] : memref<1x128xf32, #tpu.memory_space<vmem>>, vector<1x128xf32>
    %96 = vector.broadcast %95 : vector<1x128xf32> to vector<32x128xf32>
    %97 = arith.mulf %94, %96 : vector<32x128xf32>
    %c0_142 = arith.constant 0 : index
    %c0_143 = arith.constant 0 : index
    %98 = vector.load %arg9[%c0_142, %c0_143] : memref<1x128xf32, #tpu.memory_space<vmem>>, vector<1x128xf32>
    %99 = vector.broadcast %98 : vector<1x128xf32> to vector<32x128xf32>
    %100 = arith.addf %97, %99 : vector<32x128xf32>
    %cst_144 = arith.constant 0.000000e+00 : f32
    %101 = vector.broadcast %cst_144 : f32 to vector<32x128xf32>
    %102 = arith.maximumf %100, %101 : vector<32x128xf32>
    %103 = vector.shape_cast %102 : vector<32x128xf32> to vector<4x8x128xf32>
    %c0_145 = arith.constant 0 : index
    %c0_146 = arith.constant 0 : index
    %c0_147 = arith.constant 0 : index
    %c0_148 = arith.constant 0 : index
    %104 = vector.load %arg10[%c0_145, %c0_146, %c0_147, %c0_148] : memref<1x4x8x128xf32, #tpu.memory_space<vmem>>, vector<1x4x8x128xf32>
    %105 = vector.shape_cast %104 : vector<1x4x8x128xf32> to vector<4x8x128xf32>
    %106 = vector.shape_cast %103 : vector<4x8x128xf32> to vector<1x4x8x128xf32>
    tpu.vector_store %arg10[%c0_145, %c0_146, %c0_147, %c0_148], %106 {strides = array<i32>} : memref<1x4x8x128xf32, #tpu.memory_space<vmem>>, vector<1x4x8x128xf32>,
    return
  }
  func.func @transform_0(%arg0: i32, %arg1: i32) -> (i32, i32, i32, i32, i32) {
    %c0_i32 = arith.constant 0 : i32
    %c0_i32_0 = arith.constant 0 : i32
    %c0_i32_1 = arith.constant 0 : i32
    %c0_i32_2 = arith.constant 0 : i32
    return %arg0, %c0_i32, %arg1, %c0_i32_0, %c0_i32_1 : i32, i32, i32, i32, i32
  }
  func.func @transform_1(%arg0: i32, %arg1: i32) -> (i32, i32, i32, i32, i32, i32) {
    %c0_i32 = arith.constant 0 : i32
    %c0_i32_0 = arith.constant 0 : i32
    %c0_i32_1 = arith.constant 0 : i32
    %c0_i32_2 = arith.constant 0 : i32
    %c0_i32_3 = arith.constant 0 : i32
    return %arg0, %arg1, %c0_i32, %c0_i32_0, %c0_i32_1, %c0_i32_2 : i32, i32, i32, i32, i32, i32
  }
  func.func @transform_2(%arg0: i32, %arg1: i32) -> (i32, i32) {
    %c0_i32 = arith.constant 0 : i32
    %c0_i32_0 = arith.constant 0 : i32
    %c0_i32_1 = arith.constant 0 : i32
    return %c0_i32, %c0_i32_0 : i32, i32
  }
  func.func @transform_3(%arg0: i32, %arg1: i32) -> (i32, i32) {
    %c0_i32 = arith.constant 0 : i32
    %c0_i32_0 = arith.constant 0 : i32
    %c0_i32_1 = arith.constant 0 : i32
    return %c0_i32, %c0_i32_0 : i32, i32
  }
  func.func @transform_4(%arg0: i32, %arg1: i32) -> (i32, i32) {
    %c0_i32 = arith.constant 0 : i32
    %c0_i32_0 = arith.constant 0 : i32
    %c0_i32_1 = arith.constant 0 : i32
    return %c0_i32, %c0_i32_0 : i32, i32
  }
  func.func @transform_5(%arg0: i32, %arg1: i32) -> (i32, i32) {
    %c0_i32 = arith.constant 0 : i32
    %c0_i32_0 = arith.constant 0 : i32
    %c0_i32_1 = arith.constant 0 : i32
    return %c0_i32, %c0_i32_0 : i32, i32
  }
  func.func @transform_6(%arg0: i32, %arg1: i32) -> (i32, i32) {
    %c0_i32 = arith.constant 0 : i32
    %c0_i32_0 = arith.constant 0 : i32
    %c0_i32_1 = arith.constant 0 : i32
    return %c0_i32, %c0_i32_0 : i32, i32
  }
  func.func @transform_7(%arg0: i32, %arg1: i32) -> (i32, i32) {
    %c0_i32 = arith.constant 0 : i32
    %c0_i32_0 = arith.constant 0 : i32
    %c0_i32_1 = arith.constant 0 : i32
    return %c0_i32, %c0_i32_0 : i32, i32
  }
  func.func @transform_8(%arg0: i32, %arg1: i32) -> (i32, i32, i32, i32) {
    %c0_i32 = arith.constant 0 : i32
    %c0_i32_0 = arith.constant 0 : i32
    %c0_i32_1 = arith.constant 0 : i32
    return %arg0, %arg1, %c0_i32, %c0_i32_0 : i32, i32, i32, i32
  }
}

module attributes {stable_mosaic.version = 11 : i64} {
  func.func @_down_fused_kernel(%arg0: i32, %arg1: i32, %arg2: memref<1x4x4x8x128xf32, #tpu.memory_space<vmem>>, %arg3: memref<1x1x4x4x8x128xf32, #tpu.memory_space<vmem>>, %arg4: memref<1152x128xf32, #tpu.memory_space<vmem>>, %arg5: memref<1x128xf32, #tpu.memory_space<vmem>>, %arg6: memref<1x128xf32, #tpu.memory_space<vmem>>, %arg7: memref<1152x128xf32, #tpu.memory_space<vmem>>, %arg8: memref<1x128xf32, #tpu.memory_space<vmem>>, %arg9: memref<1x128xf32, #tpu.memory_space<vmem>>, %arg10: memref<1x4x8x128xf32, #tpu.memory_space<vmem>>, %arg11: memref<8x10x128xf32, #tpu.memory_space<vmem>>, %arg12: memref<6x10x128xf32, #tpu.memory_space<vmem>>) attributes {dimension_semantics = [#tpu.dimension_semantics<parallel>, #tpu.dimension_semantics<parallel>], iteration_bounds = array<i64: 2, 2>, scalar_prefetch = 0 : i64, scratch_operands = 2 : i64, tpu.core_type = #tpu.core_type<tc>, window_params = [{transform_indices = @transform_0, window_bounds = array<i64: 1, 4, 4, 8, 128>}, {transform_indices = @transform_1, window_bounds = array<i64: 1, 1, 4, 4, 8, 128>}, {pipeline_mode = #tpu.pipeline_mode<synchronous>, transform_indices = @transform_2, window_bounds = array<i64: 1152, 128>}, {pipeline_mode = #tpu.pipeline_mode<synchronous>, transform_indices = @transform_3, window_bounds = array<i64: 1, 128>}, {pipeline_mode = #tpu.pipeline_mode<synchronous>, transform_indices = @transform_4, window_bounds = array<i64: 1, 128>}, {pipeline_mode = #tpu.pipeline_mode<synchronous>, transform_indices = @transform_5, window_bounds = array<i64: 1152, 128>}, {pipeline_mode = #tpu.pipeline_mode<synchronous>, transform_indices = @transform_6, window_bounds = array<i64: 1, 128>}, {pipeline_mode = #tpu.pipeline_mode<synchronous>, transform_indices = @transform_7, window_bounds = array<i64: 1, 128>}, {transform_indices = @transform_8, window_bounds = array<i64: 1, 4, 8, 128>}]} {
    %c0 = arith.constant 0 : index
    %c0_0 = arith.constant 0 : index
    %c0_1 = arith.constant 0 : index
    %c0_2 = arith.constant 0 : index
    %c0_3 = arith.constant 0 : index
    %0 = vector.load %arg2[%c0, %c0_0, %c0_1, %c0_2, %c0_3] : memref<1x4x4x8x128xf32, #tpu.memory_space<vmem>>, vector<1x1x4x8x128xf32>
    %1 = vector.shape_cast %0 : vector<1x1x4x8x128xf32> to vector<4x8x128xf32>
    %c0_4 = arith.constant 0 : index
    %c1 = arith.constant 1 : index
    %c0_5 = arith.constant 0 : index
    %c0_6 = arith.constant 0 : index
    %c0_7 = arith.constant 0 : index
    %2 = vector.load %arg2[%c0_4, %c1, %c0_5, %c0_6, %c0_7] : memref<1x4x4x8x128xf32, #tpu.memory_space<vmem>>, vector<1x1x4x8x128xf32>
    %3 = vector.shape_cast %2 : vector<1x1x4x8x128xf32> to vector<4x8x128xf32>
    %4 = arith.maximumf %1, %3 : vector<4x8x128xf32>
    %c0_8 = arith.constant 0 : index
    %c2 = arith.constant 2 : index
    %c0_9 = arith.constant 0 : index
    %c0_10 = arith.constant 0 : index
    %c0_11 = arith.constant 0 : index
    %5 = vector.load %arg2[%c0_8, %c2, %c0_9, %c0_10, %c0_11] : memref<1x4x4x8x128xf32, #tpu.memory_space<vmem>>, vector<1x1x4x8x128xf32>
    %6 = vector.shape_cast %5 : vector<1x1x4x8x128xf32> to vector<4x8x128xf32>
    %c0_12 = arith.constant 0 : index
    %c3 = arith.constant 3 : index
    %c0_13 = arith.constant 0 : index
    %c0_14 = arith.constant 0 : index
    %c0_15 = arith.constant 0 : index
    %7 = vector.load %arg2[%c0_12, %c3, %c0_13, %c0_14, %c0_15] : memref<1x4x4x8x128xf32, #tpu.memory_space<vmem>>, vector<1x1x4x8x128xf32>
    %8 = vector.shape_cast %7 : vector<1x1x4x8x128xf32> to vector<4x8x128xf32>
    %9 = arith.maximumf %6, %8 : vector<4x8x128xf32>
    %10 = arith.maximumf %4, %9 : vector<4x8x128xf32>
    %c0_16 = arith.constant 0 : index
    %c0_17 = arith.constant 0 : index
    %c0_18 = arith.constant 0 : index
    %c0_19 = arith.constant 0 : index
    %c0_20 = arith.constant 0 : index
    %c0_21 = arith.constant 0 : index
    %11 = vector.load %arg3[%c0_16, %c0_17, %c0_18, %c0_19, %c0_20, %c0_21] : memref<1x1x4x4x8x128xf32, #tpu.memory_space<vmem>>, vector<1x1x1x4x8x128xf32>
    %12 = vector.shape_cast %11 : vector<1x1x1x4x8x128xf32> to vector<4x8x128xf32>
    %c0_22 = arith.constant 0 : index
    %c0_23 = arith.constant 0 : index
    %c1_24 = arith.constant 1 : index
    %c0_25 = arith.constant 0 : index
    %c0_26 = arith.constant 0 : index
    %c0_27 = arith.constant 0 : index
    %13 = vector.load %arg3[%c0_22, %c0_23, %c1_24, %c0_25, %c0_26, %c0_27] : memref<1x1x4x4x8x128xf32, #tpu.memory_space<vmem>>, vector<1x1x1x4x8x128xf32>
    %14 = vector.shape_cast %13 : vector<1x1x1x4x8x128xf32> to vector<4x8x128xf32>
    %15 = arith.maximumf %12, %14 : vector<4x8x128xf32>
    %c0_28 = arith.constant 0 : index
    %c0_29 = arith.constant 0 : index
    %c2_30 = arith.constant 2 : index
    %c0_31 = arith.constant 0 : index
    %c0_32 = arith.constant 0 : index
    %c0_33 = arith.constant 0 : index
    %16 = vector.load %arg3[%c0_28, %c0_29, %c2_30, %c0_31, %c0_32, %c0_33] : memref<1x1x4x4x8x128xf32, #tpu.memory_space<vmem>>, vector<1x1x1x4x8x128xf32>
    %17 = vector.shape_cast %16 : vector<1x1x1x4x8x128xf32> to vector<4x8x128xf32>
    %c0_34 = arith.constant 0 : index
    %c0_35 = arith.constant 0 : index
    %c3_36 = arith.constant 3 : index
    %c0_37 = arith.constant 0 : index
    %c0_38 = arith.constant 0 : index
    %c0_39 = arith.constant 0 : index
    %18 = vector.load %arg3[%c0_34, %c0_35, %c3_36, %c0_37, %c0_38, %c0_39] : memref<1x1x4x4x8x128xf32, #tpu.memory_space<vmem>>, vector<1x1x1x4x8x128xf32>
    %19 = vector.shape_cast %18 : vector<1x1x1x4x8x128xf32> to vector<4x8x128xf32>
    %20 = arith.maximumf %17, %19 : vector<4x8x128xf32>
    %21 = arith.maximumf %15, %20 : vector<4x8x128xf32>
    %cst = arith.constant 0.000000e+00 : f32
    %22 = vector.broadcast %cst : f32 to vector<8x1x128xf32>
    %c0_40 = arith.constant 0 : index
    %c0_41 = arith.constant 0 : index
    %c0_42 = arith.constant 0 : index
    %23 = vector.load %arg11[%c0_40, %c0_41, %c0_42] : memref<8x10x128xf32, #tpu.memory_space<vmem>>, vector<8x1x128xf32>
    tpu.vector_store %arg11[%c0_40, %c0_41, %c0_42], %22 {strides = array<i32>} : memref<8x10x128xf32, #tpu.memory_space<vmem>>, vector<8x1x128xf32>,
    %c0_43 = arith.constant 0 : index
    %c9 = arith.constant 9 : index
    %c0_44 = arith.constant 0 : index
    %24 = vector.load %arg11[%c0_43, %c9, %c0_44] : memref<8x10x128xf32, #tpu.memory_space<vmem>>, vector<8x1x128xf32>
    tpu.vector_store %arg11[%c0_43, %c9, %c0_44], %22 {strides = array<i32>} : memref<8x10x128xf32, #tpu.memory_space<vmem>>, vector<8x1x128xf32>,
    %25 = vector.extract_strided_slice %21 {offsets = [0, 0, 0], sizes = [2, 8, 128], strides = [1, 1, 1]} : vector<4x8x128xf32> to vector<2x8x128xf32>
    %c0_45 = arith.constant 0 : index
    %c1_46 = arith.constant 1 : index
    %c0_47 = arith.constant 0 : index
    %26 = vector.load %arg11[%c0_45, %c1_46, %c0_47] : memref<8x10x128xf32, #tpu.memory_space<vmem>>, vector<2x8x128xf32>
    tpu.vector_store %arg11[%c0_45, %c1_46, %c0_47], %25 {strides = array<i32>} : memref<8x10x128xf32, #tpu.memory_space<vmem>>, vector<2x8x128xf32>,
    %c2_48 = arith.constant 2 : index
    %c1_49 = arith.constant 1 : index
    %c0_50 = arith.constant 0 : index
    %27 = vector.load %arg11[%c2_48, %c1_49, %c0_50] : memref<8x10x128xf32, #tpu.memory_space<vmem>>, vector<4x8x128xf32>
    tpu.vector_store %arg11[%c2_48, %c1_49, %c0_50], %10 {strides = array<i32>} : memref<8x10x128xf32, #tpu.memory_space<vmem>>, vector<4x8x128xf32>,
    %28 = vector.extract_strided_slice %21 {offsets = [2, 0, 0], sizes = [2, 8, 128], strides = [1, 1, 1]} : vector<4x8x128xf32> to vector<2x8x128xf32>
    %c6 = arith.constant 6 : index
    %c1_51 = arith.constant 1 : index
    %c0_52 = arith.constant 0 : index
    %29 = vector.load %arg11[%c6, %c1_51, %c0_52] : memref<8x10x128xf32, #tpu.memory_space<vmem>>, vector<2x8x128xf32>
    tpu.vector_store %arg11[%c6, %c1_51, %c0_52], %28 {strides = array<i32>} : memref<8x10x128xf32, #tpu.memory_space<vmem>>, vector<2x8x128xf32>,
    %c0_53 = arith.constant 0 : index
    %c0_54 = arith.constant 0 : index
    %c0_55 = arith.constant 0 : index
    %30 = vector.load %arg11[%c0_53, %c0_54, %c0_55] : memref<8x10x128xf32, #tpu.memory_space<vmem>>, vector<6x8x128xf32>
    %c0_56 = arith.constant 0 : index
    %c1_57 = arith.constant 1 : index
    %c0_58 = arith.constant 0 : index
    %31 = vector.load %arg11[%c0_56, %c1_57, %c0_58] : memref<8x10x128xf32, #tpu.memory_space<vmem>>, vector<6x8x128xf32>
    %c0_59 = arith.constant 0 : index
    %c2_60 = arith.constant 2 : index
    %c0_61 = arith.constant 0 : index
    %32 = vector.load %arg11[%c0_59, %c2_60, %c0_61] : memref<8x10x128xf32, #tpu.memory_space<vmem>>, vector<6x8x128xf32>
    %33 = tpu.concatenate %30, %31, %32 in 2 : vector<6x8x128xf32>, vector<6x8x128xf32>, vector<6x8x128xf32> -> vector<6x8x384xf32>
    %34 = vector.shape_cast %33 : vector<6x8x384xf32> to vector<48x384xf32>
    %c0_62 = arith.constant 0 : index
    %c0_63 = arith.constant 0 : index
    %35 = vector.load %arg4[%c0_62, %c0_63] : memref<1152x128xf32, #tpu.memory_space<vmem>>, vector<384x128xf32>
    %cst_64 = arith.constant dense<0.000000e+00> : vector<48x128xf32>
    %36 = tpu.matmul %34, %35, %cst_64 {dimension_numbers = #tpu.dot_dimension_numbers<[1], [0], [0], [1], [0, 0, 1, 1], [], []>} : vector<48x384xf32>, vector<384x128xf32>, vector<48x128xf32> -> vector<48x128xf32>
    %c1_65 = arith.constant 1 : index
    %c0_66 = arith.constant 0 : index
    %c0_67 = arith.constant 0 : index
    %37 = vector.load %arg11[%c1_65, %c0_66, %c0_67] : memref<8x10x128xf32, #tpu.memory_space<vmem>>, vector<6x8x128xf32>
    %c1_68 = arith.constant 1 : index
    %c1_69 = arith.constant 1 : index
    %c0_70 = arith.constant 0 : index
    %38 = vector.load %arg11[%c1_68, %c1_69, %c0_70] : memref<8x10x128xf32, #tpu.memory_space<vmem>>, vector<6x8x128xf32>
    %c1_71 = arith.constant 1 : index
    %c2_72 = arith.constant 2 : index
    %c0_73 = arith.constant 0 : index
    %39 = vector.load %arg11[%c1_71, %c2_72, %c0_73] : memref<8x10x128xf32, #tpu.memory_space<vmem>>, vector<6x8x128xf32>
    %40 = tpu.concatenate %37, %38, %39 in 2 : vector<6x8x128xf32>, vector<6x8x128xf32>, vector<6x8x128xf32> -> vector<6x8x384xf32>
    %41 = vector.shape_cast %40 : vector<6x8x384xf32> to vector<48x384xf32>
    %c384 = arith.constant 384 : index
    %c0_74 = arith.constant 0 : index
    %42 = vector.load %arg4[%c384, %c0_74] : memref<1152x128xf32, #tpu.memory_space<vmem>>, vector<384x128xf32>
    %cst_75 = arith.constant dense<0.000000e+00> : vector<48x128xf32>
    %43 = tpu.matmul %41, %42, %cst_75 {dimension_numbers = #tpu.dot_dimension_numbers<[1], [0], [0], [1], [0, 0, 1, 1], [], []>} : vector<48x384xf32>, vector<384x128xf32>, vector<48x128xf32> -> vector<48x128xf32>
    %44 = arith.addf %36, %43 : vector<48x128xf32>
    %c2_76 = arith.constant 2 : index
    %c0_77 = arith.constant 0 : index
    %c0_78 = arith.constant 0 : index
    %45 = vector.load %arg11[%c2_76, %c0_77, %c0_78] : memref<8x10x128xf32, #tpu.memory_space<vmem>>, vector<6x8x128xf32>
    %c2_79 = arith.constant 2 : index
    %c1_80 = arith.constant 1 : index
    %c0_81 = arith.constant 0 : index
    %46 = vector.load %arg11[%c2_79, %c1_80, %c0_81] : memref<8x10x128xf32, #tpu.memory_space<vmem>>, vector<6x8x128xf32>
    %c2_82 = arith.constant 2 : index
    %c2_83 = arith.constant 2 : index
    %c0_84 = arith.constant 0 : index
    %47 = vector.load %arg11[%c2_82, %c2_83, %c0_84] : memref<8x10x128xf32, #tpu.memory_space<vmem>>, vector<6x8x128xf32>
    %48 = tpu.concatenate %45, %46, %47 in 2 : vector<6x8x128xf32>, vector<6x8x128xf32>, vector<6x8x128xf32> -> vector<6x8x384xf32>
    %49 = vector.shape_cast %48 : vector<6x8x384xf32> to vector<48x384xf32>
    %c768 = arith.constant 768 : index
    %c0_85 = arith.constant 0 : index
    %50 = vector.load %arg4[%c768, %c0_85] : memref<1152x128xf32, #tpu.memory_space<vmem>>, vector<384x128xf32>
    %cst_86 = arith.constant dense<0.000000e+00> : vector<48x128xf32>
    %51 = tpu.matmul %49, %50, %cst_86 {dimension_numbers = #tpu.dot_dimension_numbers<[1], [0], [0], [1], [0, 0, 1, 1], [], []>} : vector<48x384xf32>, vector<384x128xf32>, vector<48x128xf32> -> vector<48x128xf32>
    %52 = arith.addf %44, %51 : vector<48x128xf32>
    %c0_87 = arith.constant 0 : index
    %c0_88 = arith.constant 0 : index
    %53 = vector.load %arg5[%c0_87, %c0_88] : memref<1x128xf32, #tpu.memory_space<vmem>>, vector<1x128xf32>
    %54 = vector.broadcast %53 : vector<1x128xf32> to vector<48x128xf32>
    %55 = arith.mulf %52, %54 : vector<48x128xf32>
    %c0_89 = arith.constant 0 : index
    %c0_90 = arith.constant 0 : index
    %56 = vector.load %arg6[%c0_89, %c0_90] : memref<1x128xf32, #tpu.memory_space<vmem>>, vector<1x128xf32>
    %57 = vector.broadcast %56 : vector<1x128xf32> to vector<48x128xf32>
    %58 = arith.addf %55, %57 : vector<48x128xf32>
    %cst_91 = arith.constant 0.000000e+00 : f32
    %59 = vector.broadcast %cst_91 : f32 to vector<48x128xf32>
    %60 = arith.maximumf %58, %59 : vector<48x128xf32>
    %61 = vector.shape_cast %60 : vector<48x128xf32> to vector<6x8x128xf32>
    %cst_92 = arith.constant 0.000000e+00 : f32
    %62 = vector.broadcast %cst_92 : f32 to vector<6x1x128xf32>
    %c0_93 = arith.constant 0 : index
    %c0_94 = arith.constant 0 : index
    %c0_95 = arith.constant 0 : index
    %63 = vector.load %arg12[%c0_93, %c0_94, %c0_95] : memref<6x10x128xf32, #tpu.memory_space<vmem>>, vector<6x1x128xf32>
    tpu.vector_store %arg12[%c0_93, %c0_94, %c0_95], %62 {strides = array<i32>} : memref<6x10x128xf32, #tpu.memory_space<vmem>>, vector<6x1x128xf32>,
    %c0_96 = arith.constant 0 : index
    %c9_97 = arith.constant 9 : index
    %c0_98 = arith.constant 0 : index
    %64 = vector.load %arg12[%c0_96, %c9_97, %c0_98] : memref<6x10x128xf32, #tpu.memory_space<vmem>>, vector<6x1x128xf32>
    tpu.vector_store %arg12[%c0_96, %c9_97, %c0_98], %62 {strides = array<i32>} : memref<6x10x128xf32, #tpu.memory_space<vmem>>, vector<6x1x128xf32>,
    %c0_99 = arith.constant 0 : index
    %c1_100 = arith.constant 1 : index
    %c0_101 = arith.constant 0 : index
    %65 = vector.load %arg12[%c0_99, %c1_100, %c0_101] : memref<6x10x128xf32, #tpu.memory_space<vmem>>, vector<6x8x128xf32>
    tpu.vector_store %arg12[%c0_99, %c1_100, %c0_101], %61 {strides = array<i32>} : memref<6x10x128xf32, #tpu.memory_space<vmem>>, vector<6x8x128xf32>,
    %c0_i32 = arith.constant 0 : i32
    %66 = arith.cmpi eq, %arg1, %c0_i32 : i32
    %67 = arith.extui %66 : i1 to i32
    %c0_i32_102 = arith.constant 0 : i32
    %68 = arith.cmpi ne, %67, %c0_i32_102 : i32
    scf.if %68 {
      %cst_149 = arith.constant 0.000000e+00 : f32
      %107 = vector.broadcast %cst_149 : f32 to vector<1x10x128xf32>
      %c0_150 = arith.constant 0 : index
      %c0_151 = arith.constant 0 : index
      %c0_152 = arith.constant 0 : index
      %108 = vector.load %arg12[%c0_150, %c0_151, %c0_152] : memref<6x10x128xf32, #tpu.memory_space<vmem>>, vector<1x10x128xf32>
      tpu.vector_store %arg12[%c0_150, %c0_151, %c0_152], %107 {strides = array<i32>} : memref<6x10x128xf32, #tpu.memory_space<vmem>>, vector<1x10x128xf32>,
    } else {
    }
    %c1_i32 = arith.constant 1 : i32
    %69 = arith.cmpi eq, %arg1, %c1_i32 : i32
    %70 = arith.extui %69 : i1 to i32
    %c0_i32_103 = arith.constant 0 : i32
    %71 = arith.cmpi ne, %70, %c0_i32_103 : i32
    scf.if %71 {
      %cst_149 = arith.constant 0.000000e+00 : f32
      %107 = vector.broadcast %cst_149 : f32 to vector<1x10x128xf32>
      %c5 = arith.constant 5 : index
      %c0_150 = arith.constant 0 : index
      %c0_151 = arith.constant 0 : index
      %108 = vector.load %arg12[%c5, %c0_150, %c0_151] : memref<6x10x128xf32, #tpu.memory_space<vmem>>, vector<1x10x128xf32>
      tpu.vector_store %arg12[%c5, %c0_150, %c0_151], %107 {strides = array<i32>} : memref<6x10x128xf32, #tpu.memory_space<vmem>>, vector<1x10x128xf32>,
    } else {
    }
    %c0_104 = arith.constant 0 : index
    %c0_105 = arith.constant 0 : index
    %c0_106 = arith.constant 0 : index
    %72 = vector.load %arg12[%c0_104, %c0_105, %c0_106] : memref<6x10x128xf32, #tpu.memory_space<vmem>>, vector<4x8x128xf32>
    %c0_107 = arith.constant 0 : index
    %c1_108 = arith.constant 1 : index
    %c0_109 = arith.constant 0 : index
    %73 = vector.load %arg12[%c0_107, %c1_108, %c0_109] : memref<6x10x128xf32, #tpu.memory_space<vmem>>, vector<4x8x128xf32>
    %c0_110 = arith.constant 0 : index
    %c2_111 = arith.constant 2 : index
    %c0_112 = arith.constant 0 : index
    %74 = vector.load %arg12[%c0_110, %c2_111, %c0_112] : memref<6x10x128xf32, #tpu.memory_space<vmem>>, vector<4x8x128xf32>
    %75 = tpu.concatenate %72, %73, %74 in 2 : vector<4x8x128xf32>, vector<4x8x128xf32>, vector<4x8x128xf32> -> vector<4x8x384xf32>
    %76 = vector.shape_cast %75 : vector<4x8x384xf32> to vector<32x384xf32>
    %c0_113 = arith.constant 0 : index
    %c0_114 = arith.constant 0 : index
    %77 = vector.load %arg7[%c0_113, %c0_114] : memref<1152x128xf32, #tpu.memory_space<vmem>>, vector<384x128xf32>
    %cst_115 = arith.constant dense<0.000000e+00> : vector<32x128xf32>
    %78 = tpu.matmul %76, %77, %cst_115 {dimension_numbers = #tpu.dot_dimension_numbers<[1], [0], [0], [1], [0, 0, 1, 1], [], []>} : vector<32x384xf32>, vector<384x128xf32>, vector<32x128xf32> -> vector<32x128xf32>
    %c1_116 = arith.constant 1 : index
    %c0_117 = arith.constant 0 : index
    %c0_118 = arith.constant 0 : index
    %79 = vector.load %arg12[%c1_116, %c0_117, %c0_118] : memref<6x10x128xf32, #tpu.memory_space<vmem>>, vector<4x8x128xf32>
    %c1_119 = arith.constant 1 : index
    %c1_120 = arith.constant 1 : index
    %c0_121 = arith.constant 0 : index
    %80 = vector.load %arg12[%c1_119, %c1_120, %c0_121] : memref<6x10x128xf32, #tpu.memory_space<vmem>>, vector<4x8x128xf32>
    %c1_122 = arith.constant 1 : index
    %c2_123 = arith.constant 2 : index
    %c0_124 = arith.constant 0 : index
    %81 = vector.load %arg12[%c1_122, %c2_123, %c0_124] : memref<6x10x128xf32, #tpu.memory_space<vmem>>, vector<4x8x128xf32>
    %82 = tpu.concatenate %79, %80, %81 in 2 : vector<4x8x128xf32>, vector<4x8x128xf32>, vector<4x8x128xf32> -> vector<4x8x384xf32>
    %83 = vector.shape_cast %82 : vector<4x8x384xf32> to vector<32x384xf32>
    %c384_125 = arith.constant 384 : index
    %c0_126 = arith.constant 0 : index
    %84 = vector.load %arg7[%c384_125, %c0_126] : memref<1152x128xf32, #tpu.memory_space<vmem>>, vector<384x128xf32>
    %cst_127 = arith.constant dense<0.000000e+00> : vector<32x128xf32>
    %85 = tpu.matmul %83, %84, %cst_127 {dimension_numbers = #tpu.dot_dimension_numbers<[1], [0], [0], [1], [0, 0, 1, 1], [], []>} : vector<32x384xf32>, vector<384x128xf32>, vector<32x128xf32> -> vector<32x128xf32>
    %86 = arith.addf %78, %85 : vector<32x128xf32>
    %c2_128 = arith.constant 2 : index
    %c0_129 = arith.constant 0 : index
    %c0_130 = arith.constant 0 : index
    %87 = vector.load %arg12[%c2_128, %c0_129, %c0_130] : memref<6x10x128xf32, #tpu.memory_space<vmem>>, vector<4x8x128xf32>
    %c2_131 = arith.constant 2 : index
    %c1_132 = arith.constant 1 : index
    %c0_133 = arith.constant 0 : index
    %88 = vector.load %arg12[%c2_131, %c1_132, %c0_133] : memref<6x10x128xf32, #tpu.memory_space<vmem>>, vector<4x8x128xf32>
    %c2_134 = arith.constant 2 : index
    %c2_135 = arith.constant 2 : index
    %c0_136 = arith.constant 0 : index
    %89 = vector.load %arg12[%c2_134, %c2_135, %c0_136] : memref<6x10x128xf32, #tpu.memory_space<vmem>>, vector<4x8x128xf32>
    %90 = tpu.concatenate %87, %88, %89 in 2 : vector<4x8x128xf32>, vector<4x8x128xf32>, vector<4x8x128xf32> -> vector<4x8x384xf32>
    %91 = vector.shape_cast %90 : vector<4x8x384xf32> to vector<32x384xf32>
    %c768_137 = arith.constant 768 : index
    %c0_138 = arith.constant 0 : index
    %92 = vector.load %arg7[%c768_137, %c0_138] : memref<1152x128xf32, #tpu.memory_space<vmem>>, vector<384x128xf32>
    %cst_139 = arith.constant dense<0.000000e+00> : vector<32x128xf32>
    %93 = tpu.matmul %91, %92, %cst_139 {dimension_numbers = #tpu.dot_dimension_numbers<[1], [0], [0], [1], [0, 0, 1, 1], [], []>} : vector<32x384xf32>, vector<384x128xf32>, vector<32x128xf32> -> vector<32x128xf32>
    %94 = arith.addf %86, %93 : vector<32x128xf32>
    %c0_140 = arith.constant 0 : index
    %c0_141 = arith.constant 0 : index
    %95 = vector.load %arg8[%c0_140, %c0_141] : memref<1x128xf32, #tpu.memory_space<vmem>>, vector<1x128xf32>
    %96 = vector.broadcast %95 : vector<1x128xf32> to vector<32x128xf32>
    %97 = arith.mulf %94, %96 : vector<32x128xf32>
    %c0_142 = arith.constant 0 : index
    %c0_143 = arith.constant 0 : index
    %98 = vector.load %arg9[%c0_142, %c0_143] : memref<1x128xf32, #tpu.memory_space<vmem>>, vector<1x128xf32>
    %99 = vector.broadcast %98 : vector<1x128xf32> to vector<32x128xf32>
    %100 = arith.addf %97, %99 : vector<32x128xf32>
    %cst_144 = arith.constant 0.000000e+00 : f32
    %101 = vector.broadcast %cst_144 : f32 to vector<32x128xf32>
    %102 = arith.maximumf %100, %101 : vector<32x128xf32>
    %103 = vector.shape_cast %102 : vector<32x128xf32> to vector<4x8x128xf32>
    %c0_145 = arith.constant 0 : index
    %c0_146 = arith.constant 0 : index
    %c0_147 = arith.constant 0 : index
    %c0_148 = arith.constant 0 : index
    %104 = vector.load %arg10[%c0_145, %c0_146, %c0_147, %c0_148] : memref<1x4x8x128xf32, #tpu.memory_space<vmem>>, vector<1x4x8x128xf32>
    %105 = vector.shape_cast %104 : vector<1x4x8x128xf32> to vector<4x8x128xf32>
    %106 = vector.shape_cast %103 : vector<4x8x128xf32> to vector<1x4x8x128xf32>
    tpu.vector_store %arg10[%c0_145, %c0_146, %c0_147, %c0_148], %106 {strides = array<i32>} : memref<1x4x8x128xf32, #tpu.memory_space<vmem>>, vector<1x4x8x128xf32>,
    return
  }
  func.func @transform_0(%arg0: i32, %arg1: i32) -> (i32, i32, i32, i32, i32) {
    %c0_i32 = arith.constant 0 : i32
    %c0_i32_0 = arith.constant 0 : i32
    %c0_i32_1 = arith.constant 0 : i32
    %c0_i32_2 = arith.constant 0 : i32
    return %arg0, %c0_i32, %arg1, %c0_i32_0, %c0_i32_1 : i32, i32, i32, i32, i32
  }
  func.func @transform_1(%arg0: i32, %arg1: i32) -> (i32, i32, i32, i32, i32, i32) {
    %c0_i32 = arith.constant 0 : i32
    %c0_i32_0 = arith.constant 0 : i32
    %c0_i32_1 = arith.constant 0 : i32
    %c0_i32_2 = arith.constant 0 : i32
    %c0_i32_3 = arith.constant 0 : i32
    return %arg0, %arg1, %c0_i32, %c0_i32_0, %c0_i32_1, %c0_i32_2 : i32, i32, i32, i32, i32, i32
  }
  func.func @transform_2(%arg0: i32, %arg1: i32) -> (i32, i32) {
    %c0_i32 = arith.constant 0 : i32
    %c0_i32_0 = arith.constant 0 : i32
    %c0_i32_1 = arith.constant 0 : i32
    return %c0_i32, %c0_i32_0 : i32, i32
  }
  func.func @transform_3(%arg0: i32, %arg1: i32) -> (i32, i32) {
    %c0_i32 = arith.constant 0 : i32
    %c0_i32_0 = arith.constant 0 : i32
    %c0_i32_1 = arith.constant 0 : i32
    return %c0_i32, %c0_i32_0 : i32, i32
  }
  func.func @transform_4(%arg0: i32, %arg1: i32) -> (i32, i32) {
    %c0_i32 = arith.constant 0 : i32
    %c0_i32_0 = arith.constant 0 : i32
    %c0_i32_1 = arith.constant 0 : i32
    return %c0_i32, %c0_i32_0 : i32, i32
  }
  func.func @transform_5(%arg0: i32, %arg1: i32) -> (i32, i32) {
    %c0_i32 = arith.constant 0 : i32
    %c0_i32_0 = arith.constant 0 : i32
    %c0_i32_1 = arith.constant 0 : i32
    return %c0_i32, %c0_i32_0 : i32, i32
  }
  func.func @transform_6(%arg0: i32, %arg1: i32) -> (i32, i32) {
    %c0_i32 = arith.constant 0 : i32
    %c0_i32_0 = arith.constant 0 : i32
    %c0_i32_1 = arith.constant 0 : i32
    return %c0_i32, %c0_i32_0 : i32, i32
  }
  func.func @transform_7(%arg0: i32, %arg1: i32) -> (i32, i32) {
    %c0_i32 = arith.constant 0 : i32
    %c0_i32_0 = arith.constant 0 : i32
    %c0_i32_1 = arith.constant 0 : i32
    return %c0_i32, %c0_i32_0 : i32, i32
  }
  func.func @transform_8(%arg0: i32, %arg1: i32) -> (i32, i32, i32, i32) {
    %c0_i32 = arith.constant 0 : i32
    %c0_i32_0 = arith.constant 0 : i32
    %c0_i32_1 = arith.constant 0 : i32
    return %arg0, %arg1, %c0_i32, %c0_i32_0 : i32, i32, i32, i32
  }
}

</mosaic_0001>

<llo_original>
// kernel: tpu_custom_call.1
$region0: #{tpu_custom_call.1}
  #allocation0 [shape = 'u32[]', space=smem, size = 0x4, offset = 0x4, fixed_abs, tag = 'smem constant byte address 0x4 - core index']
  #allocation1 [shape = 'u32[144,128]{1,0:T(1,128)}', space=vmem, size = 0x12000, scoped, tag = 'internal scratch']
  #allocation2 [shape = 'f32[8,10,128]{2,1,0:T(8,128)}', space=vmem, size = 0x10000, scoped, tag = 'scratch operand']
  #allocation3 [shape = 'f32[6,10,128]{2,1,0:T(8,128)}', space=vmem, size = 0xc000, scoped, tag = 'scratch operand']
  #allocation13 [shape = 's32[]', space=sflag, size = 0x4, offset = 0, fixed_abs, tag = 'sflag constant byte address 0x0 - dummy sync flag']
  %s0 = inlined_call_operand.hbm [shape: f32[2,4,8,8,128], index: 0, kind: input, shape index: {}]
  %s1 = inlined_call_operand.hbm [shape: f32[2,2,4,4,8,128], index: 1, kind: input, shape index: {}]
  %s2 = inlined_call_operand.hbm [shape: f32[1152,128], index: 2, kind: input, shape index: {}]
  %s3 = inlined_call_operand.vmem [shape: f32[1,128], index: 3, kind: input, shape index: {}]
  %s4 = inlined_call_operand.vmem [shape: f32[1,128], index: 4, kind: input, shape index: {}]
  %s5 = inlined_call_operand.hbm [shape: f32[1152,128], index: 5, kind: input, shape index: {}]
  %s6 = inlined_call_operand.vmem [shape: f32[1,128], index: 6, kind: input, shape index: {}]
  %s7 = inlined_call_operand.vmem [shape: f32[1,128], index: 7, kind: input, shape index: {}]
  %s8 = inlined_call_operand.hbm [shape: f32[2,8,8,128], index: 8, kind: output, shape index: {}]
  %s9 = sld [smem:[#allocation0]]
  $region89: #{tpu_custom_call.1} parent=0
    _
  %s11 = ssub.s32 1, %s9
  %s12 = scalar_select 0, %s11, %s9
  $region1: #{tpu_custom_call.1} parent=0
    #allocation4 [shape = 'u8[131072]{0}', space=vmem, size = 0x20000, scoped, tag = 'input window, operand 0']
    #allocation5 [shape = 's32[2]{0}', space=sflag, size = 0x8, scoped, tag = 'scoped memory for tpu_custom_call.1']
    #allocation6 [shape = 's32[2]{0}', space=sflag, size = 0x8, scoped, tag = 'scoped memory for tpu_custom_call.1']
    #allocation7 [shape = 'u8[131072]{0}', space=vmem, size = 0x20000, scoped, tag = 'input window, operand 1']
    #allocation8 [shape = 's32[2]{0}', space=sflag, size = 0x8, scoped, tag = 'scoped memory for tpu_custom_call.1']
    #allocation9 [shape = 'u8[589824]{0}', space=vmem, size = 0x90000, scoped, tag = 'input window, operand 2, single buffered']
    #allocation10 [shape = 'u8[589824]{0}', space=vmem, size = 0x90000, scoped, tag = 'input window, operand 5, single buffered']
    #allocation11 [shape = 's32[1]{0}', space=sflag, size = 0x4, scoped, tag = 'scoped memory for tpu_custom_call.1']
    #allocation12 [shape = 'u8[32768]{0}', space=vmem, size = 0x8000, scoped, tag = 'output window, operand 0']
    %13 = vsyncpa [#allocation5], 0
    %s14 = scalar_lea.sflag [#allocation5], 1
    %15 = vsyncpa %s14, 0
    %16 = vsyncpa [#allocation8], 0
    %s17 = scalar_lea.sflag [#allocation8], 1
    %18 = vsyncpa %s17, 0
    %19 = vsyncpa [#allocation11], 0
    %20 = vsyncpa [#allocation6], 0
    %s21 = scalar_lea.sflag [#allocation6], 1
    %22 = vsyncpa %s21, 0
    loop: start=0, step=1, limit=6
    $region2: #{tpu_custom_call.1} parent=1 // loop_pre_header
      _
    $region3: #{tpu_custom_call.1} parent=1 // loop_header
      %s24 = sphi 0, %s28
      %p25 = scmp.ge.s32.totalorder %s24, 6
      %s31 = sphi 0, %s43
      %s32 = sphi 0, %s39
      %s33 = sphi 0, %s31
      %s34 = sphi 0, %s32
      %s35 = sphi 0, %s33
      %s36 = sphi 0, %s34
      %s48 = sphi 0, %s50
      %s51 = sphi 0, %s48
      %s52 = sphi 0, %s51
      %s68 = sphi 0, %s52
      %s76 = sphi 0, %s78
      %s79 = sphi 0, %s76
      %s80 = sphi 0, %s79
      %s96 = sphi 0, %s80
      %s100 = sphi 0, %s100
      %s102 = sphi 0, %s100
      %s103 = sphi 0, %s102
      %s117 = sphi 0, %s103
      %s121 = sphi 0, %s121
      %s123 = sphi 0, %s121
      %s124 = sphi 0, %s123
      %s138 = sphi 0, %s124
      %s142 = sphi 0, %s142
      %s144 = sphi 0, %s142
      %s145 = sphi 0, %s144
      %s159 = sphi 0, %s145
      %s163 = sphi 0, %s163
      %s165 = sphi 0, %s163
      %s166 = sphi 0, %s165
      %s180 = sphi 0, %s166
      %s184 = sphi 0, %s184
      %s186 = sphi 0, %s184
      %s187 = sphi 0, %s186
      %s201 = sphi 0, %s187
      %s205 = sphi 0, %s205
      %s207 = sphi 0, %s205
      %s208 = sphi 0, %s207
      %s222 = sphi 0, %s208
      %s230 = sphi 0, %s232
      %s233 = sphi 0, %s230
      %s234 = sphi 0, %s233
      %s250 = sphi 0, %s234
    $region4: #{tpu_custom_call.1} parent=1 // loop_header_branch
      %27 = sbr.rel (%p25) target = $region8
    $region5: #{tpu_custom_call.1} parent=1 // loop_body
      %s29 = ssub.s32 %s24, 1
      %s30 = ssub.s32 %s24, 2
      %s37 = sadd.s32 1, %s32
      %p38 = scmp.ge.s32.totalorder %s37, 2
      %s39 = scalar_select %p38, 0, %s37
      %s40 = sadd.s32 1, %s31
      %s41 = scalar_select %p38, %s40, %s31
      %p42 = scmp.ge.s32.totalorder %s41, 2
      %s43 = scalar_select %p42, 0, %s41
      %s44 = ssub.s32 %s31, %s43
      %s45 = ssub.s32 %s32, %s39
      %s46 = sor.u32 %s44, %s45
      %p47 = scmp.eq.s32.totalorder %s46, 0
      %s49 = sadd.s32 %s48, 1
      %s50 = scalar_select %p47, %s48, %s49
      %p53 = pneg %p47
      %p54 = scmp.eq.s32.totalorder %s24, 3
      %p55 = por %p53, %p54
      %p56 = scmp.ne.s32.totalorder %s48, %s51
      %p57 = scmp.eq.s32.totalorder %s24, 0
      %p58 = por %p56, %p57
      %p59 = scmp.ne.s32.totalorder %s48, %s51
      %p60 = scmp.eq.s32.totalorder %s29, 3
      %p61 = por %p59, %p60
      %p62 = scmp.ne.s32.totalorder %s51, %s52
      %p63 = scmp.eq.s32.totalorder %s29, 0
      %p64 = por %p62, %p63
      %p65 = scmp.ne.s32.totalorder %s51, %s52
      %p66 = scmp.eq.s32.totalorder %s30, 3
      %p67 = por %p65, %p66
      %p69 = scmp.ne.s32.totalorder %s52, %s68
      %p70 = scmp.eq.s32.totalorder %s30, 0
      %p71 = por %p69, %p70
      %s72 = ssub.s32 %s31, %s43
      %s73 = ssub.s32 %s32, %s39
      %s74 = sor.u32 %s72, %s73
      %p75 = scmp.eq.s32.totalorder %s74, 0
      %s77 = sadd.s32 %s76, 1
      %s78 = scalar_select %p75, %s76, %s77
      %p81 = pneg %p75
      %p82 = scmp.eq.s32.totalorder %s24, 3
      %p83 = por %p81, %p82
      %p84 = scmp.ne.s32.totalorder %s76, %s79
      %p85 = scmp.eq.s32.totalorder %s24, 0
      %p86 = por %p84, %p85
      %p87 = scmp.ne.s32.totalorder %s76, %s79
      %p88 = scmp.eq.s32.totalorder %s29, 3
      %p89 = por %p87, %p88
      %p90 = scmp.ne.s32.totalorder %s79, %s80
      %p91 = scmp.eq.s32.totalorder %s29, 0
      %p92 = por %p90, %p91
      %p93 = scmp.ne.s32.totalorder %s79, %s80
      %p94 = scmp.eq.s32.totalorder %s30, 3
      %p95 = por %p93, %p94
      %p97 = scmp.ne.s32.totalorder %s80, %s96
      %p98 = scmp.eq.s32.totalorder %s30, 0
      %p99 = por %p97, %p98
      %s101 = sadd.s32 %s100, 1
      %p104 = scmp.eq.s32.totalorder %s24, 3
      %p105 = scmp.ne.s32.totalorder %s100, %s102
      %p106 = scmp.eq.s32.totalorder %s24, 0
      %p107 = por %p105, %p106
      %p108 = scmp.ne.s32.totalorder %s100, %s102
      %p109 = scmp.eq.s32.totalorder %s29, 3
      %p110 = por %p108, %p109
      %p111 = scmp.ne.s32.totalorder %s102, %s103
      %p112 = scmp.eq.s32.totalorder %s29, 0
      %p113 = por %p111, %p112
      %p114 = scmp.ne.s32.totalorder %s102, %s103
      %p115 = scmp.eq.s32.totalorder %s30, 3
      %p116 = por %p114, %p115
      %p118 = scmp.ne.s32.totalorder %s103, %s117
      %p119 = scmp.eq.s32.totalorder %s30, 0
      %p120 = por %p118, %p119
      %s122 = sadd.s32 %s121, 1
      %p125 = scmp.eq.s32.totalorder %s24, 3
      %p126 = scmp.ne.s32.totalorder %s121, %s123
      %p127 = scmp.eq.s32.totalorder %s24, 0
      %p128 = por %p126, %p127
      %p129 = scmp.ne.s32.totalorder %s121, %s123
      %p130 = scmp.eq.s32.totalorder %s29, 3
      %p131 = por %p129, %p130
      %p132 = scmp.ne.s32.totalorder %s123, %s124
      %p133 = scmp.eq.s32.totalorder %s29, 0
      %p134 = por %p132, %p133
      %p135 = scmp.ne.s32.totalorder %s123, %s124
      %p136 = scmp.eq.s32.totalorder %s30, 3
      %p137 = por %p135, %p136
      %p139 = scmp.ne.s32.totalorder %s124, %s138
      %p140 = scmp.eq.s32.totalorder %s30, 0
      %p141 = por %p139, %p140
      %s143 = sadd.s32 %s142, 1
      %p146 = scmp.eq.s32.totalorder %s24, 3
      %p147 = scmp.ne.s32.totalorder %s142, %s144
      %p148 = scmp.eq.s32.totalorder %s24, 0
      %p149 = por %p147, %p148
      %p150 = scmp.ne.s32.totalorder %s142, %s144
      %p151 = scmp.eq.s32.totalorder %s29, 3
      %p152 = por %p150, %p151
      %p153 = scmp.ne.s32.totalorder %s144, %s145
      %p154 = scmp.eq.s32.totalorder %s29, 0
      %p155 = por %p153, %p154
      %p156 = scmp.ne.s32.totalorder %s144, %s145
      %p157 = scmp.eq.s32.totalorder %s30, 3
      %p158 = por %p156, %p157
      %p160 = scmp.ne.s32.totalorder %s145, %s159
      %p161 = scmp.eq.s32.totalorder %s30, 0
      %p162 = por %p160, %p161
      %s164 = sadd.s32 %s163, 1
      %p167 = scmp.eq.s32.totalorder %s24, 3
      %p168 = scmp.ne.s32.totalorder %s163, %s165
      %p169 = scmp.eq.s32.totalorder %s24, 0
      %p170 = por %p168, %p169
      %p171 = scmp.ne.s32.totalorder %s163, %s165
      %p172 = scmp.eq.s32.totalorder %s29, 3
      %p173 = por %p171, %p172
      %p174 = scmp.ne.s32.totalorder %s165, %s166
      %p175 = scmp.eq.s32.totalorder %s29, 0
      %p176 = por %p174, %p175
      %p177 = scmp.ne.s32.totalorder %s165, %s166
      %p178 = scmp.eq.s32.totalorder %s30, 3
      %p179 = por %p177, %p178
      %p181 = scmp.ne.s32.totalorder %s166, %s180
      %p182 = scmp.eq.s32.totalorder %s30, 0
      %p183 = por %p181, %p182
      %s185 = sadd.s32 %s184, 1
      %p188 = scmp.eq.s32.totalorder %s24, 3
      %p189 = scmp.ne.s32.totalorder %s184, %s186
      %p190 = scmp.eq.s32.totalorder %s24, 0
      %p191 = por %p189, %p190
      %p192 = scmp.ne.s32.totalorder %s184, %s186
      %p193 = scmp.eq.s32.totalorder %s29, 3
      %p194 = por %p192, %p193
      %p195 = scmp.ne.s32.totalorder %s186, %s187
      %p196 = scmp.eq.s32.totalorder %s29, 0
      %p197 = por %p195, %p196
      %p198 = scmp.ne.s32.totalorder %s186, %s187
      %p199 = scmp.eq.s32.totalorder %s30, 3
      %p200 = por %p198, %p199
      %p202 = scmp.ne.s32.totalorder %s187, %s201
      %p203 = scmp.eq.s32.totalorder %s30, 0
      %p204 = por %p202, %p203
      %s206 = sadd.s32 %s205, 1
      %p209 = scmp.eq.s32.totalorder %s24, 3
      %p210 = scmp.ne.s32.totalorder %s205, %s207
      %p211 = scmp.eq.s32.totalorder %s24, 0
      %p212 = por %p210, %p211
      %p213 = scmp.ne.s32.totalorder %s205, %s207
      %p214 = scmp.eq.s32.totalorder %s29, 3
      %p215 = por %p213, %p214
      %p216 = scmp.ne.s32.totalorder %s207, %s208
      %p217 = scmp.eq.s32.totalorder %s29, 0
      %p218 = por %p216, %p217
      %p219 = scmp.ne.s32.totalorder %s207, %s208
      %p220 = scmp.eq.s32.totalorder %s30, 3
      %p221 = por %p219, %p220
      %p223 = scmp.ne.s32.totalorder %s208, %s222
      %p224 = scmp.eq.s32.totalorder %s30, 0
      %p225 = por %p223, %p224
      %s226 = ssub.s32 %s31, %s43
      %s227 = ssub.s32 %s32, %s39
      %s228 = sor.u32 %s226, %s227
      %p229 = scmp.eq.s32.totalorder %s228, 0
      %s231 = sadd.s32 %s230, 1
      %s232 = scalar_select %p229, %s230, %s231
      %p235 = pneg %p229
      %p236 = scmp.eq.s32.totalorder %s24, 3
      %p237 = por %p235, %p236
      %p238 = scmp.ne.s32.totalorder %s230, %s233
      %p239 = scmp.eq.s32.totalorder %s24, 0
      %p240 = por %p238, %p239
      %p241 = scmp.ne.s32.totalorder %s230, %s233
      %p242 = scmp.eq.s32.totalorder %s29, 3
      %p243 = por %p241, %p242
      %p244 = scmp.ne.s32.totalorder %s233, %s234
      %p245 = scmp.eq.s32.totalorder %s29, 0
      %p246 = por %p244, %p245
      %p247 = scmp.ne.s32.totalorder %s233, %s234
      %p248 = scmp.eq.s32.totalorder %s30, 3
      %p249 = por %p247, %p248
      %p251 = scmp.ne.s32.totalorder %s234, %s250
      %p252 = scmp.eq.s32.totalorder %s30, 0
      %p253 = por %p251, %p252
      %p254 = scmp.le.s32.totalorder 1, %s24
      %p255 = scmp.lt.s32.totalorder %s24, 5
      %p256 = pnand %p254, %p255
      %p257 = pneg %p256
      // Predicated region
      $region9: #{tpu_custom_call.1} parent=5 // pred_check
        _
      $region10: #{tpu_custom_call.1} parent=5 // pred_check_branch
        %259 = sbr.rel (%p256) target = $region12
      $region11: #{tpu_custom_call.1} parent=5 // pred_region
        %s260 = ssub.s32 %s24, 1
        // Predicated region
        $region13: #{tpu_custom_call.1} parent=11 // pred_check
          %p261 = pneg %p113
        $region14: #{tpu_custom_call.1} parent=11 // pred_check_branch
          %263 = sbr.rel (%p261) target = $region16
        $region15: #{tpu_custom_call.1} parent=11 // pred_region
          %s265 = ssub.s32 18432, 18432
          %266 = vsyncadd [#allocation8], %s265
          %s267 = sshll.u32 [#allocation9], 4
          %s268 = int_to_ptr.vmem [resolvable:$true] %s267
          %273 = dma.hbm_to_vmem [thread:$0]  %s2, 18432, %s268, [#allocation8], 128, 128, 8
        $region16: #{tpu_custom_call.1} parent=11 // pred_fallthru
          _
        // Predicated region
        $region17: #{tpu_custom_call.1} parent=11 // pred_check
          %p274 = pneg %p134
        $region18: #{tpu_custom_call.1} parent=11 // pred_check_branch
          %276 = sbr.rel (%p274) target = $region20
        $region19: #{tpu_custom_call.1} parent=11 // pred_region
          _
        $region20: #{tpu_custom_call.1} parent=11 // pred_fallthru
          _
        // Predicated region
        $region21: #{tpu_custom_call.1} parent=11 // pred_check
          %p277 = pneg %p155
        $region22: #{tpu_custom_call.1} parent=11 // pred_check_branch
          %279 = sbr.rel (%p277) target = $region24
        $region23: #{tpu_custom_call.1} parent=11 // pred_region
          _
        $region24: #{tpu_custom_call.1} parent=11 // pred_fallthru
          _
        // Predicated region
        $region25: #{tpu_custom_call.1} parent=11 // pred_check
          %p280 = pneg %p176
        $region26: #{tpu_custom_call.1} parent=11 // pred_check_branch
          %282 = sbr.rel (%p280) target = $region28
        $region27: #{tpu_custom_call.1} parent=11 // pred_region
          %s284 = ssub.s32 18432, 18432
          %285 = vsyncadd [#allocation11], %s284
          %s286 = sshll.u32 [#allocation10], 4
          %s287 = int_to_ptr.vmem [resolvable:$true] %s286
          %292 = dma.hbm_to_vmem [thread:$0]  %s5, 18432, %s287, [#allocation11], 128, 128, 8
        $region28: #{tpu_custom_call.1} parent=11 // pred_fallthru
          _
        // Predicated region
        $region29: #{tpu_custom_call.1} parent=11 // pred_check
          %p293 = pneg %p197
        $region30: #{tpu_custom_call.1} parent=11 // pred_check_branch
          %295 = sbr.rel (%p293) target = $region32
        $region31: #{tpu_custom_call.1} parent=11 // pred_region
          _
        $region32: #{tpu_custom_call.1} parent=11 // pred_fallthru
          _
        // Predicated region
        $region33: #{tpu_custom_call.1} parent=11 // pred_check
          %p296 = pneg %p218
        $region34: #{tpu_custom_call.1} parent=11 // pred_check_branch
          %298 = sbr.rel (%p296) target = $region36
        $region35: #{tpu_custom_call.1} parent=11 // pred_region
          _
        $region36: #{tpu_custom_call.1} parent=11 // pred_fallthru
          _
      $region12: #{tpu_custom_call.1} parent=5 // pred_fallthru
        _
      %p299 = scmp.lt.s32.totalorder %s24, 4
      // Predicated region
      $region37: #{tpu_custom_call.1} parent=5 // pred_check
        %p300 = pneg %p299
      $region38: #{tpu_custom_call.1} parent=5 // pred_check_branch
        %302 = sbr.rel (%p300) target = $region40
      $region39: #{tpu_custom_call.1} parent=5 // pred_region
        // Predicated region
        $region41: #{tpu_custom_call.1} parent=39 // pred_check
          %p303 = pneg %p58
        $region42: #{tpu_custom_call.1} parent=39 // pred_check_branch
          %305 = sbr.rel (%p303) target = $region44
        $region43: #{tpu_custom_call.1} parent=39 // pred_region
          #allocation14 [shape = 'u32[6]{0}', space=smem, size = 0x18, scoped, tag = 'DMA stride descriptor']
          %s306 = sand.u32 %s48, 1
          %s307 = scalar_lea.sflag [#allocation5], %s306
          %s308 = sand.u32 %s48, 1
          %s309 = smul.addr %s308, 128
          %s310 = scalar_lea.vmem [#allocation4], %s309
          %s311 = smul.u32 4, %s32
          %s313 = ssub.s32 2048, 2048
          %314 = vsyncadd %s307, %s313
          %s315 = smul.addr %s31, 32
          %s316 = sadd.s32 %s311, %s315
          %s317 = smul.addr %s316, 128
          %s318 = scalar_lea.hbm %s0, %s317
          %s320 = sshll.u32 1, 14
          %s321 = sxor.u32 4294967295, %s320
          %s323 = sld [smem:[#allocation0]]
          %s324 = sadd.s32 2, %s323
          %s326 = sshll.u32 7, 26
          %s327 = sxor.u32 4294967295, %s326
          %s328 = sand.u32 0, %s327
          %s329 = sshll.u32 %s324, 26
          %s330 = sor.u32 %s328, %s329
          %s331 = sshll.u32 %s310, 4
          %s332 = int_to_ptr.vmem [resolvable:$true] %s331
          %338 = sst [smem:[#allocation14]] 1024
          %s339 = scalar_lea.smem [#allocation14], 1
          %340 = sst [smem:[%s339]] 512
          %s341 = scalar_lea.smem [#allocation14], 2
          %342 = sst [smem:[%s341]] 4
          %s343 = scalar_lea.smem [#allocation14], 3
          %344 = sst [smem:[%s343]] 128
          %s345 = scalar_lea.smem [#allocation14], 4
          %346 = sst [smem:[%s345]] 128
          %s347 = scalar_lea.smem [#allocation14], 5
          %348 = sst [smem:[%s347]] 8
          %350 = dma.general %s318, 2048, %s332, %s307, [#allocation13], [#allocation14], %s330, 0
        $region44: #{tpu_custom_call.1} parent=39 // pred_fallthru
          _
        // Predicated region
        $region45: #{tpu_custom_call.1} parent=39 // pred_check
          %p351 = pneg %p86
        $region46: #{tpu_custom_call.1} parent=39 // pred_check_branch
          %353 = sbr.rel (%p351) target = $region48
        $region47: #{tpu_custom_call.1} parent=39 // pred_region
          %s354 = sand.u32 %s24, 1
          %s355 = scalar_lea.sflag [#allocation8], %s354
          %s356 = sand.u32 %s76, 1
          %s357 = smul.addr %s356, 128
          %s358 = scalar_lea.vmem [#allocation7], %s357
          %s360 = ssub.s32 2048, 2048
          %361 = vsyncadd %s355, %s360
          %s362 = smul.addr %s32, 16
          %s363 = smul.addr %s31, 32
          %s364 = sadd.s32 %s362, %s363
          %s365 = smul.addr %s364, 128
          %s366 = scalar_lea.hbm %s1, %s365
          %s367 = sshll.u32 %s358, 4
          %s368 = int_to_ptr.vmem [resolvable:$true] %s367
          %373 = dma.hbm_to_vmem [thread:$0]  %s366, 2048, %s368, %s355, 128, 128, 8
        $region48: #{tpu_custom_call.1} parent=39 // pred_fallthru
          _
      $region40: #{tpu_custom_call.1} parent=5 // pred_fallthru
        _
      %p374 = scmp.le.s32.totalorder 1, %s24
      %p375 = scmp.lt.s32.totalorder %s24, 5
      %p376 = pnand %p374, %p375
      %p377 = pneg %p376
      // Predicated region
      $region49: #{tpu_custom_call.1} parent=5 // pred_check
        _
      $region50: #{tpu_custom_call.1} parent=5 // pred_check_branch
        %379 = sbr.rel (%p376) target = $region52
      $region51: #{tpu_custom_call.1} parent=5 // pred_region
        %s380 = ssub.s32 %s24, 1
        %s381 = sand.u32 %s51, 1
        %s382 = scalar_lea.sflag [#allocation5], %s381
        %s383 = sand.u32 %s51, 1
        %s384 = smul.addr %s383, 128
        %s385 = scalar_lea.vmem [#allocation4], %s384
        // Predicated region
        $region53: #{tpu_custom_call.1} parent=51 // pred_check
          %p386 = pneg %p64
        $region54: #{tpu_custom_call.1} parent=51 // pred_check_branch
          %388 = sbr.rel (%p386) target = $region56
        $region55: #{tpu_custom_call.1} parent=51 // pred_region
          %389 = dma.done %s382, 2048
        $region56: #{tpu_custom_call.1} parent=51 // pred_fallthru
          _
        %s390 = sand.u32 %s29, 1
        %s391 = scalar_lea.sflag [#allocation8], %s390
        %s392 = sand.u32 %s79, 1
        %s393 = smul.addr %s392, 128
        %s394 = scalar_lea.vmem [#allocation7], %s393
        // Predicated region
        $region57: #{tpu_custom_call.1} parent=51 // pred_check
          %p395 = pneg %p92
        $region58: #{tpu_custom_call.1} parent=51 // pred_check_branch
          %397 = sbr.rel (%p395) target = $region60
        $region59: #{tpu_custom_call.1} parent=51 // pred_region
          %398 = dma.done %s391, 2048
        $region60: #{tpu_custom_call.1} parent=51 // pred_fallthru
          _
        // Predicated region
        $region61: #{tpu_custom_call.1} parent=51 // pred_check
          %p399 = pneg %p113
        $region62: #{tpu_custom_call.1} parent=51 // pred_check_branch
          %401 = sbr.rel (%p399) target = $region64
        $region63: #{tpu_custom_call.1} parent=51 // pred_region
          %402 = dma.done [#allocation8], 18432
        $region64: #{tpu_custom_call.1} parent=51 // pred_fallthru
          _
        // Predicated region
        $region65: #{tpu_custom_call.1} parent=51 // pred_check
          %p403 = pneg %p176
        $region66: #{tpu_custom_call.1} parent=51 // pred_check_branch
          %405 = sbr.rel (%p403) target = $region68
        $region67: #{tpu_custom_call.1} parent=51 // pred_region
          %406 = dma.done [#allocation11], 18432
        $region68: #{tpu_custom_call.1} parent=51 // pred_fallthru
          _
        %s407 = sand.u32 %s51, 1
        %s408 = scalar_lea.sflag [#allocation5], %s407
        %s409 = sand.u32 %s51, 1
        %s410 = smul.addr %s409, 128
        %s411 = scalar_lea.vmem [#allocation4], %s410
        %p412 = pneg %p64
        %p413 = pneg %p61
        %s414 = sand.u32 %s29, 1
        %s415 = scalar_lea.sflag [#allocation8], %s414
        %s416 = sand.u32 %s79, 1
        %s417 = smul.addr %s416, 128
        %s418 = scalar_lea.vmem [#allocation7], %s417
        %p419 = pneg %p92
        %p420 = pneg %p89
        %p421 = pneg %p113
        %p422 = pneg %p110
        %p423 = pneg %p134
        %p424 = pneg %p131
        %p425 = pneg %p155
        %p426 = pneg %p152
        %p427 = pneg %p176
        %p428 = pneg %p173
        %p429 = pneg %p197
        %p430 = pneg %p194
        %p431 = pneg %p218
        %p432 = pneg %p215
        %p433 = pneg %p246
        %p434 = pneg %p243
        %s435 = sand.u32 %s233, 1
        %s436 = scalar_lea.sflag [#allocation6], %s435
        %s437 = sand.u32 %s233, 1
        %s438 = smul.addr %s437, 32
        %s439 = scalar_lea.vmem [#allocation12], %s438
        %s440 = smul.u32 4, %s34
        %s441 = smul.u32 4, %s34
        %v442 = vld [vmem:[%s385] sm:$0xff]
        %v443 = vld [vmem:[%s385 + $0x8] sm:$0xff]
        %v444 = vld [vmem:[%s385 + $0x10] sm:$0xff]
        %v445 = vld [vmem:[%s385 + $0x18] sm:$0xff]
        %s446 = scalar_lea.vmem %s385, 32 [#allocation4]
        %v447 = vld [vmem:[%s446] sm:$0xff]
        %v448 = vld [vmem:[%s446 + $0x8] sm:$0xff]
        %v449 = vld [vmem:[%s446 + $0x10] sm:$0xff]
        %v450 = vld [vmem:[%s446 + $0x18] sm:$0xff]
        %v451 = vmax.f32 %v442, %v447
        %v452 = vmax.f32 %v443, %v448
        %v453 = vmax.f32 %v444, %v449
        %v454 = vmax.f32 %v445, %v450
        %s455 = scalar_lea.vmem %s385, 64 [#allocation4]
        %v456 = vld [vmem:[%s455] sm:$0xff]
        %v457 = vld [vmem:[%s455 + $0x8] sm:$0xff]
        %v458 = vld [vmem:[%s455 + $0x10] sm:$0xff]
        %v459 = vld [vmem:[%s455 + $0x18] sm:$0xff]
        %s460 = scalar_lea.vmem %s385, 96 [#allocation4]
        %v461 = vld [vmem:[%s460] sm:$0xff]
        %v462 = vld [vmem:[%s460 + $0x8] sm:$0xff]
        %v463 = vld [vmem:[%s460 + $0x10] sm:$0xff]
        %v464 = vld [vmem:[%s460 + $0x18] sm:$0xff]
        %v465 = vmax.f32 %v456, %v461
        %v466 = vmax.f32 %v457, %v462
        %v467 = vmax.f32 %v458, %v463
        %v468 = vmax.f32 %v459, %v464
        %v469 = vmax.f32 %v451, %v465
        %v470 = vmax.f32 %v452, %v466
        %v471 = vmax.f32 %v453, %v467
        %v472 = vmax.f32 %v454, %v468
        %v473 = vld [vmem:[%s394] sm:$0xff]
        %v474 = vld [vmem:[%s394 + $0x8] sm:$0xff]
        %v475 = vld [vmem:[%s394 + $0x10] sm:$0xff]
        %v476 = vld [vmem:[%s394 + $0x18] sm:$0xff]
        %s477 = scalar_lea.vmem %s394, 32 [#allocation7]
        %v478 = vld [vmem:[%s477] sm:$0xff]
        %v479 = vld [vmem:[%s477 + $0x8] sm:$0xff]
        %v480 = vld [vmem:[%s477 + $0x10] sm:$0xff]
        %v481 = vld [vmem:[%s477 + $0x18] sm:$0xff]
        %v482 = vmax.f32 %v473, %v478
        %v483 = vmax.f32 %v474, %v479
        %v484 = vmax.f32 %v475, %v480
        %v485 = vmax.f32 %v476, %v481
        %s486 = scalar_lea.vmem %s394, 64 [#allocation7]
        %v487 = vld [vmem:[%s486] sm:$0xff]
        %v488 = vld [vmem:[%s486 + $0x8] sm:$0xff]
        %v489 = vld [vmem:[%s486 + $0x10] sm:$0xff]
        %v490 = vld [vmem:[%s486 + $0x18] sm:$0xff]
        %s491 = scalar_lea.vmem %s394, 96 [#allocation7]
        %v492 = vld [vmem:[%s491] sm:$0xff]
        %v493 = vld [vmem:[%s491 + $0x8] sm:$0xff]
        %v494 = vld [vmem:[%s491 + $0x10] sm:$0xff]
        %v495 = vld [vmem:[%s491 + $0x18] sm:$0xff]
        %v496 = vmax.f32 %v487, %v492
        %v497 = vmax.f32 %v488, %v493
        %v498 = vmax.f32 %v489, %v494
        %v499 = vmax.f32 %v490, %v495
        %v500 = vmax.f32 %v482, %v496
        %v501 = vmax.f32 %v483, %v497
        %v502 = vmax.f32 %v484, %v498
        %v503 = vmax.f32 %v485, %v499
        %504 = vst [vmem:[#allocation2] sm:$0x1] 0.0
        %505 = vst [vmem:[#allocation2 + $0x10] sm:$0x1] 0.0
        %506 = vst [vmem:[#allocation2 + $0x20] sm:$0x1] 0.0
        %507 = vst [vmem:[#allocation2 + $0x30] sm:$0x1] 0.0
        %508 = vst [vmem:[#allocation2 + $0x40] sm:$0x1] 0.0
        %509 = vst [vmem:[#allocation2 + $0x50] sm:$0x1] 0.0
        %510 = vst [vmem:[#allocation2 + $0x60] sm:$0x1] 0.0
        %511 = vst [vmem:[#allocation2 + $0x70] sm:$0x1] 0.0
        %512 = vst [vmem:[#allocation2 + $0x9] sm:$0x1] 0.0
        %513 = vst [vmem:[#allocation2 + $0x19] sm:$0x1] 0.0
        %514 = vst [vmem:[#allocation2 + $0x29] sm:$0x1] 0.0
        %515 = vst [vmem:[#allocation2 + $0x39] sm:$0x1] 0.0
        %516 = vst [vmem:[#allocation2 + $0x49] sm:$0x1] 0.0
        %517 = vst [vmem:[#allocation2 + $0x59] sm:$0x1] 0.0
        %518 = vst [vmem:[#allocation2 + $0x69] sm:$0x1] 0.0
        %519 = vst [vmem:[#allocation2 + $0x79] sm:$0x1] 0.0
        %520 = vst [vmem:[#allocation2 + $0x1] sm:$0xff] %v500
        %521 = vst [vmem:[#allocation2 + $0x11] sm:$0xff] %v501
        %s522 = scalar_lea.vmem [#allocation2], 32
        %523 = vst [vmem:[%s522 + $0x1] sm:$0xff] %v469
        %524 = vst [vmem:[%s522 + $0x11] sm:$0xff] %v470
        %525 = vst [vmem:[%s522 + $0x21] sm:$0xff] %v471
        %526 = vst [vmem:[%s522 + $0x31] sm:$0xff] %v472
        %s527 = scalar_lea.vmem [#allocation2], 96
        %528 = vst [vmem:[%s527 + $0x1] sm:$0xff] %v502
        %529 = vst [vmem:[%s527 + $0x11] sm:$0xff] %v503
        %v530 = vld [vmem:[#allocation2] sm:$0xff]
        %v531 = vld [vmem:[#allocation2 + $0x10] sm:$0xff]
        %v532 = vld [vmem:[#allocation2 + $0x20] sm:$0xff]
        %v533 = vld [vmem:[#allocation2 + $0x30] sm:$0xff]
        %v534 = vld [vmem:[#allocation2 + $0x40] sm:$0xff]
        %v535 = vld [vmem:[#allocation2 + $0x50] sm:$0xff]
        %v536 = vld [vmem:[#allocation2 + $0x1] sm:$0xff]
        %v537 = vld [vmem:[#allocation2 + $0x11] sm:$0xff]
        %v538 = vld [vmem:[#allocation2 + $0x21] sm:$0xff]
        %v539 = vld [vmem:[#allocation2 + $0x31] sm:$0xff]
        %v540 = vld [vmem:[#allocation2 + $0x41] sm:$0xff]
        %v541 = vld [vmem:[#allocation2 + $0x51] sm:$0xff]
        %v542 = vld [vmem:[#allocation2 + $0x2] sm:$0xff]
        %v543 = vld [vmem:[#allocation2 + $0x12] sm:$0xff]
        %v544 = vld [vmem:[#allocation2 + $0x22] sm:$0xff]
        %v545 = vld [vmem:[#allocation2 + $0x32] sm:$0xff]
        %v546 = vld [vmem:[#allocation2 + $0x42] sm:$0xff]
        %v547 = vld [vmem:[#allocation2 + $0x52] sm:$0xff]
        %v548 = vld [vmem:[#allocation9] sm:$0xff]
        %v549 = vld [vmem:[#allocation9 + $0x8] sm:$0xff]
        %v550 = vld [vmem:[#allocation9 + $0x10] sm:$0xff]
        %v551 = vld [vmem:[#allocation9 + $0x18] sm:$0xff]
        %v552 = vld [vmem:[#allocation9 + $0x20] sm:$0xff]
        %v553 = vld [vmem:[#allocation9 + $0x28] sm:$0xff]
        %v554 = vld [vmem:[#allocation9 + $0x30] sm:$0xff]
        %v555 = vld [vmem:[#allocation9 + $0x38] sm:$0xff]
        %v556 = vld [vmem:[#allocation9 + $0x40] sm:$0xff]
        %v557 = vld [vmem:[#allocation9 + $0x48] sm:$0xff]
        %v558 = vld [vmem:[#allocation9 + $0x50] sm:$0xff]
        %v559 = vld [vmem:[#allocation9 + $0x58] sm:$0xff]
        %v560 = vld [vmem:[#allocation9 + $0x60] sm:$0xff]
        %v561 = vld [vmem:[#allocation9 + $0x68] sm:$0xff]
        %v562 = vld [vmem:[#allocation9 + $0x70] sm:$0xff]
        %v563 = vld [vmem:[#allocation9 + $0x78] sm:$0xff]
        %v564 = vld [vmem:[#allocation9 + $0x80] sm:$0xff]
        %v565 = vld [vmem:[#allocation9 + $0x88] sm:$0xff]
        %v566 = vld [vmem:[#allocation9 + $0x90] sm:$0xff]
        %v567 = vld [vmem:[#allocation9 + $0x98] sm:$0xff]
        %v568 = vld [vmem:[#allocation9 + $0xa0] sm:$0xff]
        %v569 = vld [vmem:[#allocation9 + $0xa8] sm:$0xff]
        %v570 = vld [vmem:[#allocation9 + $0xb0] sm:$0xff]
        %v571 = vld [vmem:[#allocation9 + $0xb8] sm:$0xff]
        %v572 = vld [vmem:[#allocation9 + $0xc0] sm:$0xff]
        %v573 = vld [vmem:[#allocation9 + $0xc8] sm:$0xff]
        %v574 = vld [vmem:[#allocation9 + $0xd0] sm:$0xff]
        %v575 = vld [vmem:[#allocation9 + $0xd8] sm:$0xff]
        %v576 = vld [vmem:[#allocation9 + $0xe0] sm:$0xff]
        %v577 = vld [vmem:[#allocation9 + $0xe8] sm:$0xff]
        %v578 = vld [vmem:[#allocation9 + $0xf0] sm:$0xff]
        %v579 = vld [vmem:[#allocation9 + $0xf8] sm:$0xff]
        %v580 = vld [vmem:[#allocation9 + $0x100] sm:$0xff]
        %v581 = vld [vmem:[#allocation9 + $0x108] sm:$0xff]
        %v582 = vld [vmem:[#allocation9 + $0x110] sm:$0xff]
        %v583 = vld [vmem:[#allocation9 + $0x118] sm:$0xff]
        %v584 = vld [vmem:[#allocation9 + $0x120] sm:$0xff]
        %v585 = vld [vmem:[#allocation9 + $0x128] sm:$0xff]
        %v586 = vld [vmem:[#allocation9 + $0x130] sm:$0xff]
        %v587 = vld [vmem:[#allocation9 + $0x138] sm:$0xff]
        %v588 = vld [vmem:[#allocation9 + $0x140] sm:$0xff]
        %v589 = vld [vmem:[#allocation9 + $0x148] sm:$0xff]
        %v590 = vld [vmem:[#allocation9 + $0x150] sm:$0xff]
        %v591 = vld [vmem:[#allocation9 + $0x158] sm:$0xff]
        %v592 = vld [vmem:[#allocation9 + $0x160] sm:$0xff]
        %v593 = vld [vmem:[#allocation9 + $0x168] sm:$0xff]
        %v594 = vld [vmem:[#allocation9 + $0x170] sm:$0xff]
        %v595 = vld [vmem:[#allocation9 + $0x178] sm:$0xff]
        %s596 = scalar_lea.vmem [#allocation2], 16
        %v597 = vld [vmem:[%s596] sm:$0xff]
        %v598 = vld [vmem:[%s596 + $0x10] sm:$0xff]
        %v599 = vld [vmem:[%s596 + $0x20] sm:$0xff]
        %v600 = vld [vmem:[%s596 + $0x30] sm:$0xff]
        %v601 = vld [vmem:[%s596 + $0x40] sm:$0xff]
        %v602 = vld [vmem:[%s596 + $0x50] sm:$0xff]
        %v603 = vld [vmem:[%s596 + $0x1] sm:$0xff]
        %v604 = vld [vmem:[%s596 + $0x11] sm:$0xff]
        %v605 = vld [vmem:[%s596 + $0x21] sm:$0xff]
        %v606 = vld [vmem:[%s596 + $0x31] sm:$0xff]
        %v607 = vld [vmem:[%s596 + $0x41] sm:$0xff]
        %v608 = vld [vmem:[%s596 + $0x51] sm:$0xff]
        %v609 = vld [vmem:[%s596 + $0x2] sm:$0xff]
        %v610 = vld [vmem:[%s596 + $0x12] sm:$0xff]
        %v611 = vld [vmem:[%s596 + $0x22] sm:$0xff]
        %v612 = vld [vmem:[%s596 + $0x32] sm:$0xff]
        %v613 = vld [vmem:[%s596 + $0x42] sm:$0xff]
        %v614 = vld [vmem:[%s596 + $0x52] sm:$0xff]
        %v615 = vld [vmem:[#allocation9 + $0x180] sm:$0xff]
        %v616 = vld [vmem:[#allocation9 + $0x188] sm:$0xff]
        %v617 = vld [vmem:[#allocation9 + $0x190] sm:$0xff]
        %v618 = vld [vmem:[#allocation9 + $0x198] sm:$0xff]
        %v619 = vld [vmem:[#allocation9 + $0x1a0] sm:$0xff]
        %v620 = vld [vmem:[#allocation9 + $0x1a8] sm:$0xff]
        %v621 = vld [vmem:[#allocation9 + $0x1b0] sm:$0xff]
        %v622 = vld [vmem:[#allocation9 + $0x1b8] sm:$0xff]
        %v623 = vld [vmem:[#allocation9 + $0x1c0] sm:$0xff]
        %v624 = vld [vmem:[#allocation9 + $0x1c8] sm:$0xff]
        %v625 = vld [vmem:[#allocation9 + $0x1d0] sm:$0xff]
        %v626 = vld [vmem:[#allocation9 + $0x1d8] sm:$0xff]
        %v627 = vld [vmem:[#allocation9 + $0x1e0] sm:$0xff]
        %v628 = vld [vmem:[#allocation9 + $0x1e8] sm:$0xff]
        %v629 = vld [vmem:[#allocation9 + $0x1f0] sm:$0xff]
        %v630 = vld [vmem:[#allocation9 + $0x1f8] sm:$0xff]
        %v631 = vld [vmem:[#allocation9 + $0x200] sm:$0xff]
        %v632 = vld [vmem:[#allocation9 + $0x208] sm:$0xff]
        %v633 = vld [vmem:[#allocation9 + $0x210] sm:$0xff]
        %v634 = vld [vmem:[#allocation9 + $0x218] sm:$0xff]
        %v635 = vld [vmem:[#allocation9 + $0x220] sm:$0xff]
        %v636 = vld [vmem:[#allocation9 + $0x228] sm:$0xff]
        %v637 = vld [vmem:[#allocation9 + $0x230] sm:$0xff]
        %v638 = vld [vmem:[#allocation9 + $0x238] sm:$0xff]
        %v639 = vld [vmem:[#allocation9 + $0x240] sm:$0xff]
        %v640 = vld [vmem:[#allocation9 + $0x248] sm:$0xff]
        %v641 = vld [vmem:[#allocation9 + $0x250] sm:$0xff]
        %v642 = vld [vmem:[#allocation9 + $0x258] sm:$0xff]
        %v643 = vld [vmem:[#allocation9 + $0x260] sm:$0xff]
        %v644 = vld [vmem:[#allocation9 + $0x268] sm:$0xff]
        %v645 = vld [vmem:[#allocation9 + $0x270] sm:$0xff]
        %v646 = vld [vmem:[#allocation9 + $0x278] sm:$0xff]
        %v647 = vld [vmem:[#allocation9 + $0x280] sm:$0xff]
        %v648 = vld [vmem:[#allocation9 + $0x288] sm:$0xff]
        %v649 = vld [vmem:[#allocation9 + $0x290] sm:$0xff]
        %v650 = vld [vmem:[#allocation9 + $0x298] sm:$0xff]
        %v651 = vld [vmem:[#allocation9 + $0x2a0] sm:$0xff]
        %v652 = vld [vmem:[#allocation9 + $0x2a8] sm:$0xff]
        %v653 = vld [vmem:[#allocation9 + $0x2b0] sm:$0xff]
        %v654 = vld [vmem:[#allocation9 + $0x2b8] sm:$0xff]
        %v655 = vld [vmem:[#allocation9 + $0x2c0] sm:$0xff]
        %v656 = vld [vmem:[#allocation9 + $0x2c8] sm:$0xff]
        %v657 = vld [vmem:[#allocation9 + $0x2d0] sm:$0xff]
        %v658 = vld [vmem:[#allocation9 + $0x2d8] sm:$0xff]
        %v659 = vld [vmem:[#allocation9 + $0x2e0] sm:$0xff]
        %v660 = vld [vmem:[#allocation9 + $0x2e8] sm:$0xff]
        %v661 = vld [vmem:[#allocation9 + $0x2f0] sm:$0xff]
        %v662 = vld [vmem:[#allocation9 + $0x2f8] sm:$0xff]
        %663 = vmatprep.subr.mxu0 0.0
        %664 = vmatpush1.msra.mxu0 %v615
        %665 = vmatprep.subr.mxu0 0.0
        %666 = vmatpush1.msra.mxu0 %v616
        %667 = vmatprep.subr.mxu0 0.0
        %668 = vmatpush1.msra.mxu0 %v617
        %669 = vmatprep.subr.mxu0 0.0
        %670 = vmatpush1.msra.mxu0 %v618
        %671 = vmatprep.subr.mxu0 0.0
        %672 = vmatpush1.msra.mxu0 %v619
        %673 = vmatprep.subr.mxu0 0.0
        %674 = vmatpush1.msra.mxu0 %v620
        %675 = vmatprep.subr.mxu0 0.0
        %676 = vmatpush1.msra.mxu0 %v621
        %677 = vmatprep.subr.mxu0 0.0
        %678 = vmatpush1.msra.mxu0 %v622
        %679 = vmatprep.subr.mxu0 0.0
        %680 = vmatpush1.msra.mxu0 %v623
        %681 = vmatprep.subr.mxu0 0.0
        %682 = vmatpush1.msra.mxu0 %v624
        %683 = vmatprep.subr.mxu0 0.0
        %684 = vmatpush1.msra.mxu0 %v625
        %685 = vmatprep.subr.mxu0 0.0
        %686 = vmatpush1.msra.mxu0 %v626
        %687 = vmatprep.subr.mxu0 0.0
        %688 = vmatpush1.msra.mxu0 %v627
        %689 = vmatprep.subr.mxu0 0.0
        %690 = vmatpush1.msra.mxu0 %v628
        %691 = vmatprep.subr.mxu0 0.0
        %692 = vmatpush1.msra.mxu0 %v629
        %693 = vmatprep.subr.mxu0 0.0
        %694 = vmatpush1.msra.mxu0 %v630
        %695 = vmatprep.subr.mxu0 0.0
        %696 = vmatpush1.msra.mxu0 %v631
        %697 = vmatprep.subr.mxu0 0.0
        %698 = vmatpush1.msra.mxu0 %v632
        %699 = vmatprep.subr.mxu0 0.0
        %700 = vmatpush1.msra.mxu0 %v633
        %701 = vmatprep.subr.mxu0 0.0
        %702 = vmatpush1.msra.mxu0 %v634
        %703 = vmatprep.subr.mxu0 0.0
        %704 = vmatpush1.msra.mxu0 %v635
        %705 = vmatprep.subr.mxu0 0.0
        %706 = vmatpush1.msra.mxu0 %v636
        %707 = vmatprep.subr.mxu0 0.0
        %708 = vmatpush1.msra.mxu0 %v637
        %709 = vmatprep.subr.mxu0 0.0
        %710 = vmatpush1.msra.mxu0 %v638
        %711 = vmatprep.subr.mxu0 0.0
        %712 = vmatpush1.msra.mxu0 %v639
        %713 = vmatprep.subr.mxu0 0.0
        %714 = vmatpush1.msra.mxu0 %v640
        %715 = vmatprep.subr.mxu0 0.0
        %716 = vmatpush1.msra.mxu0 %v641
        %717 = vmatprep.subr.mxu0 0.0
        %718 = vmatpush1.msra.mxu0 %v642
        %719 = vmatprep.subr.mxu0 0.0
        %720 = vmatpush1.msra.mxu0 %v643
        %721 = vmatprep.subr.mxu0 0.0
        %722 = vmatpush1.msra.mxu0 %v644
        %723 = vmatprep.subr.mxu0 0.0
        %724 = vmatpush1.msra.mxu0 %v645
        %725 = vmatprep.subr.mxu0 0.0
        %726 = vmatpush1.msra.mxu0 %v646
        %727 = vmatprep.mubr.f32.mxu0 %v603
        %728 = vmatmul.mubr.f32.gmra.mrb[0].mxu0 %v597
        %v729 = vpop.f32.mrb[0].mxu0
        %v730 = vadd.f32 0.0, %v729
        %v731 = vpop.f32.mrb[0].mxu0
        %732 = vmatprep.mubr.f32.mxu0 %v604
        %733 = vmatmul.mubr.f32.gmra.mrb[0].mxu0 %v598
        %v734 = vpop.f32.mrb[0].mxu0
        %v735 = vadd.f32 0.0, %v734
        %v736 = vpop.f32.mrb[0].mxu0
        %737 = vmatprep.mubr.f32.mxu0 %v605
        %738 = vmatmul.mubr.f32.gmra.mrb[0].mxu0 %v599
        %v739 = vpop.f32.mrb[0].mxu0
        %v740 = vadd.f32 0.0, %v739
        %v741 = vpop.f32.mrb[0].mxu0
        %742 = vmatprep.mubr.f32.mxu0 %v606
        %743 = vmatmul.mubr.f32.gmra.mrb[0].mxu0 %v600
        %v744 = vpop.f32.mrb[0].mxu0
        %v745 = vadd.f32 0.0, %v744
        %v746 = vpop.f32.mrb[0].mxu0
        %747 = vmatprep.mubr.f32.mxu0 %v607
        %748 = vmatmul.mubr.f32.gmra.mrb[0].mxu0 %v601
        %v749 = vpop.f32.mrb[0].mxu0
        %v750 = vadd.f32 0.0, %v749
        %v751 = vpop.f32.mrb[0].mxu0
        %752 = vmatprep.mubr.f32.mxu0 %v608
        %753 = vmatmul.mubr.f32.gmra.mrb[0].mxu0 %v602
        %v754 = vpop.f32.mrb[0].mxu0
        %v755 = vadd.f32 0.0, %v754
        %v756 = vpop.f32.mrb[0].mxu0
        %757 = vdwg.mxu0
        %758 = vmatprep.subr.mxu0 0.0
        %759 = vmatpush1.msra.mxu0 %v647
        %760 = vmatprep.subr.mxu0 0.0
        %761 = vmatpush1.msra.mxu0 %v648
        %762 = vmatprep.subr.mxu0 0.0
        %763 = vmatpush1.msra.mxu0 %v649
        %764 = vmatprep.subr.mxu0 0.0
        %765 = vmatpush1.msra.mxu0 %v650
        %766 = vmatprep.subr.mxu0 0.0
        %767 = vmatpush1.msra.mxu0 %v651
        %768 = vmatprep.subr.mxu0 0.0
        %769 = vmatpush1.msra.mxu0 %v652
        %770 = vmatprep.subr.mxu0 0.0
        %771 = vmatpush1.msra.mxu0 %v653
        %772 = vmatprep.subr.mxu0 0.0
        %773 = vmatpush1.msra.mxu0 %v654
        %774 = vmatprep.subr.mxu0 0.0
        %775 = vmatpush1.msra.mxu0 %v655
        %776 = vmatprep.subr.mxu0 0.0
        %777 = vmatpush1.msra.mxu0 %v656
        %778 = vmatprep.subr.mxu0 0.0
        %779 = vmatpush1.msra.mxu0 %v657
        %780 = vmatprep.subr.mxu0 0.0
        %781 = vmatpush1.msra.mxu0 %v658
        %782 = vmatprep.subr.mxu0 0.0
        %783 = vmatpush1.msra.mxu0 %v659
        %784 = vmatprep.subr.mxu0 0.0
        %785 = vmatpush1.msra.mxu0 %v660
        %786 = vmatprep.subr.mxu0 0.0
        %787 = vmatpush1.msra.mxu0 %v661
        %788 = vmatprep.subr.mxu0 0.0
        %789 = vmatpush1.msra.mxu0 %v662
        %790 = vmatprep.subr.mxu0 0.0
        %791 = vmatpush1.msra.mxu0 0.0
        %792 = vmatprep.subr.mxu0 0.0
        %793 = vmatpush1.msra.mxu0 0.0
        %794 = vmatprep.subr.mxu0 0.0
        %795 = vmatpush1.msra.mxu0 0.0
        %796 = vmatprep.subr.mxu0 0.0
        %797 = vmatpush1.msra.mxu0 0.0
        %798 = vmatprep.subr.mxu0 0.0
        %799 = vmatpush1.msra.mxu0 0.0
        %800 = vmatprep.subr.mxu0 0.0
        %801 = vmatpush1.msra.mxu0 0.0
        %802 = vmatprep.subr.mxu0 0.0
        %803 = vmatpush1.msra.mxu0 0.0
        %804 = vmatprep.subr.mxu0 0.0
        %805 = vmatpush1.msra.mxu0 0.0
        %806 = vmatprep.subr.mxu0 0.0
        %807 = vmatpush1.msra.mxu0 0.0
        %808 = vmatprep.subr.mxu0 0.0
        %809 = vmatpush1.msra.mxu0 0.0
        %810 = vmatprep.subr.mxu0 0.0
        %811 = vmatpush1.msra.mxu0 0.0
        %812 = vmatprep.subr.mxu0 0.0
        %813 = vmatpush1.msra.mxu0 0.0
        %814 = vmatprep.subr.mxu0 0.0
        %815 = vmatpush1.msra.mxu0 0.0
        %816 = vmatprep.subr.mxu0 0.0
        %817 = vmatpush1.msra.mxu0 0.0
        %818 = vmatprep.subr.mxu0 0.0
        %819 = vmatpush1.msra.mxu0 0.0
        %820 = vmatprep.subr.mxu0 0.0
        %821 = vmatpush1.msra.mxu0 0.0
        %822 = vmatprep.mubr.f32.mxu0 0.0
        %823 = vmatmul.mubr.f32.gmra.mrb[0].mxu0 %v609
        %v824 = vpop.f32.mrb[0].mxu0
        %v825 = vadd.f32 %v730, %v824
        %v826 = vpop.f32.mrb[0].mxu0
        %827 = vmatprep.mubr.f32.mxu0 0.0
        %828 = vmatmul.mubr.f32.gmra.mrb[0].mxu0 %v610
        %v829 = vpop.f32.mrb[0].mxu0
        %v830 = vadd.f32 %v735, %v829
        %v831 = vpop.f32.mrb[0].mxu0
        %832 = vmatprep.mubr.f32.mxu0 0.0
        %833 = vmatmul.mubr.f32.gmra.mrb[0].mxu0 %v611
        %v834 = vpop.f32.mrb[0].mxu0
        %v835 = vadd.f32 %v740, %v834
        %v836 = vpop.f32.mrb[0].mxu0
        %837 = vmatprep.mubr.f32.mxu0 0.0
        %838 = vmatmul.mubr.f32.gmra.mrb[0].mxu0 %v612
        %v839 = vpop.f32.mrb[0].mxu0
        %v840 = vadd.f32 %v745, %v839
        %v841 = vpop.f32.mrb[0].mxu0
        %842 = vmatprep.mubr.f32.mxu0 0.0
        %843 = vmatmul.mubr.f32.gmra.mrb[0].mxu0 %v613
        %v844 = vpop.f32.mrb[0].mxu0
        %v845 = vadd.f32 %v750, %v844
        %v846 = vpop.f32.mrb[0].mxu0
        %847 = vmatprep.mubr.f32.mxu0 0.0
        %848 = vmatmul.mubr.f32.gmra.mrb[0].mxu0 %v614
        %v849 = vpop.f32.mrb[0].mxu0
        %v850 = vadd.f32 %v755, %v849
        %v851 = vpop.f32.mrb[0].mxu0
        %852 = vdwg.mxu0
        %853 = vmatprep.subr.mxu0 0.0
        %854 = vmatpush1.msra.mxu0 %v548
        %855 = vmatprep.subr.mxu0 0.0
        %856 = vmatpush1.msra.mxu0 %v549
        %857 = vmatprep.subr.mxu0 0.0
        %858 = vmatpush1.msra.mxu0 %v550
        %859 = vmatprep.subr.mxu0 0.0
        %860 = vmatpush1.msra.mxu0 %v551
        %861 = vmatprep.subr.mxu0 0.0
        %862 = vmatpush1.msra.mxu0 %v552
        %863 = vmatprep.subr.mxu0 0.0
        %864 = vmatpush1.msra.mxu0 %v553
        %865 = vmatprep.subr.mxu0 0.0
        %866 = vmatpush1.msra.mxu0 %v554
        %867 = vmatprep.subr.mxu0 0.0
        %868 = vmatpush1.msra.mxu0 %v555
        %869 = vmatprep.subr.mxu0 0.0
        %870 = vmatpush1.msra.mxu0 %v556
        %871 = vmatprep.subr.mxu0 0.0
        %872 = vmatpush1.msra.mxu0 %v557
        %873 = vmatprep.subr.mxu0 0.0
        %874 = vmatpush1.msra.mxu0 %v558
        %875 = vmatprep.subr.mxu0 0.0
        %876 = vmatpush1.msra.mxu0 %v559
        %877 = vmatprep.subr.mxu0 0.0
        %878 = vmatpush1.msra.mxu0 %v560
        %879 = vmatprep.subr.mxu0 0.0
        %880 = vmatpush1.msra.mxu0 %v561
        %881 = vmatprep.subr.mxu0 0.0
        %882 = vmatpush1.msra.mxu0 %v562
        %883 = vmatprep.subr.mxu0 0.0
        %884 = vmatpush1.msra.mxu0 %v563
        %885 = vmatprep.subr.mxu0 0.0
        %886 = vmatpush1.msra.mxu0 %v564
        %887 = vmatprep.subr.mxu0 0.0
        %888 = vmatpush1.msra.mxu0 %v565
        %889 = vmatprep.subr.mxu0 0.0
        %890 = vmatpush1.msra.mxu0 %v566
        %891 = vmatprep.subr.mxu0 0.0
        %892 = vmatpush1.msra.mxu0 %v567
        %893 = vmatprep.subr.mxu0 0.0
        %894 = vmatpush1.msra.mxu0 %v568
        %895 = vmatprep.subr.mxu0 0.0
        %896 = vmatpush1.msra.mxu0 %v569
        %897 = vmatprep.subr.mxu0 0.0
        %898 = vmatpush1.msra.mxu0 %v570
        %899 = vmatprep.subr.mxu0 0.0
        %900 = vmatpush1.msra.mxu0 %v571
        %901 = vmatprep.subr.mxu0 0.0
        %902 = vmatpush1.msra.mxu0 %v572
        %903 = vmatprep.subr.mxu0 0.0
        %904 = vmatpush1.msra.mxu0 %v573
        %905 = vmatprep.subr.mxu0 0.0
        %906 = vmatpush1.msra.mxu0 %v574
        %907 = vmatprep.subr.mxu0 0.0
        %908 = vmatpush1.msra.mxu0 %v575
        %909 = vmatprep.subr.mxu0 0.0
        %910 = vmatpush1.msra.mxu0 %v576
        %911 = vmatprep.subr.mxu0 0.0
        %912 = vmatpush1.msra.mxu0 %v577
        %913 = vmatprep.subr.mxu0 0.0
        %914 = vmatpush1.msra.mxu0 %v578
        %915 = vmatprep.subr.mxu0 0.0
        %916 = vmatpush1.msra.mxu0 %v579
        %917 = vmatprep.mubr.f32.mxu0 %v536
        %918 = vmatmul.mubr.f32.gmra.mrb[0].mxu0 %v530
        %v919 = vpop.f32.mrb[0].mxu0
        %v920 = vadd.f32 %v825, %v919
        %v921 = vpop.f32.mrb[0].mxu0
        %922 = vmatprep.mubr.f32.mxu0 %v537
        %923 = vmatmul.mubr.f32.gmra.mrb[0].mxu0 %v531
        %v924 = vpop.f32.mrb[0].mxu0
        %v925 = vadd.f32 %v830, %v924
        %v926 = vpop.f32.mrb[0].mxu0
        %927 = vmatprep.mubr.f32.mxu0 %v538
        %928 = vmatmul.mubr.f32.gmra.mrb[0].mxu0 %v532
        %v929 = vpop.f32.mrb[0].mxu0
        %v930 = vadd.f32 %v835, %v929
        %v931 = vpop.f32.mrb[0].mxu0
        %932 = vmatprep.mubr.f32.mxu0 %v539
        %933 = vmatmul.mubr.f32.gmra.mrb[0].mxu0 %v533
        %v934 = vpop.f32.mrb[0].mxu0
        %v935 = vadd.f32 %v840, %v934
        %v936 = vpop.f32.mrb[0].mxu0
        %937 = vmatprep.mubr.f32.mxu0 %v540
        %938 = vmatmul.mubr.f32.gmra.mrb[0].mxu0 %v534
        %v939 = vpop.f32.mrb[0].mxu0
        %v940 = vadd.f32 %v845, %v939
        %v941 = vpop.f32.mrb[0].mxu0
        %942 = vmatprep.mubr.f32.mxu0 %v541
        %943 = vmatmul.mubr.f32.gmra.mrb[0].mxu0 %v535
        %v944 = vpop.f32.mrb[0].mxu0
        %v945 = vadd.f32 %v850, %v944
        %v946 = vpop.f32.mrb[0].mxu0
        %947 = vdwg.mxu0
        %948 = vmatprep.subr.mxu0 0.0
        %949 = vmatpush1.msra.mxu0 %v580
        %950 = vmatprep.subr.mxu0 0.0
        %951 = vmatpush1.msra.mxu0 %v581
        %952 = vmatprep.subr.mxu0 0.0
        %953 = vmatpush1.msra.mxu0 %v582
        %954 = vmatprep.subr.mxu0 0.0
        %955 = vmatpush1.msra.mxu0 %v583
        %956 = vmatprep.subr.mxu0 0.0
        %957 = vmatpush1.msra.mxu0 %v584
        %958 = vmatprep.subr.mxu0 0.0
        %959 = vmatpush1.msra.mxu0 %v585
        %960 = vmatprep.subr.mxu0 0.0
        %961 = vmatpush1.msra.mxu0 %v586
        %962 = vmatprep.subr.mxu0 0.0
        %963 = vmatpush1.msra.mxu0 %v587
        %964 = vmatprep.subr.mxu0 0.0
        %965 = vmatpush1.msra.mxu0 %v588
        %966 = vmatprep.subr.mxu0 0.0
        %967 = vmatpush1.msra.mxu0 %v589
        %968 = vmatprep.subr.mxu0 0.0
        %969 = vmatpush1.msra.mxu0 %v590
        %970 = vmatprep.subr.mxu0 0.0
        %971 = vmatpush1.msra.mxu0 %v591
        %972 = vmatprep.subr.mxu0 0.0
        %973 = vmatpush1.msra.mxu0 %v592
        %974 = vmatprep.subr.mxu0 0.0
        %975 = vmatpush1.msra.mxu0 %v593
        %976 = vmatprep.subr.mxu0 0.0
        %977 = vmatpush1.msra.mxu0 %v594
        %978 = vmatprep.subr.mxu0 0.0
        %979 = vmatpush1.msra.mxu0 %v595
        %980 = vmatprep.subr.mxu0 0.0
        %981 = vmatpush1.msra.mxu0 0.0
        %982 = vmatprep.subr.mxu0 0.0
        %983 = vmatpush1.msra.mxu0 0.0
        %984 = vmatprep.subr.mxu0 0.0
        %985 = vmatpush1.msra.mxu0 0.0
        %986 = vmatprep.subr.mxu0 0.0
        %987 = vmatpush1.msra.mxu0 0.0
        %988 = vmatprep.subr.mxu0 0.0
        %989 = vmatpush1.msra.mxu0 0.0
        %990 = vmatprep.subr.mxu0 0.0
        %991 = vmatpush1.msra.mxu0 0.0
        %992 = vmatprep.subr.mxu0 0.0
        %993 = vmatpush1.msra.mxu0 0.0
        %994 = vmatprep.subr.mxu0 0.0
        %995 = vmatpush1.msra.mxu0 0.0
        %996 = vmatprep.subr.mxu0 0.0
        %997 = vmatpush1.msra.mxu0 0.0
        %998 = vmatprep.subr.mxu0 0.0
        %999 = vmatpush1.msra.mxu0 0.0
        %1000 = vmatprep.subr.mxu0 0.0
        %1001 = vmatpush1.msra.mxu0 0.0
        %1002 = vmatprep.subr.mxu0 0.0
        %1003 = vmatpush1.msra.mxu0 0.0
        %1004 = vmatprep.subr.mxu0 0.0
        %1005 = vmatpush1.msra.mxu0 0.0
        %1006 = vmatprep.subr.mxu0 0.0
        %1007 = vmatpush1.msra.mxu0 0.0
        %1008 = vmatprep.subr.mxu0 0.0
        %1009 = vmatpush1.msra.mxu0 0.0
        %1010 = vmatprep.subr.mxu0 0.0
        %1011 = vmatpush1.msra.mxu0 0.0
        %1012 = vmatprep.mubr.f32.mxu0 0.0
        %1013 = vmatmul.mubr.f32.gmra.mrb[0].mxu0 %v542
        %v1014 = vpop.f32.mrb[0].mxu0
        %v1015 = vadd.f32 %v920, %v1014
        %v1016 = vpop.f32.mrb[0].mxu0
        %1017 = vmatprep.mubr.f32.mxu0 0.0
        %1018 = vmatmul.mubr.f32.gmra.mrb[0].mxu0 %v543
        %v1019 = vpop.f32.mrb[0].mxu0
        %v1020 = vadd.f32 %v925, %v1019
        %v1021 = vpop.f32.mrb[0].mxu0
        %1022 = vmatprep.mubr.f32.mxu0 0.0
        %1023 = vmatmul.mubr.f32.gmra.mrb[0].mxu0 %v544
        %v1024 = vpop.f32.mrb[0].mxu0
        %v1025 = vadd.f32 %v930, %v1024
        %v1026 = vpop.f32.mrb[0].mxu0
        %1027 = vmatprep.mubr.f32.mxu0 0.0
        %1028 = vmatmul.mubr.f32.gmra.mrb[0].mxu0 %v545
        %v1029 = vpop.f32.mrb[0].mxu0
        %v1030 = vadd.f32 %v935, %v1029
        %v1031 = vpop.f32.mrb[0].mxu0
        %1032 = vmatprep.mubr.f32.mxu0 0.0
        %1033 = vmatmul.mubr.f32.gmra.mrb[0].mxu0 %v546
        %v1034 = vpop.f32.mrb[0].mxu0
        %v1035 = vadd.f32 %v940, %v1034
        %v1036 = vpop.f32.mrb[0].mxu0
        %1037 = vmatprep.mubr.f32.mxu0 0.0
        %1038 = vmatmul.mubr.f32.gmra.mrb[0].mxu0 %v547
        %v1039 = vpop.f32.mrb[0].mxu0
        %v1040 = vadd.f32 %v945, %v1039
        %v1041 = vpop.f32.mrb[0].mxu0
        %1042 = vdwg.mxu0
        %v1043 = vld [vmem:[%s522] sm:$0xff]
        %v1044 = vld [vmem:[%s522 + $0x10] sm:$0xff]
        %v1045 = vld [vmem:[%s522 + $0x20] sm:$0xff]
        %v1046 = vld [vmem:[%s522 + $0x30] sm:$0xff]
        %v1047 = vld [vmem:[%s522 + $0x40] sm:$0xff]
        %v1048 = vld [vmem:[%s522 + $0x50] sm:$0xff]
        %v1049 = vld [vmem:[%s522 + $0x1] sm:$0xff]
        %v1050 = vld [vmem:[%s522 + $0x11] sm:$0xff]
        %v1051 = vld [vmem:[%s522 + $0x21] sm:$0xff]
        %v1052 = vld [vmem:[%s522 + $0x31] sm:$0xff]
        %v1053 = vld [vmem:[%s522 + $0x41] sm:$0xff]
        %v1054 = vld [vmem:[%s522 + $0x51] sm:$0xff]
        %v1055 = vld [vmem:[%s522 + $0x2] sm:$0xff]
        %v1056 = vld [vmem:[%s522 + $0x12] sm:$0xff]
        %v1057 = vld [vmem:[%s522 + $0x22] sm:$0xff]
        %v1058 = vld [vmem:[%s522 + $0x32] sm:$0xff]
        %v1059 = vld [vmem:[%s522 + $0x42] sm:$0xff]
        %v1060 = vld [vmem:[%s522 + $0x52] sm:$0xff]
        %v1061 = vld [vmem:[#allocation9 + $0x300] sm:$0xff]
        %v1062 = vld [vmem:[#allocation9 + $0x308] sm:$0xff]
        %v1063 = vld [vmem:[#allocation9 + $0x310] sm:$0xff]
        %v1064 = vld [vmem:[#allocation9 + $0x318] sm:$0xff]
        %v1065 = vld [vmem:[#allocation9 + $0x320] sm:$0xff]
        %v1066 = vld [vmem:[#allocation9 + $0x328] sm:$0xff]
        %v1067 = vld [vmem:[#allocation9 + $0x330] sm:$0xff]
        %v1068 = vld [vmem:[#allocation9 + $0x338] sm:$0xff]
        %v1069 = vld [vmem:[#allocation9 + $0x340] sm:$0xff]
        %v1070 = vld [vmem:[#allocation9 + $0x348] sm:$0xff]
        %v1071 = vld [vmem:[#allocation9 + $0x350] sm:$0xff]
        %v1072 = vld [vmem:[#allocation9 + $0x358] sm:$0xff]
        %v1073 = vld [vmem:[#allocation9 + $0x360] sm:$0xff]
        %v1074 = vld [vmem:[#allocation9 + $0x368] sm:$0xff]
        %v1075 = vld [vmem:[#allocation9 + $0x370] sm:$0xff]
        %v1076 = vld [vmem:[#allocation9 + $0x378] sm:$0xff]
        %v1077 = vld [vmem:[#allocation9 + $0x380] sm:$0xff]
        %v1078 = vld [vmem:[#allocation9 + $0x388] sm:$0xff]
        %v1079 = vld [vmem:[#allocation9 + $0x390] sm:$0xff]
        %v1080 = vld [vmem:[#allocation9 + $0x398] sm:$0xff]
        %v1081 = vld [vmem:[#allocation9 + $0x3a0] sm:$0xff]
        %v1082 = vld [vmem:[#allocation9 + $0x3a8] sm:$0xff]
        %v1083 = vld [vmem:[#allocation9 + $0x3b0] sm:$0xff]
        %v1084 = vld [vmem:[#allocation9 + $0x3b8] sm:$0xff]
        %v1085 = vld [vmem:[#allocation9 + $0x3c0] sm:$0xff]
        %v1086 = vld [vmem:[#allocation9 + $0x3c8] sm:$0xff]
        %v1087 = vld [vmem:[#allocation9 + $0x3d0] sm:$0xff]
        %v1088 = vld [vmem:[#allocation9 + $0x3d8] sm:$0xff]
        %v1089 = vld [vmem:[#allocation9 + $0x3e0] sm:$0xff]
        %v1090 = vld [vmem:[#allocation9 + $0x3e8] sm:$0xff]
        %v1091 = vld [vmem:[#allocation9 + $0x3f0] sm:$0xff]
        %v1092 = vld [vmem:[#allocation9 + $0x3f8] sm:$0xff]
        %v1093 = vld [vmem:[#allocation9 + $0x400] sm:$0xff]
        %v1094 = vld [vmem:[#allocation9 + $0x408] sm:$0xff]
        %v1095 = vld [vmem:[#allocation9 + $0x410] sm:$0xff]
        %v1096 = vld [vmem:[#allocation9 + $0x418] sm:$0xff]
        %v1097 = vld [vmem:[#allocation9 + $0x420] sm:$0xff]
        %v1098 = vld [vmem:[#allocation9 + $0x428] sm:$0xff]
        %v1099 = vld [vmem:[#allocation9 + $0x430] sm:$0xff]
        %v1100 = vld [vmem:[#allocation9 + $0x438] sm:$0xff]
        %v1101 = vld [vmem:[#allocation9 + $0x440] sm:$0xff]
        %v1102 = vld [vmem:[#allocation9 + $0x448] sm:$0xff]
        %v1103 = vld [vmem:[#allocation9 + $0x450] sm:$0xff]
        %v1104 = vld [vmem:[#allocation9 + $0x458] sm:$0xff]
        %v1105 = vld [vmem:[#allocation9 + $0x460] sm:$0xff]
        %v1106 = vld [vmem:[#allocation9 + $0x468] sm:$0xff]
        %v1107 = vld [vmem:[#allocation9 + $0x470] sm:$0xff]
        %v1108 = vld [vmem:[#allocation9 + $0x478] sm:$0xff]
        %1109 = vmatprep.subr.mxu0 0.0
        %1110 = vmatpush1.msra.mxu0 %v1061
        %1111 = vmatprep.subr.mxu0 0.0
        %1112 = vmatpush1.msra.mxu0 %v1062
        %1113 = vmatprep.subr.mxu0 0.0
        %1114 = vmatpush1.msra.mxu0 %v1063
        %1115 = vmatprep.subr.mxu0 0.0
        %1116 = vmatpush1.msra.mxu0 %v1064
        %1117 = vmatprep.subr.mxu0 0.0
        %1118 = vmatpush1.msra.mxu0 %v1065
        %1119 = vmatprep.subr.mxu0 0.0
        %1120 = vmatpush1.msra.mxu0 %v1066
        %1121 = vmatprep.subr.mxu0 0.0
        %1122 = vmatpush1.msra.mxu0 %v1067
        %1123 = vmatprep.subr.mxu0 0.0
        %1124 = vmatpush1.msra.mxu0 %v1068
        %1125 = vmatprep.subr.mxu0 0.0
        %1126 = vmatpush1.msra.mxu0 %v1069
        %1127 = vmatprep.subr.mxu0 0.0
        %1128 = vmatpush1.msra.mxu0 %v1070
        %1129 = vmatprep.subr.mxu0 0.0
        %1130 = vmatpush1.msra.mxu0 %v1071
        %1131 = vmatprep.subr.mxu0 0.0
        %1132 = vmatpush1.msra.mxu0 %v1072
        %1133 = vmatprep.subr.mxu0 0.0
        %1134 = vmatpush1.msra.mxu0 %v1073
        %1135 = vmatprep.subr.mxu0 0.0
        %1136 = vmatpush1.msra.mxu0 %v1074
        %1137 = vmatprep.subr.mxu0 0.0
        %1138 = vmatpush1.msra.mxu0 %v1075
        %1139 = vmatprep.subr.mxu0 0.0
        %1140 = vmatpush1.msra.mxu0 %v1076
        %1141 = vmatprep.subr.mxu0 0.0
        %1142 = vmatpush1.msra.mxu0 %v1077
        %1143 = vmatprep.subr.mxu0 0.0
        %1144 = vmatpush1.msra.mxu0 %v1078
        %1145 = vmatprep.subr.mxu0 0.0
        %1146 = vmatpush1.msra.mxu0 %v1079
        %1147 = vmatprep.subr.mxu0 0.0
        %1148 = vmatpush1.msra.mxu0 %v1080
        %1149 = vmatprep.subr.mxu0 0.0
        %1150 = vmatpush1.msra.mxu0 %v1081
        %1151 = vmatprep.subr.mxu0 0.0
        %1152 = vmatpush1.msra.mxu0 %v1082
        %1153 = vmatprep.subr.mxu0 0.0
        %1154 = vmatpush1.msra.mxu0 %v1083
        %1155 = vmatprep.subr.mxu0 0.0
        %1156 = vmatpush1.msra.mxu0 %v1084
        %1157 = vmatprep.subr.mxu0 0.0
        %1158 = vmatpush1.msra.mxu0 %v1085
        %1159 = vmatprep.subr.mxu0 0.0
        %1160 = vmatpush1.msra.mxu0 %v1086
        %1161 = vmatprep.subr.mxu0 0.0
        %1162 = vmatpush1.msra.mxu0 %v1087
        %1163 = vmatprep.subr.mxu0 0.0
        %1164 = vmatpush1.msra.mxu0 %v1088
        %1165 = vmatprep.subr.mxu0 0.0
        %1166 = vmatpush1.msra.mxu0 %v1089
        %1167 = vmatprep.subr.mxu0 0.0
        %1168 = vmatpush1.msra.mxu0 %v1090
        %1169 = vmatprep.subr.mxu0 0.0
        %1170 = vmatpush1.msra.mxu0 %v1091
        %1171 = vmatprep.subr.mxu0 0.0
        %1172 = vmatpush1.msra.mxu0 %v1092
        %1173 = vmatprep.mubr.f32.mxu0 %v1049
        %1174 = vmatmul.mubr.f32.gmra.mrb[0].mxu0 %v1043
        %v1175 = vpop.f32.mrb[0].mxu0
        %v1176 = vadd.f32 0.0, %v1175
        %v1177 = vpop.f32.mrb[0].mxu0
        %1178 = vmatprep.mubr.f32.mxu0 %v1050
        %1179 = vmatmul.mubr.f32.gmra.mrb[0].mxu0 %v1044
        %v1180 = vpop.f32.mrb[0].mxu0
        %v1181 = vadd.f32 0.0, %v1180
        %v1182 = vpop.f32.mrb[0].mxu0
        %1183 = vmatprep.mubr.f32.mxu0 %v1051
        %1184 = vmatmul.mubr.f32.gmra.mrb[0].mxu0 %v1045
        %v1185 = vpop.f32.mrb[0].mxu0
        %v1186 = vadd.f32 0.0, %v1185
        %v1187 = vpop.f32.mrb[0].mxu0
        %1188 = vmatprep.mubr.f32.mxu0 %v1052
        %1189 = vmatmul.mubr.f32.gmra.mrb[0].mxu0 %v1046
        %v1190 = vpop.f32.mrb[0].mxu0
        %v1191 = vadd.f32 0.0, %v1190
        %v1192 = vpop.f32.mrb[0].mxu0
        %1193 = vmatprep.mubr.f32.mxu0 %v1053
        %1194 = vmatmul.mubr.f32.gmra.mrb[0].mxu0 %v1047
        %v1195 = vpop.f32.mrb[0].mxu0
        %v1196 = vadd.f32 0.0, %v1195
        %v1197 = vpop.f32.mrb[0].mxu0
        %1198 = vmatprep.mubr.f32.mxu0 %v1054
        %1199 = vmatmul.mubr.f32.gmra.mrb[0].mxu0 %v1048
        %v1200 = vpop.f32.mrb[0].mxu0
        %v1201 = vadd.f32 0.0, %v1200
        %v1202 = vpop.f32.mrb[0].mxu0
        %1203 = vdwg.mxu0
        %1204 = vmatprep.subr.mxu0 0.0
        %1205 = vmatpush1.msra.mxu0 %v1093
        %1206 = vmatprep.subr.mxu0 0.0
        %1207 = vmatpush1.msra.mxu0 %v1094
        %1208 = vmatprep.subr.mxu0 0.0
        %1209 = vmatpush1.msra.mxu0 %v1095
        %1210 = vmatprep.subr.mxu0 0.0
        %1211 = vmatpush1.msra.mxu0 %v1096
        %1212 = vmatprep.subr.mxu0 0.0
        %1213 = vmatpush1.msra.mxu0 %v1097
        %1214 = vmatprep.subr.mxu0 0.0
        %1215 = vmatpush1.msra.mxu0 %v1098
        %1216 = vmatprep.subr.mxu0 0.0
        %1217 = vmatpush1.msra.mxu0 %v1099
        %1218 = vmatprep.subr.mxu0 0.0
        %1219 = vmatpush1.msra.mxu0 %v1100
        %1220 = vmatprep.subr.mxu0 0.0
        %1221 = vmatpush1.msra.mxu0 %v1101
        %1222 = vmatprep.subr.mxu0 0.0
        %1223 = vmatpush1.msra.mxu0 %v1102
        %1224 = vmatprep.subr.mxu0 0.0
        %1225 = vmatpush1.msra.mxu0 %v1103
        %1226 = vmatprep.subr.mxu0 0.0
        %1227 = vmatpush1.msra.mxu0 %v1104
        %1228 = vmatprep.subr.mxu0 0.0
        %1229 = vmatpush1.msra.mxu0 %v1105
        %1230 = vmatprep.subr.mxu0 0.0
        %1231 = vmatpush1.msra.mxu0 %v1106
        %1232 = vmatprep.subr.mxu0 0.0
        %1233 = vmatpush1.msra.mxu0 %v1107
        %1234 = vmatprep.subr.mxu0 0.0
        %1235 = vmatpush1.msra.mxu0 %v1108
        %1236 = vmatprep.subr.mxu0 0.0
        %1237 = vmatpush1.msra.mxu0 0.0
        %1238 = vmatprep.subr.mxu0 0.0
        %1239 = vmatpush1.msra.mxu0 0.0
        %1240 = vmatprep.subr.mxu0 0.0
        %1241 = vmatpush1.msra.mxu0 0.0
        %1242 = vmatprep.subr.mxu0 0.0
        %1243 = vmatpush1.msra.mxu0 0.0
        %1244 = vmatprep.subr.mxu0 0.0
        %1245 = vmatpush1.msra.mxu0 0.0
        %1246 = vmatprep.subr.mxu0 0.0
        %1247 = vmatpush1.msra.mxu0 0.0
        %1248 = vmatprep.subr.mxu0 0.0
        %1249 = vmatpush1.msra.mxu0 0.0
        %1250 = vmatprep.subr.mxu0 0.0
        %1251 = vmatpush1.msra.mxu0 0.0
        %1252 = vmatprep.subr.mxu0 0.0
        %1253 = vmatpush1.msra.mxu0 0.0
        %1254 = vmatprep.subr.mxu0 0.0
        %1255 = vmatpush1.msra.mxu0 0.0
        %1256 = vmatprep.subr.mxu0 0.0
        %1257 = vmatpush1.msra.mxu0 0.0
        %1258 = vmatprep.subr.mxu0 0.0
        %1259 = vmatpush1.msra.mxu0 0.0
        %1260 = vmatprep.subr.mxu0 0.0
        %1261 = vmatpush1.msra.mxu0 0.0
        %1262 = vmatprep.subr.mxu0 0.0
        %1263 = vmatpush1.msra.mxu0 0.0
        %1264 = vmatprep.subr.mxu0 0.0
        %1265 = vmatpush1.msra.mxu0 0.0
        %1266 = vmatprep.subr.mxu0 0.0
        %1267 = vmatpush1.msra.mxu0 0.0
        %1268 = vmatprep.mubr.f32.mxu0 0.0
        %1269 = vmatmul.mubr.f32.gmra.mrb[0].mxu0 %v1055
        %v1270 = vpop.f32.mrb[0].mxu0
        %v1271 = vadd.f32 %v1176, %v1270
        %v1272 = vpop.f32.mrb[0].mxu0
        %1273 = vmatprep.mubr.f32.mxu0 0.0
        %1274 = vmatmul.mubr.f32.gmra.mrb[0].mxu0 %v1056
        %v1275 = vpop.f32.mrb[0].mxu0
        %v1276 = vadd.f32 %v1181, %v1275
        %v1277 = vpop.f32.mrb[0].mxu0
        %1278 = vmatprep.mubr.f32.mxu0 0.0
        %1279 = vmatmul.mubr.f32.gmra.mrb[0].mxu0 %v1057
        %v1280 = vpop.f32.mrb[0].mxu0
        %v1281 = vadd.f32 %v1186, %v1280
        %v1282 = vpop.f32.mrb[0].mxu0
        %1283 = vmatprep.mubr.f32.mxu0 0.0
        %1284 = vmatmul.mubr.f32.gmra.mrb[0].mxu0 %v1058
        %v1285 = vpop.f32.mrb[0].mxu0
        %v1286 = vadd.f32 %v1191, %v1285
        %v1287 = vpop.f32.mrb[0].mxu0
        %1288 = vmatprep.mubr.f32.mxu0 0.0
        %1289 = vmatmul.mubr.f32.gmra.mrb[0].mxu0 %v1059
        %v1290 = vpop.f32.mrb[0].mxu0
        %v1291 = vadd.f32 %v1196, %v1290
        %v1292 = vpop.f32.mrb[0].mxu0
        %1293 = vmatprep.mubr.f32.mxu0 0.0
        %1294 = vmatmul.mubr.f32.gmra.mrb[0].mxu0 %v1060
        %v1295 = vpop.f32.mrb[0].mxu0
        %v1296 = vadd.f32 %v1201, %v1295
        %v1297 = vpop.f32.mrb[0].mxu0
        %1298 = vdwg.mxu0
        %v1299 = vadd.f32 %v1015, %v1271
        %v1300 = vadd.f32 %v1020, %v1276
        %v1301 = vadd.f32 %v1025, %v1281
        %v1302 = vadd.f32 %v1030, %v1286
        %v1303 = vadd.f32 %v1035, %v1291
        %v1304 = vadd.f32 %v1040, %v1296
        %v1305 = vld [vmem:[%s3] sm:$0x1]
        %v1307 = vlaneseq
        %v1308 = vshrl.u32 %v1307, 7
        %v1309 = vsub.s32 0, %v1308
        %v1310 = vrot.slane %v1305, %v1309
        %v1312 = vmul.f32 %v1299, %v1310
        %v1313 = vmul.f32 %v1300, %v1310
        %v1314 = vmul.f32 %v1301, %v1310
        %v1315 = vmul.f32 %v1302, %v1310
        %v1316 = vmul.f32 %v1303, %v1310
        %v1317 = vmul.f32 %v1304, %v1310
        %v1318 = vld [vmem:[%s4] sm:$0x1]
        %v1320 = vlaneseq
        %v1321 = vshrl.u32 %v1320, 7
        %v1322 = vsub.s32 0, %v1321
        %v1323 = vrot.slane %v1318, %v1322
        %v1325 = vadd.f32 %v1312, %v1323
        %v1326 = vadd.f32 %v1313, %v1323
        %v1327 = vadd.f32 %v1314, %v1323
        %v1328 = vadd.f32 %v1315, %v1323
        %v1329 = vadd.f32 %v1316, %v1323
        %v1330 = vadd.f32 %v1317, %v1323
        %v1331 = vmax.f32 %v1325, 0.0
        %v1332 = vmax.f32 %v1326, 0.0
        %v1333 = vmax.f32 %v1327, 0.0
        %v1334 = vmax.f32 %v1328, 0.0
        %v1335 = vmax.f32 %v1329, 0.0
        %v1336 = vmax.f32 %v1330, 0.0
        %1337 = vst [vmem:[#allocation3] sm:$0x1] 0.0
        %1338 = vst [vmem:[#allocation3 + $0x10] sm:$0x1] 0.0
        %1339 = vst [vmem:[#allocation3 + $0x20] sm:$0x1] 0.0
        %1340 = vst [vmem:[#allocation3 + $0x30] sm:$0x1] 0.0
        %1341 = vst [vmem:[#allocation3 + $0x40] sm:$0x1] 0.0
        %1342 = vst [vmem:[#allocation3 + $0x50] sm:$0x1] 0.0
        %1343 = vst [vmem:[#allocation3 + $0x9] sm:$0x1] 0.0
        %1344 = vst [vmem:[#allocation3 + $0x19] sm:$0x1] 0.0
        %1345 = vst [vmem:[#allocation3 + $0x29] sm:$0x1] 0.0
        %1346 = vst [vmem:[#allocation3 + $0x39] sm:$0x1] 0.0
        %1347 = vst [vmem:[#allocation3 + $0x49] sm:$0x1] 0.0
        %1348 = vst [vmem:[#allocation3 + $0x59] sm:$0x1] 0.0
        %1349 = vst [vmem:[#allocation3 + $0x1] sm:$0xff] %v1331
        %1350 = vst [vmem:[#allocation3 + $0x11] sm:$0xff] %v1332
        %1351 = vst [vmem:[#allocation3 + $0x21] sm:$0xff] %v1333
        %1352 = vst [vmem:[#allocation3 + $0x31] sm:$0xff] %v1334
        %1353 = vst [vmem:[#allocation3 + $0x41] sm:$0xff] %v1335
        %1354 = vst [vmem:[#allocation3 + $0x51] sm:$0xff] %v1336
        %p1355 = scmp.eq.s32.totalorder %s34, 0
        // Predicated region
        $region69: #{tpu_custom_call.1} parent=51 // pred_check
          %p1356 = pneg %p1355
        $region70: #{tpu_custom_call.1} parent=51 // pred_check_branch
          %1358 = sbr.rel (%p1356) target = $region72
        $region71: #{tpu_custom_call.1} parent=51 // pred_region
          %1359 = vst [vmem:[#allocation3] sm:$0xff] 0.0
          %1360 = vst [vmem:[#allocation3 + $0x8] sm:$0x3] 0.0
        $region72: #{tpu_custom_call.1} parent=51 // pred_fallthru
          _
        %p1361 = scmp.eq.s32.totalorder %s34, 1
        // Predicated region
        $region73: #{tpu_custom_call.1} parent=51 // pred_check
          %p1362 = pneg %p1361
        $region74: #{tpu_custom_call.1} parent=51 // pred_check_branch
          %1364 = sbr.rel (%p1362) target = $region76
        $region75: #{tpu_custom_call.1} parent=51 // pred_region
          %s1365 = scalar_lea.vmem [#allocation3], 80
          %1366 = vst [vmem:[%s1365] sm:$0xff] 0.0
          %1367 = vst [vmem:[%s1365 + $0x8] sm:$0x3] 0.0
        $region76: #{tpu_custom_call.1} parent=51 // pred_fallthru
          _
        %v1368 = vld [vmem:[#allocation3] sm:$0xff]
        %v1369 = vld [vmem:[#allocation3 + $0x10] sm:$0xff]
        %v1370 = vld [vmem:[#allocation3 + $0x20] sm:$0xff]
        %v1371 = vld [vmem:[#allocation3 + $0x30] sm:$0xff]
        %v1372 = vld [vmem:[#allocation3 + $0x1] sm:$0xff]
        %v1373 = vld [vmem:[#allocation3 + $0x11] sm:$0xff]
        %v1374 = vld [vmem:[#allocation3 + $0x21] sm:$0xff]
        %v1375 = vld [vmem:[#allocation3 + $0x31] sm:$0xff]
        %v1376 = vld [vmem:[#allocation3 + $0x2] sm:$0xff]
        %v1377 = vld [vmem:[#allocation3 + $0x12] sm:$0xff]
        %v1378 = vld [vmem:[#allocation3 + $0x22] sm:$0xff]
        %v1379 = vld [vmem:[#allocation3 + $0x32] sm:$0xff]
        %v1380 = vld [vmem:[#allocation10] sm:$0xff]
        %v1381 = vld [vmem:[#allocation10 + $0x8] sm:$0xff]
        %v1382 = vld [vmem:[#allocation10 + $0x10] sm:$0xff]
        %v1383 = vld [vmem:[#allocation10 + $0x18] sm:$0xff]
        %v1384 = vld [vmem:[#allocation10 + $0x20] sm:$0xff]
        %v1385 = vld [vmem:[#allocation10 + $0x28] sm:$0xff]
        %v1386 = vld [vmem:[#allocation10 + $0x30] sm:$0xff]
        %v1387 = vld [vmem:[#allocation10 + $0x38] sm:$0xff]
        %v1388 = vld [vmem:[#allocation10 + $0x40] sm:$0xff]
        %v1389 = vld [vmem:[#allocation10 + $0x48] sm:$0xff]
        %v1390 = vld [vmem:[#allocation10 + $0x50] sm:$0xff]
        %v1391 = vld [vmem:[#allocation10 + $0x58] sm:$0xff]
        %v1392 = vld [vmem:[#allocation10 + $0x60] sm:$0xff]
        %v1393 = vld [vmem:[#allocation10 + $0x68] sm:$0xff]
        %v1394 = vld [vmem:[#allocation10 + $0x70] sm:$0xff]
        %v1395 = vld [vmem:[#allocation10 + $0x78] sm:$0xff]
        %v1396 = vld [vmem:[#allocation10 + $0x80] sm:$0xff]
        %v1397 = vld [vmem:[#allocation10 + $0x88] sm:$0xff]
        %v1398 = vld [vmem:[#allocation10 + $0x90] sm:$0xff]
        %v1399 = vld [vmem:[#allocation10 + $0x98] sm:$0xff]
        %v1400 = vld [vmem:[#allocation10 + $0xa0] sm:$0xff]
        %v1401 = vld [vmem:[#allocation10 + $0xa8] sm:$0xff]
        %v1402 = vld [vmem:[#allocation10 + $0xb0] sm:$0xff]
        %v1403 = vld [vmem:[#allocation10 + $0xb8] sm:$0xff]
        %v1404 = vld [vmem:[#allocation10 + $0xc0] sm:$0xff]
        %v1405 = vld [vmem:[#allocation10 + $0xc8] sm:$0xff]
        %v1406 = vld [vmem:[#allocation10 + $0xd0] sm:$0xff]
        %v1407 = vld [vmem:[#allocation10 + $0xd8] sm:$0xff]
        %v1408 = vld [vmem:[#allocation10 + $0xe0] sm:$0xff]
        %v1409 = vld [vmem:[#allocation10 + $0xe8] sm:$0xff]
        %v1410 = vld [vmem:[#allocation10 + $0xf0] sm:$0xff]
        %v1411 = vld [vmem:[#allocation10 + $0xf8] sm:$0xff]
        %v1412 = vld [vmem:[#allocation10 + $0x100] sm:$0xff]
        %v1413 = vld [vmem:[#allocation10 + $0x108] sm:$0xff]
        %v1414 = vld [vmem:[#allocation10 + $0x110] sm:$0xff]
        %v1415 = vld [vmem:[#allocation10 + $0x118] sm:$0xff]
        %v1416 = vld [vmem:[#allocation10 + $0x120] sm:$0xff]
        %v1417 = vld [vmem:[#allocation10 + $0x128] sm:$0xff]
        %v1418 = vld [vmem:[#allocation10 + $0x130] sm:$0xff]
        %v1419 = vld [vmem:[#allocation10 + $0x138] sm:$0xff]
        %v1420 = vld [vmem:[#allocation10 + $0x140] sm:$0xff]
        %v1421 = vld [vmem:[#allocation10 + $0x148] sm:$0xff]
        %v1422 = vld [vmem:[#allocation10 + $0x150] sm:$0xff]
        %v1423 = vld [vmem:[#allocation10 + $0x158] sm:$0xff]
        %v1424 = vld [vmem:[#allocation10 + $0x160] sm:$0xff]
        %v1425 = vld [vmem:[#allocation10 + $0x168] sm:$0xff]
        %v1426 = vld [vmem:[#allocation10 + $0x170] sm:$0xff]
        %v1427 = vld [vmem:[#allocation10 + $0x178] sm:$0xff]
        %s1428 = scalar_lea.vmem [#allocation3], 16
        %v1429 = vld [vmem:[%s1428] sm:$0xff]
        %v1430 = vld [vmem:[%s1428 + $0x10] sm:$0xff]
        %v1431 = vld [vmem:[%s1428 + $0x20] sm:$0xff]
        %v1432 = vld [vmem:[%s1428 + $0x30] sm:$0xff]
        %v1433 = vld [vmem:[%s1428 + $0x1] sm:$0xff]
        %v1434 = vld [vmem:[%s1428 + $0x11] sm:$0xff]
        %v1435 = vld [vmem:[%s1428 + $0x21] sm:$0xff]
        %v1436 = vld [vmem:[%s1428 + $0x31] sm:$0xff]
        %v1437 = vld [vmem:[%s1428 + $0x2] sm:$0xff]
        %v1438 = vld [vmem:[%s1428 + $0x12] sm:$0xff]
        %v1439 = vld [vmem:[%s1428 + $0x22] sm:$0xff]
        %v1440 = vld [vmem:[%s1428 + $0x32] sm:$0xff]
        %v1441 = vld [vmem:[#allocation10 + $0x180] sm:$0xff]
        %v1442 = vld [vmem:[#allocation10 + $0x188] sm:$0xff]
        %v1443 = vld [vmem:[#allocation10 + $0x190] sm:$0xff]
        %v1444 = vld [vmem:[#allocation10 + $0x198] sm:$0xff]
        %v1445 = vld [vmem:[#allocation10 + $0x1a0] sm:$0xff]
        %v1446 = vld [vmem:[#allocation10 + $0x1a8] sm:$0xff]
        %v1447 = vld [vmem:[#allocation10 + $0x1b0] sm:$0xff]
        %v1448 = vld [vmem:[#allocation10 + $0x1b8] sm:$0xff]
        %v1449 = vld [vmem:[#allocation10 + $0x1c0] sm:$0xff]
        %v1450 = vld [vmem:[#allocation10 + $0x1c8] sm:$0xff]
        %v1451 = vld [vmem:[#allocation10 + $0x1d0] sm:$0xff]
        %v1452 = vld [vmem:[#allocation10 + $0x1d8] sm:$0xff]
        %v1453 = vld [vmem:[#allocation10 + $0x1e0] sm:$0xff]
        %v1454 = vld [vmem:[#allocation10 + $0x1e8] sm:$0xff]
        %v1455 = vld [vmem:[#allocation10 + $0x1f0] sm:$0xff]
        %v1456 = vld [vmem:[#allocation10 + $0x1f8] sm:$0xff]
        %v1457 = vld [vmem:[#allocation10 + $0x200] sm:$0xff]
        %v1458 = vld [vmem:[#allocation10 + $0x208] sm:$0xff]
        %v1459 = vld [vmem:[#allocation10 + $0x210] sm:$0xff]
        %v1460 = vld [vmem:[#allocation10 + $0x218] sm:$0xff]
        %v1461 = vld [vmem:[#allocation10 + $0x220] sm:$0xff]
        %v1462 = vld [vmem:[#allocation10 + $0x228] sm:$0xff]
        %v1463 = vld [vmem:[#allocation10 + $0x230] sm:$0xff]
        %v1464 = vld [vmem:[#allocation10 + $0x238] sm:$0xff]
        %v1465 = vld [vmem:[#allocation10 + $0x240] sm:$0xff]
        %v1466 = vld [vmem:[#allocation10 + $0x248] sm:$0xff]
        %v1467 = vld [vmem:[#allocation10 + $0x250] sm:$0xff]
        %v1468 = vld [vmem:[#allocation10 + $0x258] sm:$0xff]
        %v1469 = vld [vmem:[#allocation10 + $0x260] sm:$0xff]
        %v1470 = vld [vmem:[#allocation10 + $0x268] sm:$0xff]
        %v1471 = vld [vmem:[#allocation10 + $0x270] sm:$0xff]
        %v1472 = vld [vmem:[#allocation10 + $0x278] sm:$0xff]
        %v1473 = vld [vmem:[#allocation10 + $0x280] sm:$0xff]
        %v1474 = vld [vmem:[#allocation10 + $0x288] sm:$0xff]
        %v1475 = vld [vmem:[#allocation10 + $0x290] sm:$0xff]
        %v1476 = vld [vmem:[#allocation10 + $0x298] sm:$0xff]
        %v1477 = vld [vmem:[#allocation10 + $0x2a0] sm:$0xff]
        %v1478 = vld [vmem:[#allocation10 + $0x2a8] sm:$0xff]
        %v1479 = vld [vmem:[#allocation10 + $0x2b0] sm:$0xff]
        %v1480 = vld [vmem:[#allocation10 + $0x2b8] sm:$0xff]
        %v1481 = vld [vmem:[#allocation10 + $0x2c0] sm:$0xff]
        %v1482 = vld [vmem:[#allocation10 + $0x2c8] sm:$0xff]
        %v1483 = vld [vmem:[#allocation10 + $0x2d0] sm:$0xff]
        %v1484 = vld [vmem:[#allocation10 + $0x2d8] sm:$0xff]
        %v1485 = vld [vmem:[#allocation10 + $0x2e0] sm:$0xff]
        %v1486 = vld [vmem:[#allocation10 + $0x2e8] sm:$0xff]
        %v1487 = vld [vmem:[#allocation10 + $0x2f0] sm:$0xff]
        %v1488 = vld [vmem:[#allocation10 + $0x2f8] sm:$0xff]
        %1489 = vmatprep.subr.mxu0 0.0
        %1490 = vmatpush1.msra.mxu0 %v1441
        %1491 = vmatprep.subr.mxu0 0.0
        %1492 = vmatpush1.msra.mxu0 %v1442
        %1493 = vmatprep.subr.mxu0 0.0
        %1494 = vmatpush1.msra.mxu0 %v1443
        %1495 = vmatprep.subr.mxu0 0.0
        %1496 = vmatpush1.msra.mxu0 %v1444
        %1497 = vmatprep.subr.mxu0 0.0
        %1498 = vmatpush1.msra.mxu0 %v1445
        %1499 = vmatprep.subr.mxu0 0.0
        %1500 = vmatpush1.msra.mxu0 %v1446
        %1501 = vmatprep.subr.mxu0 0.0
        %1502 = vmatpush1.msra.mxu0 %v1447
        %1503 = vmatprep.subr.mxu0 0.0
        %1504 = vmatpush1.msra.mxu0 %v1448
        %1505 = vmatprep.subr.mxu0 0.0
        %1506 = vmatpush1.msra.mxu0 %v1449
        %1507 = vmatprep.subr.mxu0 0.0
        %1508 = vmatpush1.msra.mxu0 %v1450
        %1509 = vmatprep.subr.mxu0 0.0
        %1510 = vmatpush1.msra.mxu0 %v1451
        %1511 = vmatprep.subr.mxu0 0.0
        %1512 = vmatpush1.msra.mxu0 %v1452
        %1513 = vmatprep.subr.mxu0 0.0
        %1514 = vmatpush1.msra.mxu0 %v1453
        %1515 = vmatprep.subr.mxu0 0.0
        %1516 = vmatpush1.msra.mxu0 %v1454
        %1517 = vmatprep.subr.mxu0 0.0
        %1518 = vmatpush1.msra.mxu0 %v1455
        %1519 = vmatprep.subr.mxu0 0.0
        %1520 = vmatpush1.msra.mxu0 %v1456
        %1521 = vmatprep.subr.mxu0 0.0
        %1522 = vmatpush1.msra.mxu0 %v1457
        %1523 = vmatprep.subr.mxu0 0.0
        %1524 = vmatpush1.msra.mxu0 %v1458
        %1525 = vmatprep.subr.mxu0 0.0
        %1526 = vmatpush1.msra.mxu0 %v1459
        %1527 = vmatprep.subr.mxu0 0.0
        %1528 = vmatpush1.msra.mxu0 %v1460
        %1529 = vmatprep.subr.mxu0 0.0
        %1530 = vmatpush1.msra.mxu0 %v1461
        %1531 = vmatprep.subr.mxu0 0.0
        %1532 = vmatpush1.msra.mxu0 %v1462
        %1533 = vmatprep.subr.mxu0 0.0
        %1534 = vmatpush1.msra.mxu0 %v1463
        %1535 = vmatprep.subr.mxu0 0.0
        %1536 = vmatpush1.msra.mxu0 %v1464
        %1537 = vmatprep.subr.mxu0 0.0
        %1538 = vmatpush1.msra.mxu0 %v1465
        %1539 = vmatprep.subr.mxu0 0.0
        %1540 = vmatpush1.msra.mxu0 %v1466
        %1541 = vmatprep.subr.mxu0 0.0
        %1542 = vmatpush1.msra.mxu0 %v1467
        %1543 = vmatprep.subr.mxu0 0.0
        %1544 = vmatpush1.msra.mxu0 %v1468
        %1545 = vmatprep.subr.mxu0 0.0
        %1546 = vmatpush1.msra.mxu0 %v1469
        %1547 = vmatprep.subr.mxu0 0.0
        %1548 = vmatpush1.msra.mxu0 %v1470
        %1549 = vmatprep.subr.mxu0 0.0
        %1550 = vmatpush1.msra.mxu0 %v1471
        %1551 = vmatprep.subr.mxu0 0.0
        %1552 = vmatpush1.msra.mxu0 %v1472
        %1553 = vmatprep.mubr.f32.mxu0 %v1433
        %1554 = vmatmul.mubr.f32.gmra.mrb[0].mxu0 %v1429
        %v1555 = vpop.f32.mrb[0].mxu0
        %v1556 = vadd.f32 0.0, %v1555
        %v1557 = vpop.f32.mrb[0].mxu0
        %1558 = vmatprep.mubr.f32.mxu0 %v1434
        %1559 = vmatmul.mubr.f32.gmra.mrb[0].mxu0 %v1430
        %v1560 = vpop.f32.mrb[0].mxu0
        %v1561 = vadd.f32 0.0, %v1560
        %v1562 = vpop.f32.mrb[0].mxu0
        %1563 = vmatprep.mubr.f32.mxu0 %v1435
        %1564 = vmatmul.mubr.f32.gmra.mrb[0].mxu0 %v1431
        %v1565 = vpop.f32.mrb[0].mxu0
        %v1566 = vadd.f32 0.0, %v1565
        %v1567 = vpop.f32.mrb[0].mxu0
        %1568 = vmatprep.mubr.f32.mxu0 %v1436
        %1569 = vmatmul.mubr.f32.gmra.mrb[0].mxu0 %v1432
        %v1570 = vpop.f32.mrb[0].mxu0
        %v1571 = vadd.f32 0.0, %v1570
        %v1572 = vpop.f32.mrb[0].mxu0
        %1573 = vdwg.mxu0
        %1574 = vmatprep.subr.mxu0 0.0
        %1575 = vmatpush1.msra.mxu0 %v1473
        %1576 = vmatprep.subr.mxu0 0.0
        %1577 = vmatpush1.msra.mxu0 %v1474
        %1578 = vmatprep.subr.mxu0 0.0
        %1579 = vmatpush1.msra.mxu0 %v1475
        %1580 = vmatprep.subr.mxu0 0.0
        %1581 = vmatpush1.msra.mxu0 %v1476
        %1582 = vmatprep.subr.mxu0 0.0
        %1583 = vmatpush1.msra.mxu0 %v1477
        %1584 = vmatprep.subr.mxu0 0.0
        %1585 = vmatpush1.msra.mxu0 %v1478
        %1586 = vmatprep.subr.mxu0 0.0
        %1587 = vmatpush1.msra.mxu0 %v1479
        %1588 = vmatprep.subr.mxu0 0.0
        %1589 = vmatpush1.msra.mxu0 %v1480
        %1590 = vmatprep.subr.mxu0 0.0
        %1591 = vmatpush1.msra.mxu0 %v1481
        %1592 = vmatprep.subr.mxu0 0.0
        %1593 = vmatpush1.msra.mxu0 %v1482
        %1594 = vmatprep.subr.mxu0 0.0
        %1595 = vmatpush1.msra.mxu0 %v1483
        %1596 = vmatprep.subr.mxu0 0.0
        %1597 = vmatpush1.msra.mxu0 %v1484
        %1598 = vmatprep.subr.mxu0 0.0
        %1599 = vmatpush1.msra.mxu0 %v1485
        %1600 = vmatprep.subr.mxu0 0.0
        %1601 = vmatpush1.msra.mxu0 %v1486
        %1602 = vmatprep.subr.mxu0 0.0
        %1603 = vmatpush1.msra.mxu0 %v1487
        %1604 = vmatprep.subr.mxu0 0.0
        %1605 = vmatpush1.msra.mxu0 %v1488
        %1606 = vmatprep.subr.mxu0 0.0
        %1607 = vmatpush1.msra.mxu0 0.0
        %1608 = vmatprep.subr.mxu0 0.0
        %1609 = vmatpush1.msra.mxu0 0.0
        %1610 = vmatprep.subr.mxu0 0.0
        %1611 = vmatpush1.msra.mxu0 0.0
        %1612 = vmatprep.subr.mxu0 0.0
        %1613 = vmatpush1.msra.mxu0 0.0
        %1614 = vmatprep.subr.mxu0 0.0
        %1615 = vmatpush1.msra.mxu0 0.0
        %1616 = vmatprep.subr.mxu0 0.0
        %1617 = vmatpush1.msra.mxu0 0.0
        %1618 = vmatprep.subr.mxu0 0.0
        %1619 = vmatpush1.msra.mxu0 0.0
        %1620 = vmatprep.subr.mxu0 0.0
        %1621 = vmatpush1.msra.mxu0 0.0
        %1622 = vmatprep.subr.mxu0 0.0
        %1623 = vmatpush1.msra.mxu0 0.0
        %1624 = vmatprep.subr.mxu0 0.0
        %1625 = vmatpush1.msra.mxu0 0.0
        %1626 = vmatprep.subr.mxu0 0.0
        %1627 = vmatpush1.msra.mxu0 0.0
        %1628 = vmatprep.subr.mxu0 0.0
        %1629 = vmatpush1.msra.mxu0 0.0
        %1630 = vmatprep.subr.mxu0 0.0
        %1631 = vmatpush1.msra.mxu0 0.0
        %1632 = vmatprep.subr.mxu0 0.0
        %1633 = vmatpush1.msra.mxu0 0.0
        %1634 = vmatprep.subr.mxu0 0.0
        %1635 = vmatpush1.msra.mxu0 0.0
        %1636 = vmatprep.subr.mxu0 0.0
        %1637 = vmatpush1.msra.mxu0 0.0
        %1638 = vmatprep.mubr.f32.mxu0 0.0
        %1639 = vmatmul.mubr.f32.gmra.mrb[0].mxu0 %v1437
        %v1640 = vpop.f32.mrb[0].mxu0
        %v1641 = vadd.f32 %v1556, %v1640
        %v1642 = vpop.f32.mrb[0].mxu0
        %1643 = vmatprep.mubr.f32.mxu0 0.0
        %1644 = vmatmul.mubr.f32.gmra.mrb[0].mxu0 %v1438
        %v1645 = vpop.f32.mrb[0].mxu0
        %v1646 = vadd.f32 %v1561, %v1645
        %v1647 = vpop.f32.mrb[0].mxu0
        %1648 = vmatprep.mubr.f32.mxu0 0.0
        %1649 = vmatmul.mubr.f32.gmra.mrb[0].mxu0 %v1439
        %v1650 = vpop.f32.mrb[0].mxu0
        %v1651 = vadd.f32 %v1566, %v1650
        %v1652 = vpop.f32.mrb[0].mxu0
        %1653 = vmatprep.mubr.f32.mxu0 0.0
        %1654 = vmatmul.mubr.f32.gmra.mrb[0].mxu0 %v1440
        %v1655 = vpop.f32.mrb[0].mxu0
        %v1656 = vadd.f32 %v1571, %v1655
        %v1657 = vpop.f32.mrb[0].mxu0
        %1658 = vdwg.mxu0
        %1659 = vmatprep.subr.mxu0 0.0
        %1660 = vmatpush1.msra.mxu0 %v1380
        %1661 = vmatprep.subr.mxu0 0.0
        %1662 = vmatpush1.msra.mxu0 %v1381
        %1663 = vmatprep.subr.mxu0 0.0
        %1664 = vmatpush1.msra.mxu0 %v1382
        %1665 = vmatprep.subr.mxu0 0.0
        %1666 = vmatpush1.msra.mxu0 %v1383
        %1667 = vmatprep.subr.mxu0 0.0
        %1668 = vmatpush1.msra.mxu0 %v1384
        %1669 = vmatprep.subr.mxu0 0.0
        %1670 = vmatpush1.msra.mxu0 %v1385
        %1671 = vmatprep.subr.mxu0 0.0
        %1672 = vmatpush1.msra.mxu0 %v1386
        %1673 = vmatprep.subr.mxu0 0.0
        %1674 = vmatpush1.msra.mxu0 %v1387
        %1675 = vmatprep.subr.mxu0 0.0
        %1676 = vmatpush1.msra.mxu0 %v1388
        %1677 = vmatprep.subr.mxu0 0.0
        %1678 = vmatpush1.msra.mxu0 %v1389
        %1679 = vmatprep.subr.mxu0 0.0
        %1680 = vmatpush1.msra.mxu0 %v1390
        %1681 = vmatprep.subr.mxu0 0.0
        %1682 = vmatpush1.msra.mxu0 %v1391
        %1683 = vmatprep.subr.mxu0 0.0
        %1684 = vmatpush1.msra.mxu0 %v1392
        %1685 = vmatprep.subr.mxu0 0.0
        %1686 = vmatpush1.msra.mxu0 %v1393
        %1687 = vmatprep.subr.mxu0 0.0
        %1688 = vmatpush1.msra.mxu0 %v1394
        %1689 = vmatprep.subr.mxu0 0.0
        %1690 = vmatpush1.msra.mxu0 %v1395
        %1691 = vmatprep.subr.mxu0 0.0
        %1692 = vmatpush1.msra.mxu0 %v1396
        %1693 = vmatprep.subr.mxu0 0.0
        %1694 = vmatpush1.msra.mxu0 %v1397
        %1695 = vmatprep.subr.mxu0 0.0
        %1696 = vmatpush1.msra.mxu0 %v1398
        %1697 = vmatprep.subr.mxu0 0.0
        %1698 = vmatpush1.msra.mxu0 %v1399
        %1699 = vmatprep.subr.mxu0 0.0
        %1700 = vmatpush1.msra.mxu0 %v1400
        %1701 = vmatprep.subr.mxu0 0.0
        %1702 = vmatpush1.msra.mxu0 %v1401
        %1703 = vmatprep.subr.mxu0 0.0
        %1704 = vmatpush1.msra.mxu0 %v1402
        %1705 = vmatprep.subr.mxu0 0.0
        %1706 = vmatpush1.msra.mxu0 %v1403
        %1707 = vmatprep.subr.mxu0 0.0
        %1708 = vmatpush1.msra.mxu0 %v1404
        %1709 = vmatprep.subr.mxu0 0.0
        %1710 = vmatpush1.msra.mxu0 %v1405
        %1711 = vmatprep.subr.mxu0 0.0
        %1712 = vmatpush1.msra.mxu0 %v1406
        %1713 = vmatprep.subr.mxu0 0.0
        %1714 = vmatpush1.msra.mxu0 %v1407
        %1715 = vmatprep.subr.mxu0 0.0
        %1716 = vmatpush1.msra.mxu0 %v1408
        %1717 = vmatprep.subr.mxu0 0.0
        %1718 = vmatpush1.msra.mxu0 %v1409
        %1719 = vmatprep.subr.mxu0 0.0
        %1720 = vmatpush1.msra.mxu0 %v1410
        %1721 = vmatprep.subr.mxu0 0.0
        %1722 = vmatpush1.msra.mxu0 %v1411
        %1723 = vmatprep.mubr.f32.mxu0 %v1372
        %1724 = vmatmul.mubr.f32.gmra.mrb[0].mxu0 %v1368
        %v1725 = vpop.f32.mrb[0].mxu0
        %v1726 = vadd.f32 %v1641, %v1725
        %v1727 = vpop.f32.mrb[0].mxu0
        %1728 = vmatprep.mubr.f32.mxu0 %v1373
        %1729 = vmatmul.mubr.f32.gmra.mrb[0].mxu0 %v1369
        %v1730 = vpop.f32.mrb[0].mxu0
        %v1731 = vadd.f32 %v1646, %v1730
        %v1732 = vpop.f32.mrb[0].mxu0
        %1733 = vmatprep.mubr.f32.mxu0 %v1374
        %1734 = vmatmul.mubr.f32.gmra.mrb[0].mxu0 %v1370
        %v1735 = vpop.f32.mrb[0].mxu0
        %v1736 = vadd.f32 %v1651, %v1735
        %v1737 = vpop.f32.mrb[0].mxu0
        %1738 = vmatprep.mubr.f32.mxu0 %v1375
        %1739 = vmatmul.mubr.f32.gmra.mrb[0].mxu0 %v1371
        %v1740 = vpop.f32.mrb[0].mxu0
        %v1741 = vadd.f32 %v1656, %v1740
        %v1742 = vpop.f32.mrb[0].mxu0
        %1743 = vdwg.mxu0
        %1744 = vmatprep.subr.mxu0 0.0
        %1745 = vmatpush1.msra.mxu0 %v1412
        %1746 = vmatprep.subr.mxu0 0.0
        %1747 = vmatpush1.msra.mxu0 %v1413
        %1748 = vmatprep.subr.mxu0 0.0
        %1749 = vmatpush1.msra.mxu0 %v1414
        %1750 = vmatprep.subr.mxu0 0.0
        %1751 = vmatpush1.msra.mxu0 %v1415
        %1752 = vmatprep.subr.mxu0 0.0
        %1753 = vmatpush1.msra.mxu0 %v1416
        %1754 = vmatprep.subr.mxu0 0.0
        %1755 = vmatpush1.msra.mxu0 %v1417
        %1756 = vmatprep.subr.mxu0 0.0
        %1757 = vmatpush1.msra.mxu0 %v1418
        %1758 = vmatprep.subr.mxu0 0.0
        %1759 = vmatpush1.msra.mxu0 %v1419
        %1760 = vmatprep.subr.mxu0 0.0
        %1761 = vmatpush1.msra.mxu0 %v1420
        %1762 = vmatprep.subr.mxu0 0.0
        %1763 = vmatpush1.msra.mxu0 %v1421
        %1764 = vmatprep.subr.mxu0 0.0
        %1765 = vmatpush1.msra.mxu0 %v1422
        %1766 = vmatprep.subr.mxu0 0.0
        %1767 = vmatpush1.msra.mxu0 %v1423
        %1768 = vmatprep.subr.mxu0 0.0
        %1769 = vmatpush1.msra.mxu0 %v1424
        %1770 = vmatprep.subr.mxu0 0.0
        %1771 = vmatpush1.msra.mxu0 %v1425
        %1772 = vmatprep.subr.mxu0 0.0
        %1773 = vmatpush1.msra.mxu0 %v1426
        %1774 = vmatprep.subr.mxu0 0.0
        %1775 = vmatpush1.msra.mxu0 %v1427
        %1776 = vmatprep.subr.mxu0 0.0
        %1777 = vmatpush1.msra.mxu0 0.0
        %1778 = vmatprep.subr.mxu0 0.0
        %1779 = vmatpush1.msra.mxu0 0.0
        %1780 = vmatprep.subr.mxu0 0.0
        %1781 = vmatpush1.msra.mxu0 0.0
        %1782 = vmatprep.subr.mxu0 0.0
        %1783 = vmatpush1.msra.mxu0 0.0
        %1784 = vmatprep.subr.mxu0 0.0
        %1785 = vmatpush1.msra.mxu0 0.0
        %1786 = vmatprep.subr.mxu0 0.0
        %1787 = vmatpush1.msra.mxu0 0.0
        %1788 = vmatprep.subr.mxu0 0.0
        %1789 = vmatpush1.msra.mxu0 0.0
        %1790 = vmatprep.subr.mxu0 0.0
        %1791 = vmatpush1.msra.mxu0 0.0
        %1792 = vmatprep.subr.mxu0 0.0
        %1793 = vmatpush1.msra.mxu0 0.0
        %1794 = vmatprep.subr.mxu0 0.0
        %1795 = vmatpush1.msra.mxu0 0.0
        %1796 = vmatprep.subr.mxu0 0.0
        %1797 = vmatpush1.msra.mxu0 0.0
        %1798 = vmatprep.subr.mxu0 0.0
        %1799 = vmatpush1.msra.mxu0 0.0
        %1800 = vmatprep.subr.mxu0 0.0
        %1801 = vmatpush1.msra.mxu0 0.0
        %1802 = vmatprep.subr.mxu0 0.0
        %1803 = vmatpush1.msra.mxu0 0.0
        %1804 = vmatprep.subr.mxu0 0.0
        %1805 = vmatpush1.msra.mxu0 0.0
        %1806 = vmatprep.subr.mxu0 0.0
        %1807 = vmatpush1.msra.mxu0 0.0
        %1808 = vmatprep.mubr.f32.mxu0 0.0
        %1809 = vmatmul.mubr.f32.gmra.mrb[0].mxu0 %v1376
        %v1810 = vpop.f32.mrb[0].mxu0
        %v1811 = vadd.f32 %v1726, %v1810
        %v1812 = vpop.f32.mrb[0].mxu0
        %1813 = vmatprep.mubr.f32.mxu0 0.0
        %1814 = vmatmul.mubr.f32.gmra.mrb[0].mxu0 %v1377
        %v1815 = vpop.f32.mrb[0].mxu0
        %v1816 = vadd.f32 %v1731, %v1815
        %v1817 = vpop.f32.mrb[0].mxu0
        %1818 = vmatprep.mubr.f32.mxu0 0.0
        %1819 = vmatmul.mubr.f32.gmra.mrb[0].mxu0 %v1378
        %v1820 = vpop.f32.mrb[0].mxu0
        %v1821 = vadd.f32 %v1736, %v1820
        %v1822 = vpop.f32.mrb[0].mxu0
        %1823 = vmatprep.mubr.f32.mxu0 0.0
        %1824 = vmatmul.mubr.f32.gmra.mrb[0].mxu0 %v1379
        %v1825 = vpop.f32.mrb[0].mxu0
        %v1826 = vadd.f32 %v1741, %v1825
        %v1827 = vpop.f32.mrb[0].mxu0
        %1828 = vdwg.mxu0
        %s1829 = scalar_lea.vmem [#allocation3], 32
        %v1830 = vld [vmem:[%s1829] sm:$0xff]
        %v1831 = vld [vmem:[%s1829 + $0x10] sm:$0xff]
        %v1832 = vld [vmem:[%s1829 + $0x20] sm:$0xff]
        %v1833 = vld [vmem:[%s1829 + $0x30] sm:$0xff]
        %v1834 = vld [vmem:[%s1829 + $0x1] sm:$0xff]
        %v1835 = vld [vmem:[%s1829 + $0x11] sm:$0xff]
        %v1836 = vld [vmem:[%s1829 + $0x21] sm:$0xff]
        %v1837 = vld [vmem:[%s1829 + $0x31] sm:$0xff]
        %v1838 = vld [vmem:[%s1829 + $0x2] sm:$0xff]
        %v1839 = vld [vmem:[%s1829 + $0x12] sm:$0xff]
        %v1840 = vld [vmem:[%s1829 + $0x22] sm:$0xff]
        %v1841 = vld [vmem:[%s1829 + $0x32] sm:$0xff]
        %v1842 = vld [vmem:[#allocation10 + $0x300] sm:$0xff]
        %v1843 = vld [vmem:[#allocation10 + $0x308] sm:$0xff]
        %v1844 = vld [vmem:[#allocation10 + $0x310] sm:$0xff]
        %v1845 = vld [vmem:[#allocation10 + $0x318] sm:$0xff]
        %v1846 = vld [vmem:[#allocation10 + $0x320] sm:$0xff]
        %v1847 = vld [vmem:[#allocation10 + $0x328] sm:$0xff]
        %v1848 = vld [vmem:[#allocation10 + $0x330] sm:$0xff]
        %v1849 = vld [vmem:[#allocation10 + $0x338] sm:$0xff]
        %v1850 = vld [vmem:[#allocation10 + $0x340] sm:$0xff]
        %v1851 = vld [vmem:[#allocation10 + $0x348] sm:$0xff]
        %v1852 = vld [vmem:[#allocation10 + $0x350] sm:$0xff]
        %v1853 = vld [vmem:[#allocation10 + $0x358] sm:$0xff]
        %v1854 = vld [vmem:[#allocation10 + $0x360] sm:$0xff]
        %v1855 = vld [vmem:[#allocation10 + $0x368] sm:$0xff]
        %v1856 = vld [vmem:[#allocation10 + $0x370] sm:$0xff]
        %v1857 = vld [vmem:[#allocation10 + $0x378] sm:$0xff]
        %v1858 = vld [vmem:[#allocation10 + $0x380] sm:$0xff]
        %v1859 = vld [vmem:[#allocation10 + $0x388] sm:$0xff]
        %v1860 = vld [vmem:[#allocation10 + $0x390] sm:$0xff]
        %v1861 = vld [vmem:[#allocation10 + $0x398] sm:$0xff]
        %v1862 = vld [vmem:[#allocation10 + $0x3a0] sm:$0xff]
        %v1863 = vld [vmem:[#allocation10 + $0x3a8] sm:$0xff]
        %v1864 = vld [vmem:[#allocation10 + $0x3b0] sm:$0xff]
        %v1865 = vld [vmem:[#allocation10 + $0x3b8] sm:$0xff]
        %v1866 = vld [vmem:[#allocation10 + $0x3c0] sm:$0xff]
        %v1867 = vld [vmem:[#allocation10 + $0x3c8] sm:$0xff]
        %v1868 = vld [vmem:[#allocation10 + $0x3d0] sm:$0xff]
        %v1869 = vld [vmem:[#allocation10 + $0x3d8] sm:$0xff]
        %v1870 = vld [vmem:[#allocation10 + $0x3e0] sm:$0xff]
        %v1871 = vld [vmem:[#allocation10 + $0x3e8] sm:$0xff]
        %v1872 = vld [vmem:[#allocation10 + $0x3f0] sm:$0xff]
        %v1873 = vld [vmem:[#allocation10 + $0x3f8] sm:$0xff]
        %v1874 = vld [vmem:[#allocation10 + $0x400] sm:$0xff]
        %v1875 = vld [vmem:[#allocation10 + $0x408] sm:$0xff]
        %v1876 = vld [vmem:[#allocation10 + $0x410] sm:$0xff]
        %v1877 = vld [vmem:[#allocation10 + $0x418] sm:$0xff]
        %v1878 = vld [vmem:[#allocation10 + $0x420] sm:$0xff]
        %v1879 = vld [vmem:[#allocation10 + $0x428] sm:$0xff]
        %v1880 = vld [vmem:[#allocation10 + $0x430] sm:$0xff]
        %v1881 = vld [vmem:[#allocation10 + $0x438] sm:$0xff]
        %v1882 = vld [vmem:[#allocation10 + $0x440] sm:$0xff]
        %v1883 = vld [vmem:[#allocation10 + $0x448] sm:$0xff]
        %v1884 = vld [vmem:[#allocation10 + $0x450] sm:$0xff]
        %v1885 = vld [vmem:[#allocation10 + $0x458] sm:$0xff]
        %v1886 = vld [vmem:[#allocation10 + $0x460] sm:$0xff]
        %v1887 = vld [vmem:[#allocation10 + $0x468] sm:$0xff]
        %v1888 = vld [vmem:[#allocation10 + $0x470] sm:$0xff]
        %v1889 = vld [vmem:[#allocation10 + $0x478] sm:$0xff]
        %1890 = vmatprep.subr.mxu0 0.0
        %1891 = vmatpush1.msra.mxu0 %v1842
        %1892 = vmatprep.subr.mxu0 0.0
        %1893 = vmatpush1.msra.mxu0 %v1843
        %1894 = vmatprep.subr.mxu0 0.0
        %1895 = vmatpush1.msra.mxu0 %v1844
        %1896 = vmatprep.subr.mxu0 0.0
        %1897 = vmatpush1.msra.mxu0 %v1845
        %1898 = vmatprep.subr.mxu0 0.0
        %1899 = vmatpush1.msra.mxu0 %v1846
        %1900 = vmatprep.subr.mxu0 0.0
        %1901 = vmatpush1.msra.mxu0 %v1847
        %1902 = vmatprep.subr.mxu0 0.0
        %1903 = vmatpush1.msra.mxu0 %v1848
        %1904 = vmatprep.subr.mxu0 0.0
        %1905 = vmatpush1.msra.mxu0 %v1849
        %1906 = vmatprep.subr.mxu0 0.0
        %1907 = vmatpush1.msra.mxu0 %v1850
        %1908 = vmatprep.subr.mxu0 0.0
        %1909 = vmatpush1.msra.mxu0 %v1851
        %1910 = vmatprep.subr.mxu0 0.0
        %1911 = vmatpush1.msra.mxu0 %v1852
        %1912 = vmatprep.subr.mxu0 0.0
        %1913 = vmatpush1.msra.mxu0 %v1853
        %1914 = vmatprep.subr.mxu0 0.0
        %1915 = vmatpush1.msra.mxu0 %v1854
        %1916 = vmatprep.subr.mxu0 0.0
        %1917 = vmatpush1.msra.mxu0 %v1855
        %1918 = vmatprep.subr.mxu0 0.0
        %1919 = vmatpush1.msra.mxu0 %v1856
        %1920 = vmatprep.subr.mxu0 0.0
        %1921 = vmatpush1.msra.mxu0 %v1857
        %1922 = vmatprep.subr.mxu0 0.0
        %1923 = vmatpush1.msra.mxu0 %v1858
        %1924 = vmatprep.subr.mxu0 0.0
        %1925 = vmatpush1.msra.mxu0 %v1859
        %1926 = vmatprep.subr.mxu0 0.0
        %1927 = vmatpush1.msra.mxu0 %v1860
        %1928 = vmatprep.subr.mxu0 0.0
        %1929 = vmatpush1.msra.mxu0 %v1861
        %1930 = vmatprep.subr.mxu0 0.0
        %1931 = vmatpush1.msra.mxu0 %v1862
        %1932 = vmatprep.subr.mxu0 0.0
        %1933 = vmatpush1.msra.mxu0 %v1863
        %1934 = vmatprep.subr.mxu0 0.0
        %1935 = vmatpush1.msra.mxu0 %v1864
        %1936 = vmatprep.subr.mxu0 0.0
        %1937 = vmatpush1.msra.mxu0 %v1865
        %1938 = vmatprep.subr.mxu0 0.0
        %1939 = vmatpush1.msra.mxu0 %v1866
        %1940 = vmatprep.subr.mxu0 0.0
        %1941 = vmatpush1.msra.mxu0 %v1867
        %1942 = vmatprep.subr.mxu0 0.0
        %1943 = vmatpush1.msra.mxu0 %v1868
        %1944 = vmatprep.subr.mxu0 0.0
        %1945 = vmatpush1.msra.mxu0 %v1869
        %1946 = vmatprep.subr.mxu0 0.0
        %1947 = vmatpush1.msra.mxu0 %v1870
        %1948 = vmatprep.subr.mxu0 0.0
        %1949 = vmatpush1.msra.mxu0 %v1871
        %1950 = vmatprep.subr.mxu0 0.0
        %1951 = vmatpush1.msra.mxu0 %v1872
        %1952 = vmatprep.subr.mxu0 0.0
        %1953 = vmatpush1.msra.mxu0 %v1873
        %1954 = vmatprep.mubr.f32.mxu0 %v1834
        %1955 = vmatmul.mubr.f32.gmra.mrb[0].mxu0 %v1830
        %v1956 = vpop.f32.mrb[0].mxu0
        %v1957 = vadd.f32 0.0, %v1956
        %v1958 = vpop.f32.mrb[0].mxu0
        %1959 = vmatprep.mubr.f32.mxu0 %v1835
        %1960 = vmatmul.mubr.f32.gmra.mrb[0].mxu0 %v1831
        %v1961 = vpop.f32.mrb[0].mxu0
        %v1962 = vadd.f32 0.0, %v1961
        %v1963 = vpop.f32.mrb[0].mxu0
        %1964 = vmatprep.mubr.f32.mxu0 %v1836
        %1965 = vmatmul.mubr.f32.gmra.mrb[0].mxu0 %v1832
        %v1966 = vpop.f32.mrb[0].mxu0
        %v1967 = vadd.f32 0.0, %v1966
        %v1968 = vpop.f32.mrb[0].mxu0
        %1969 = vmatprep.mubr.f32.mxu0 %v1837
        %1970 = vmatmul.mubr.f32.gmra.mrb[0].mxu0 %v1833
        %v1971 = vpop.f32.mrb[0].mxu0
        %v1972 = vadd.f32 0.0, %v1971
        %v1973 = vpop.f32.mrb[0].mxu0
        %1974 = vdwg.mxu0
        %1975 = vmatprep.subr.mxu0 0.0
        %1976 = vmatpush1.msra.mxu0 %v1874
        %1977 = vmatprep.subr.mxu0 0.0
        %1978 = vmatpush1.msra.mxu0 %v1875
        %1979 = vmatprep.subr.mxu0 0.0
        %1980 = vmatpush1.msra.mxu0 %v1876
        %1981 = vmatprep.subr.mxu0 0.0
        %1982 = vmatpush1.msra.mxu0 %v1877
        %1983 = vmatprep.subr.mxu0 0.0
        %1984 = vmatpush1.msra.mxu0 %v1878
        %1985 = vmatprep.subr.mxu0 0.0
        %1986 = vmatpush1.msra.mxu0 %v1879
        %1987 = vmatprep.subr.mxu0 0.0
        %1988 = vmatpush1.msra.mxu0 %v1880
        %1989 = vmatprep.subr.mxu0 0.0
        %1990 = vmatpush1.msra.mxu0 %v1881
        %1991 = vmatprep.subr.mxu0 0.0
        %1992 = vmatpush1.msra.mxu0 %v1882
        %1993 = vmatprep.subr.mxu0 0.0
        %1994 = vmatpush1.msra.mxu0 %v1883
        %1995 = vmatprep.subr.mxu0 0.0
        %1996 = vmatpush1.msra.mxu0 %v1884
        %1997 = vmatprep.subr.mxu0 0.0
        %1998 = vmatpush1.msra.mxu0 %v1885
        %1999 = vmatprep.subr.mxu0 0.0
        %2000 = vmatpush1.msra.mxu0 %v1886
        %2001 = vmatprep.subr.mxu0 0.0
        %2002 = vmatpush1.msra.mxu0 %v1887
        %2003 = vmatprep.subr.mxu0 0.0
        %2004 = vmatpush1.msra.mxu0 %v1888
        %2005 = vmatprep.subr.mxu0 0.0
        %2006 = vmatpush1.msra.mxu0 %v1889
        %2007 = vmatprep.subr.mxu0 0.0
        %2008 = vmatpush1.msra.mxu0 0.0
        %2009 = vmatprep.subr.mxu0 0.0
        %2010 = vmatpush1.msra.mxu0 0.0
        %2011 = vmatprep.subr.mxu0 0.0
        %2012 = vmatpush1.msra.mxu0 0.0
        %2013 = vmatprep.subr.mxu0 0.0
        %2014 = vmatpush1.msra.mxu0 0.0
        %2015 = vmatprep.subr.mxu0 0.0
        %2016 = vmatpush1.msra.mxu0 0.0
        %2017 = vmatprep.subr.mxu0 0.0
        %2018 = vmatpush1.msra.mxu0 0.0
        %2019 = vmatprep.subr.mxu0 0.0
        %2020 = vmatpush1.msra.mxu0 0.0
        %2021 = vmatprep.subr.mxu0 0.0
        %2022 = vmatpush1.msra.mxu0 0.0
        %2023 = vmatprep.subr.mxu0 0.0
        %2024 = vmatpush1.msra.mxu0 0.0
        %2025 = vmatprep.subr.mxu0 0.0
        %2026 = vmatpush1.msra.mxu0 0.0
        %2027 = vmatprep.subr.mxu0 0.0
        %2028 = vmatpush1.msra.mxu0 0.0
        %2029 = vmatprep.subr.mxu0 0.0
        %2030 = vmatpush1.msra.mxu0 0.0
        %2031 = vmatprep.subr.mxu0 0.0
        %2032 = vmatpush1.msra.mxu0 0.0
        %2033 = vmatprep.subr.mxu0 0.0
        %2034 = vmatpush1.msra.mxu0 0.0
        %2035 = vmatprep.subr.mxu0 0.0
        %2036 = vmatpush1.msra.mxu0 0.0
        %2037 = vmatprep.subr.mxu0 0.0
        %2038 = vmatpush1.msra.mxu0 0.0
        %2039 = vmatprep.mubr.f32.mxu0 0.0
        %2040 = vmatmul.mubr.f32.gmra.mrb[0].mxu0 %v1838
        %v2041 = vpop.f32.mrb[0].mxu0
        %v2042 = vadd.f32 %v1957, %v2041
        %v2043 = vpop.f32.mrb[0].mxu0
        %2044 = vmatprep.mubr.f32.mxu0 0.0
        %2045 = vmatmul.mubr.f32.gmra.mrb[0].mxu0 %v1839
        %v2046 = vpop.f32.mrb[0].mxu0
        %v2047 = vadd.f32 %v1962, %v2046
        %v2048 = vpop.f32.mrb[0].mxu0
        %2049 = vmatprep.mubr.f32.mxu0 0.0
        %2050 = vmatmul.mubr.f32.gmra.mrb[0].mxu0 %v1840
        %v2051 = vpop.f32.mrb[0].mxu0
        %v2052 = vadd.f32 %v1967, %v2051
        %v2053 = vpop.f32.mrb[0].mxu0
        %2054 = vmatprep.mubr.f32.mxu0 0.0
        %2055 = vmatmul.mubr.f32.gmra.mrb[0].mxu0 %v1841
        %v2056 = vpop.f32.mrb[0].mxu0
        %v2057 = vadd.f32 %v1972, %v2056
        %v2058 = vpop.f32.mrb[0].mxu0
        %2059 = vdwg.mxu0
        %v2060 = vadd.f32 %v1811, %v2042
        %v2061 = vadd.f32 %v1816, %v2047
        %v2062 = vadd.f32 %v1821, %v2052
        %v2063 = vadd.f32 %v1826, %v2057
        %v2064 = vld [vmem:[%s6] sm:$0x1]
        %v2066 = vlaneseq
        %v2067 = vshrl.u32 %v2066, 7
        %v2068 = vsub.s32 0, %v2067
        %v2069 = vrot.slane %v2064, %v2068
        %v2071 = vmul.f32 %v2060, %v2069
        %v2072 = vmul.f32 %v2061, %v2069
        %v2073 = vmul.f32 %v2062, %v2069
        %v2074 = vmul.f32 %v2063, %v2069
        %v2075 = vld [vmem:[%s7] sm:$0x1]
        %v2077 = vlaneseq
        %v2078 = vshrl.u32 %v2077, 7
        %v2079 = vsub.s32 0, %v2078
        %v2080 = vrot.slane %v2075, %v2079
        %v2082 = vadd.f32 %v2071, %v2080
        %v2083 = vadd.f32 %v2072, %v2080
        %v2084 = vadd.f32 %v2073, %v2080
        %v2085 = vadd.f32 %v2074, %v2080
        %v2086 = vmax.f32 %v2082, 0.0
        %v2087 = vmax.f32 %v2083, 0.0
        %v2088 = vmax.f32 %v2084, 0.0
        %v2089 = vmax.f32 %v2085, 0.0
        %2090 = vst [vmem:[%s439] sm:$0xff] %v2086
        %2091 = vst [vmem:[%s439 + $0x8] sm:$0xff] %v2087
        %2092 = vst [vmem:[%s439 + $0x10] sm:$0xff] %v2088
        %2093 = vst [vmem:[%s439 + $0x18] sm:$0xff] %v2089
        %s2094 = sand.u32 %s233, 1
        %s2095 = scalar_lea.sflag [#allocation6], %s2094
        %s2096 = sand.u32 %s233, 1
        %s2097 = smul.addr %s2096, 32
        %s2098 = scalar_lea.vmem [#allocation12], %s2097
        // Predicated region
        $region77: #{tpu_custom_call.1} parent=51 // pred_check
          %p2099 = pneg %p243
        $region78: #{tpu_custom_call.1} parent=51 // pred_check_branch
          %2101 = sbr.rel (%p2099) target = $region80
        $region79: #{tpu_custom_call.1} parent=51 // pred_region
          %s2102 = smul.u32 4, %s34
          %s2104 = ssub.s32 512, 512
          %2105 = vsyncadd %s2095, %s2104
          %s2106 = smul.addr %s33, 8
          %s2107 = sadd.s32 %s2102, %s2106
          %s2108 = smul.addr %s2107, 128
          %s2109 = scalar_lea.hbm %s8, %s2108
          %s2110 = sshll.u32 %s2098, 4
          %s2111 = int_to_ptr.vmem [resolvable:$true] %s2110
          %2116 = dma.vmem_to_hbm [thread:$0]  %s2111, 512, %s2109, %s2095, 128, 128, 8
        $region80: #{tpu_custom_call.1} parent=51 // pred_fallthru
          _
      $region52: #{tpu_custom_call.1} parent=5 // pred_fallthru
        _
      %p2117 = scmp.le.s32.totalorder 2, %s24
      // Predicated region
      $region81: #{tpu_custom_call.1} parent=5 // pred_check
        %p2118 = pneg %p2117
      $region82: #{tpu_custom_call.1} parent=5 // pred_check_branch
        %2120 = sbr.rel (%p2118) target = $region84
      $region83: #{tpu_custom_call.1} parent=5 // pred_region
        %s2121 = ssub.s32 %s24, 2
        // Predicated region
        $region85: #{tpu_custom_call.1} parent=83 // pred_check
          %p2122 = pneg %p249
        $region86: #{tpu_custom_call.1} parent=83 // pred_check_branch
          %2124 = sbr.rel (%p2122) target = $region88
        $region87: #{tpu_custom_call.1} parent=83 // pred_region
          %s2125 = sand.u32 %s234, 1
          %s2126 = scalar_lea.sflag [#allocation6], %s2125
          %s2127 = sand.u32 %s234, 1
          %s2128 = smul.addr %s2127, 32
          %s2129 = scalar_lea.vmem [#allocation12], %s2128
          %2130 = dma.done %s2126, 512
        $region88: #{tpu_custom_call.1} parent=83 // pred_fallthru
          _
      $region84: #{tpu_custom_call.1} parent=5 // pred_fallthru
        _
    $region6: #{tpu_custom_call.1} parent=1 // loop_footer
      %s28 = sadd.s32 1, %s24
    $region7: #{tpu_custom_call.1} parent=1 // loop_footer_branch
      %23 = sbr.rel target = $region3
    $region8: #{tpu_custom_call.1} parent=1 // loop_exit
      _
    %2131 = vsyncpa [#allocation5], 1
    %s2132 = scalar_lea.sflag [#allocation5], 1
    %2133 = vsyncpa %s2132, 1
    %2134 = vsyncpa [#allocation8], 1
    %s2135 = scalar_lea.sflag [#allocation8], 1
    %2136 = vsyncpa %s2135, 1
    %2137 = vsyncpa [#allocation11], 1
    %2138 = vsyncpa [#allocation6], 1
    %s2139 = scalar_lea.sflag [#allocation6], 1
    %2140 = vsyncpa %s2139, 1

// kernel: tpu_custom_call.1
$region0: #{tpu_custom_call.1}
  #allocation0 [shape = 'u32[]', space=smem, size = 0x4, offset = 0x4, fixed_abs, tag = 'smem constant byte address 0x4 - core index']
  #allocation1 [shape = 'u32[144,128]{1,0:T(1,128)}', space=vmem, size = 0x12000, scoped, tag = 'internal scratch']
  #allocation2 [shape = 'f32[8,10,128]{2,1,0:T(8,128)}', space=vmem, size = 0x10000, scoped, tag = 'scratch operand']
  #allocation3 [shape = 'f32[6,10,128]{2,1,0:T(8,128)}', space=vmem, size = 0xc000, scoped, tag = 'scratch operand']
  #allocation13 [shape = 's32[]', space=sflag, size = 0x4, offset = 0, fixed_abs, tag = 'sflag constant byte address 0x0 - dummy sync flag']
  %s0 = inlined_call_operand.hbm [shape: f32[2,4,8,8,128], index: 0, kind: input, shape index: {}]
  %s1 = inlined_call_operand.hbm [shape: f32[2,2,4,4,8,128], index: 1, kind: input, shape index: {}]
  %s2 = inlined_call_operand.hbm [shape: f32[1152,128], index: 2, kind: input, shape index: {}]
  %s3 = inlined_call_operand.vmem [shape: f32[1,128], index: 3, kind: input, shape index: {}]
  %s4 = inlined_call_operand.vmem [shape: f32[1,128], index: 4, kind: input, shape index: {}]
  %s5 = inlined_call_operand.hbm [shape: f32[1152,128], index: 5, kind: input, shape index: {}]
  %s6 = inlined_call_operand.vmem [shape: f32[1,128], index: 6, kind: input, shape index: {}]
  %s7 = inlined_call_operand.vmem [shape: f32[1,128], index: 7, kind: input, shape index: {}]
  %s8 = inlined_call_operand.hbm [shape: f32[2,8,8,128], index: 8, kind: output, shape index: {}]
  %s9 = sld [smem:[#allocation0]]
  $region89: #{tpu_custom_call.1} parent=0
    _
  %s11 = ssub.s32 1, %s9
  %s12 = scalar_select 0, %s11, %s9
  $region1: #{tpu_custom_call.1} parent=0
    #allocation4 [shape = 'u8[131072]{0}', space=vmem, size = 0x20000, scoped, tag = 'input window, operand 0']
    #allocation5 [shape = 's32[2]{0}', space=sflag, size = 0x8, scoped, tag = 'scoped memory for tpu_custom_call.1']
    #allocation6 [shape = 's32[2]{0}', space=sflag, size = 0x8, scoped, tag = 'scoped memory for tpu_custom_call.1']
    #allocation7 [shape = 'u8[131072]{0}', space=vmem, size = 0x20000, scoped, tag = 'input window, operand 1']
    #allocation8 [shape = 's32[2]{0}', space=sflag, size = 0x8, scoped, tag = 'scoped memory for tpu_custom_call.1']
    #allocation9 [shape = 'u8[589824]{0}', space=vmem, size = 0x90000, scoped, tag = 'input window, operand 2, single buffered']
    #allocation10 [shape = 'u8[589824]{0}', space=vmem, size = 0x90000, scoped, tag = 'input window, operand 5, single buffered']
    #allocation11 [shape = 's32[1]{0}', space=sflag, size = 0x4, scoped, tag = 'scoped memory for tpu_custom_call.1']
    #allocation12 [shape = 'u8[32768]{0}', space=vmem, size = 0x8000, scoped, tag = 'output window, operand 0']
    %13 = vsyncpa [#allocation5], 0
    %s14 = scalar_lea.sflag [#allocation5], 1
    %15 = vsyncpa %s14, 0
    %16 = vsyncpa [#allocation8], 0
    %s17 = scalar_lea.sflag [#allocation8], 1
    %18 = vsyncpa %s17, 0
    %19 = vsyncpa [#allocation11], 0
    %20 = vsyncpa [#allocation6], 0
    %s21 = scalar_lea.sflag [#allocation6], 1
    %22 = vsyncpa %s21, 0
    loop: start=0, step=1, limit=6
    $region2: #{tpu_custom_call.1} parent=1 // loop_pre_header
      _
    $region3: #{tpu_custom_call.1} parent=1 // loop_header
      %s24 = sphi 0, %s28
      %p25 = scmp.ge.s32.totalorder %s24, 6
      %s31 = sphi 0, %s43
      %s32 = sphi 0, %s39
      %s33 = sphi 0, %s31
      %s34 = sphi 0, %s32
      %s35 = sphi 0, %s33
      %s36 = sphi 0, %s34
      %s48 = sphi 0, %s50
      %s51 = sphi 0, %s48
      %s52 = sphi 0, %s51
      %s68 = sphi 0, %s52
      %s76 = sphi 0, %s78
      %s79 = sphi 0, %s76
      %s80 = sphi 0, %s79
      %s96 = sphi 0, %s80
      %s100 = sphi 0, %s100
      %s102 = sphi 0, %s100
      %s103 = sphi 0, %s102
      %s117 = sphi 0, %s103
      %s121 = sphi 0, %s121
      %s123 = sphi 0, %s121
      %s124 = sphi 0, %s123
      %s138 = sphi 0, %s124
      %s142 = sphi 0, %s142
      %s144 = sphi 0, %s142
      %s145 = sphi 0, %s144
      %s159 = sphi 0, %s145
      %s163 = sphi 0, %s163
      %s165 = sphi 0, %s163
      %s166 = sphi 0, %s165
      %s180 = sphi 0, %s166
      %s184 = sphi 0, %s184
      %s186 = sphi 0, %s184
      %s187 = sphi 0, %s186
      %s201 = sphi 0, %s187
      %s205 = sphi 0, %s205
      %s207 = sphi 0, %s205
      %s208 = sphi 0, %s207
      %s222 = sphi 0, %s208
      %s230 = sphi 0, %s232
      %s233 = sphi 0, %s230
      %s234 = sphi 0, %s233
      %s250 = sphi 0, %s234
    $region4: #{tpu_custom_call.1} parent=1 // loop_header_branch
      %27 = sbr.rel (%p25) target = $region8
    $region5: #{tpu_custom_call.1} parent=1 // loop_body
      %s29 = ssub.s32 %s24, 1
      %s30 = ssub.s32 %s24, 2
      %s37 = sadd.s32 1, %s32
      %p38 = scmp.ge.s32.totalorder %s37, 2
      %s39 = scalar_select %p38, 0, %s37
      %s40 = sadd.s32 1, %s31
      %s41 = scalar_select %p38, %s40, %s31
      %p42 = scmp.ge.s32.totalorder %s41, 2
      %s43 = scalar_select %p42, 0, %s41
      %s44 = ssub.s32 %s31, %s43
      %s45 = ssub.s32 %s32, %s39
      %s46 = sor.u32 %s44, %s45
      %p47 = scmp.eq.s32.totalorder %s46, 0
      %s49 = sadd.s32 %s48, 1
      %s50 = scalar_select %p47, %s48, %s49
      %p53 = pneg %p47
      %p54 = scmp.eq.s32.totalorder %s24, 3
      %p55 = por %p53, %p54
      %p56 = scmp.ne.s32.totalorder %s48, %s51
      %p57 = scmp.eq.s32.totalorder %s24, 0
      %p58 = por %p56, %p57
      %p59 = scmp.ne.s32.totalorder %s48, %s51
      %p60 = scmp.eq.s32.totalorder %s29, 3
      %p61 = por %p59, %p60
      %p62 = scmp.ne.s32.totalorder %s51, %s52
      %p63 = scmp.eq.s32.totalorder %s29, 0
      %p64 = por %p62, %p63
      %p65 = scmp.ne.s32.totalorder %s51, %s52
      %p66 = scmp.eq.s32.totalorder %s30, 3
      %p67 = por %p65, %p66
      %p69 = scmp.ne.s32.totalorder %s52, %s68
      %p70 = scmp.eq.s32.totalorder %s30, 0
      %p71 = por %p69, %p70
      %s72 = ssub.s32 %s31, %s43
      %s73 = ssub.s32 %s32, %s39
      %s74 = sor.u32 %s72, %s73
      %p75 = scmp.eq.s32.totalorder %s74, 0
      %s77 = sadd.s32 %s76, 1
      %s78 = scalar_select %p75, %s76, %s77
      %p81 = pneg %p75
      %p82 = scmp.eq.s32.totalorder %s24, 3
      %p83 = por %p81, %p82
      %p84 = scmp.ne.s32.totalorder %s76, %s79
      %p85 = scmp.eq.s32.totalorder %s24, 0
      %p86 = por %p84, %p85
      %p87 = scmp.ne.s32.totalorder %s76, %s79
      %p88 = scmp.eq.s32.totalorder %s29, 3
      %p89 = por %p87, %p88
      %p90 = scmp.ne.s32.totalorder %s79, %s80
      %p91 = scmp.eq.s32.totalorder %s29, 0
      %p92 = por %p90, %p91
      %p93 = scmp.ne.s32.totalorder %s79, %s80
      %p94 = scmp.eq.s32.totalorder %s30, 3
      %p95 = por %p93, %p94
      %p97 = scmp.ne.s32.totalorder %s80, %s96
      %p98 = scmp.eq.s32.totalorder %s30, 0
      %p99 = por %p97, %p98
      %s101 = sadd.s32 %s100, 1
      %p104 = scmp.eq.s32.totalorder %s24, 3
      %p105 = scmp.ne.s32.totalorder %s100, %s102
      %p106 = scmp.eq.s32.totalorder %s24, 0
      %p107 = por %p105, %p106
      %p108 = scmp.ne.s32.totalorder %s100, %s102
      %p109 = scmp.eq.s32.totalorder %s29, 3
      %p110 = por %p108, %p109
      %p111 = scmp.ne.s32.totalorder %s102, %s103
      %p112 = scmp.eq.s32.totalorder %s29, 0
      %p113 = por %p111, %p112
      %p114 = scmp.ne.s32.totalorder %s102, %s103
      %p115 = scmp.eq.s32.totalorder %s30, 3
      %p116 = por %p114, %p115
      %p118 = scmp.ne.s32.totalorder %s103, %s117
      %p119 = scmp.eq.s32.totalorder %s30, 0
      %p120 = por %p118, %p119
      %s122 = sadd.s32 %s121, 1
      %p125 = scmp.eq.s32.totalorder %s24, 3
      %p126 = scmp.ne.s32.totalorder %s121, %s123
      %p127 = scmp.eq.s32.totalorder %s24, 0
      %p128 = por %p126, %p127
      %p129 = scmp.ne.s32.totalorder %s121, %s123
      %p130 = scmp.eq.s32.totalorder %s29, 3
      %p131 = por %p129, %p130
      %p132 = scmp.ne.s32.totalorder %s123, %s124
      %p133 = scmp.eq.s32.totalorder %s29, 0
      %p134 = por %p132, %p133
      %p135 = scmp.ne.s32.totalorder %s123, %s124
      %p136 = scmp.eq.s32.totalorder %s30, 3
      %p137 = por %p135, %p136
      %p139 = scmp.ne.s32.totalorder %s124, %s138
      %p140 = scmp.eq.s32.totalorder %s30, 0
      %p141 = por %p139, %p140
      %s143 = sadd.s32 %s142, 1
      %p146 = scmp.eq.s32.totalorder %s24, 3
      %p147 = scmp.ne.s32.totalorder %s142, %s144
      %p148 = scmp.eq.s32.totalorder %s24, 0
      %p149 = por %p147, %p148
      %p150 = scmp.ne.s32.totalorder %s142, %s144
      %p151 = scmp.eq.s32.totalorder %s29, 3
      %p152 = por %p150, %p151
      %p153 = scmp.ne.s32.totalorder %s144, %s145
      %p154 = scmp.eq.s32.totalorder %s29, 0
      %p155 = por %p153, %p154
      %p156 = scmp.ne.s32.totalorder %s144, %s145
      %p157 = scmp.eq.s32.totalorder %s30, 3
      %p158 = por %p156, %p157
      %p160 = scmp.ne.s32.totalorder %s145, %s159
      %p161 = scmp.eq.s32.totalorder %s30, 0
      %p162 = por %p160, %p161
      %s164 = sadd.s32 %s163, 1
      %p167 = scmp.eq.s32.totalorder %s24, 3
      %p168 = scmp.ne.s32.totalorder %s163, %s165
      %p169 = scmp.eq.s32.totalorder %s24, 0
      %p170 = por %p168, %p169
      %p171 = scmp.ne.s32.totalorder %s163, %s165
      %p172 = scmp.eq.s32.totalorder %s29, 3
      %p173 = por %p171, %p172
      %p174 = scmp.ne.s32.totalorder %s165, %s166
      %p175 = scmp.eq.s32.totalorder %s29, 0
      %p176 = por %p174, %p175
      %p177 = scmp.ne.s32.totalorder %s165, %s166
      %p178 = scmp.eq.s32.totalorder %s30, 3
      %p179 = por %p177, %p178
      %p181 = scmp.ne.s32.totalorder %s166, %s180
      %p182 = scmp.eq.s32.totalorder %s30, 0
      %p183 = por %p181, %p182
      %s185 = sadd.s32 %s184, 1
      %p188 = scmp.eq.s32.totalorder %s24, 3
      %p189 = scmp.ne.s32.totalorder %s184, %s186
      %p190 = scmp.eq.s32.totalorder %s24, 0
      %p191 = por %p189, %p190
      %p192 = scmp.ne.s32.totalorder %s184, %s186
      %p193 = scmp.eq.s32.totalorder %s29, 3
      %p194 = por %p192, %p193
      %p195 = scmp.ne.s32.totalorder %s186, %s187
      %p196 = scmp.eq.s32.totalorder %s29, 0
      %p197 = por %p195, %p196
      %p198 = scmp.ne.s32.totalorder %s186, %s187
      %p199 = scmp.eq.s32.totalorder %s30, 3
      %p200 = por %p198, %p199
      %p202 = scmp.ne.s32.totalorder %s187, %s201
      %p203 = scmp.eq.s32.totalorder %s30, 0
      %p204 = por %p202, %p203
      %s206 = sadd.s32 %s205, 1
      %p209 = scmp.eq.s32.totalorder %s24, 3
      %p210 = scmp.ne.s32.totalorder %s205, %s207
      %p211 = scmp.eq.s32.totalorder %s24, 0
      %p212 = por %p210, %p211
      %p213 = scmp.ne.s32.totalorder %s205, %s207
      %p214 = scmp.eq.s32.totalorder %s29, 3
      %p215 = por %p213, %p214
      %p216 = scmp.ne.s32.totalorder %s207, %s208
      %p217 = scmp.eq.s32.totalorder %s29, 0
      %p218 = por %p216, %p217
      %p219 = scmp.ne.s32.totalorder %s207, %s208
      %p220 = scmp.eq.s32.totalorder %s30, 3
      %p221 = por %p219, %p220
      %p223 = scmp.ne.s32.totalorder %s208, %s222
      %p224 = scmp.eq.s32.totalorder %s30, 0
      %p225 = por %p223, %p224
      %s226 = ssub.s32 %s31, %s43
      %s227 = ssub.s32 %s32, %s39
      %s228 = sor.u32 %s226, %s227
      %p229 = scmp.eq.s32.totalorder %s228, 0
      %s231 = sadd.s32 %s230, 1
      %s232 = scalar_select %p229, %s230, %s231
      %p235 = pneg %p229
      %p236 = scmp.eq.s32.totalorder %s24, 3
      %p237 = por %p235, %p236
      %p238 = scmp.ne.s32.totalorder %s230, %s233
      %p239 = scmp.eq.s32.totalorder %s24, 0
      %p240 = por %p238, %p239
      %p241 = scmp.ne.s32.totalorder %s230, %s233
      %p242 = scmp.eq.s32.totalorder %s29, 3
      %p243 = por %p241, %p242
      %p244 = scmp.ne.s32.totalorder %s233, %s234
      %p245 = scmp.eq.s32.totalorder %s29, 0
      %p246 = por %p244, %p245
      %p247 = scmp.ne.s32.totalorder %s233, %s234
      %p248 = scmp.eq.s32.totalorder %s30, 3
      %p249 = por %p247, %p248
      %p251 = scmp.ne.s32.totalorder %s234, %s250
      %p252 = scmp.eq.s32.totalorder %s30, 0
      %p253 = por %p251, %p252
      %p254 = scmp.le.s32.totalorder 1, %s24
      %p255 = scmp.lt.s32.totalorder %s24, 5
      %p256 = pnand %p254, %p255
      %p257 = pneg %p256
      // Predicated region
      $region9: #{tpu_custom_call.1} parent=5 // pred_check
        _
      $region10: #{tpu_custom_call.1} parent=5 // pred_check_branch
        %259 = sbr.rel (%p256) target = $region12
      $region11: #{tpu_custom_call.1} parent=5 // pred_region
        %s260 = ssub.s32 %s24, 1
        // Predicated region
        $region13: #{tpu_custom_call.1} parent=11 // pred_check
          %p261 = pneg %p113
        $region14: #{tpu_custom_call.1} parent=11 // pred_check_branch
          %263 = sbr.rel (%p261) target = $region16
        $region15: #{tpu_custom_call.1} parent=11 // pred_region
          %s265 = ssub.s32 18432, 18432
          %266 = vsyncadd [#allocation8], %s265
          %s267 = sshll.u32 [#allocation9], 4
          %s268 = int_to_ptr.vmem [resolvable:$true] %s267
          %273 = dma.hbm_to_vmem [thread:$0]  %s2, 18432, %s268, [#allocation8], 128, 128, 8
        $region16: #{tpu_custom_call.1} parent=11 // pred_fallthru
          _
        // Predicated region
        $region17: #{tpu_custom_call.1} parent=11 // pred_check
          %p274 = pneg %p134
        $region18: #{tpu_custom_call.1} parent=11 // pred_check_branch
          %276 = sbr.rel (%p274) target = $region20
        $region19: #{tpu_custom_call.1} parent=11 // pred_region
          _
        $region20: #{tpu_custom_call.1} parent=11 // pred_fallthru
          _
        // Predicated region
        $region21: #{tpu_custom_call.1} parent=11 // pred_check
          %p277 = pneg %p155
        $region22: #{tpu_custom_call.1} parent=11 // pred_check_branch
          %279 = sbr.rel (%p277) target = $region24
        $region23: #{tpu_custom_call.1} parent=11 // pred_region
          _
        $region24: #{tpu_custom_call.1} parent=11 // pred_fallthru
          _
        // Predicated region
        $region25: #{tpu_custom_call.1} parent=11 // pred_check
          %p280 = pneg %p176
        $region26: #{tpu_custom_call.1} parent=11 // pred_check_branch
          %282 = sbr.rel (%p280) target = $region28
        $region27: #{tpu_custom_call.1} parent=11 // pred_region
          %s284 = ssub.s32 18432, 18432
          %285 = vsyncadd [#allocation11], %s284
          %s286 = sshll.u32 [#allocation10], 4
          %s287 = int_to_ptr.vmem [resolvable:$true] %s286
          %292 = dma.hbm_to_vmem [thread:$0]  %s5, 18432, %s287, [#allocation11], 128, 128, 8
        $region28: #{tpu_custom_call.1} parent=11 // pred_fallthru
          _
        // Predicated region
        $region29: #{tpu_custom_call.1} parent=11 // pred_check
          %p293 = pneg %p197
        $region30: #{tpu_custom_call.1} parent=11 // pred_check_branch
          %295 = sbr.rel (%p293) target = $region32
        $region31: #{tpu_custom_call.1} parent=11 // pred_region
          _
        $region32: #{tpu_custom_call.1} parent=11 // pred_fallthru
          _
        // Predicated region
        $region33: #{tpu_custom_call.1} parent=11 // pred_check
          %p296 = pneg %p218
        $region34: #{tpu_custom_call.1} parent=11 // pred_check_branch
          %298 = sbr.rel (%p296) target = $region36
        $region35: #{tpu_custom_call.1} parent=11 // pred_region
          _
        $region36: #{tpu_custom_call.1} parent=11 // pred_fallthru
          _
      $region12: #{tpu_custom_call.1} parent=5 // pred_fallthru
        _
      %p299 = scmp.lt.s32.totalorder %s24, 4
      // Predicated region
      $region37: #{tpu_custom_call.1} parent=5 // pred_check
        %p300 = pneg %p299
      $region38: #{tpu_custom_call.1} parent=5 // pred_check_branch
        %302 = sbr.rel (%p300) target = $region40
      $region39: #{tpu_custom_call.1} parent=5 // pred_region
        // Predicated region
        $region41: #{tpu_custom_call.1} parent=39 // pred_check
          %p303 = pneg %p58
        $region42: #{tpu_custom_call.1} parent=39 // pred_check_branch
          %305 = sbr.rel (%p303) target = $region44
        $region43: #{tpu_custom_call.1} parent=39 // pred_region
          #allocation14 [shape = 'u32[6]{0}', space=smem, size = 0x18, scoped, tag = 'DMA stride descriptor']
          %s306 = sand.u32 %s48, 1
          %s307 = scalar_lea.sflag [#allocation5], %s306
          %s308 = sand.u32 %s48, 1
          %s309 = smul.addr %s308, 128
          %s310 = scalar_lea.vmem [#allocation4], %s309
          %s311 = smul.u32 4, %s32
          %s313 = ssub.s32 2048, 2048
          %314 = vsyncadd %s307, %s313
          %s315 = smul.addr %s31, 32
          %s316 = sadd.s32 %s311, %s315
          %s317 = smul.addr %s316, 128
          %s318 = scalar_lea.hbm %s0, %s317
          %s320 = sshll.u32 1, 14
          %s321 = sxor.u32 4294967295, %s320
          %s323 = sld [smem:[#allocation0]]
          %s324 = sadd.s32 2, %s323
          %s326 = sshll.u32 7, 26
          %s327 = sxor.u32 4294967295, %s326
          %s328 = sand.u32 0, %s327
          %s329 = sshll.u32 %s324, 26
          %s330 = sor.u32 %s328, %s329
          %s331 = sshll.u32 %s310, 4
          %s332 = int_to_ptr.vmem [resolvable:$true] %s331
          %338 = sst [smem:[#allocation14]] 1024
          %s339 = scalar_lea.smem [#allocation14], 1
          %340 = sst [smem:[%s339]] 512
          %s341 = scalar_lea.smem [#allocation14], 2
          %342 = sst [smem:[%s341]] 4
          %s343 = scalar_lea.smem [#allocation14], 3
          %344 = sst [smem:[%s343]] 128
          %s345 = scalar_lea.smem [#allocation14], 4
          %346 = sst [smem:[%s345]] 128
          %s347 = scalar_lea.smem [#allocation14], 5
          %348 = sst [smem:[%s347]] 8
          %350 = dma.general %s318, 2048, %s332, %s307, [#allocation13], [#allocation14], %s330, 0
        $region44: #{tpu_custom_call.1} parent=39 // pred_fallthru
          _
        // Predicated region
        $region45: #{tpu_custom_call.1} parent=39 // pred_check
          %p351 = pneg %p86
        $region46: #{tpu_custom_call.1} parent=39 // pred_check_branch
          %353 = sbr.rel (%p351) target = $region48
        $region47: #{tpu_custom_call.1} parent=39 // pred_region
          %s354 = sand.u32 %s24, 1
          %s355 = scalar_lea.sflag [#allocation8], %s354
          %s356 = sand.u32 %s76, 1
          %s357 = smul.addr %s356, 128
          %s358 = scalar_lea.vmem [#allocation7], %s357
          %s360 = ssub.s32 2048, 2048
          %361 = vsyncadd %s355, %s360
          %s362 = smul.addr %s32, 16
          %s363 = smul.addr %s31, 32
          %s364 = sadd.s32 %s362, %s363
          %s365 = smul.addr %s364, 128
          %s366 = scalar_lea.hbm %s1, %s365
          %s367 = sshll.u32 %s358, 4
          %s368 = int_to_ptr.vmem [resolvable:$true] %s367
          %373 = dma.hbm_to_vmem [thread:$0]  %s366, 2048, %s368, %s355, 128, 128, 8
        $region48: #{tpu_custom_call.1} parent=39 // pred_fallthru
          _
      $region40: #{tpu_custom_call.1} parent=5 // pred_fallthru
        _
      %p374 = scmp.le.s32.totalorder 1, %s24
      %p375 = scmp.lt.s32.totalorder %s24, 5
      %p376 = pnand %p374, %p375
      %p377 = pneg %p376
      // Predicated region
      $region49: #{tpu_custom_call.1} parent=5 // pred_check
        _
      $region50: #{tpu_custom_call.1} parent=5 // pred_check_branch
        %379 = sbr.rel (%p376) target = $region52
      $region51: #{tpu_custom_call.1} parent=5 // pred_region
        %s380 = ssub.s32 %s24, 1
        %s381 = sand.u32 %s51, 1
        %s382 = scalar_lea.sflag [#allocation5], %s381
        %s383 = sand.u32 %s51, 1
        %s384 = smul.addr %s383, 128
        %s385 = scalar_lea.vmem [#allocation4], %s384
        // Predicated region
        $region53: #{tpu_custom_call.1} parent=51 // pred_check
          %p386 = pneg %p64
        $region54: #{tpu_custom_call.1} parent=51 // pred_check_branch
          %388 = sbr.rel (%p386) target = $region56
        $region55: #{tpu_custom_call.1} parent=51 // pred_region
          %389 = dma.done %s382, 2048
        $region56: #{tpu_custom_call.1} parent=51 // pred_fallthru
          _
        %s390 = sand.u32 %s29, 1
        %s391 = scalar_lea.sflag [#allocation8], %s390
        %s392 = sand.u32 %s79, 1
        %s393 = smul.addr %s392, 128
        %s394 = scalar_lea.vmem [#allocation7], %s393
        // Predicated region
        $region57: #{tpu_custom_call.1} parent=51 // pred_check
          %p395 = pneg %p92
        $region58: #{tpu_custom_call.1} parent=51 // pred_check_branch
          %397 = sbr.rel (%p395) target = $region60
        $region59: #{tpu_custom_call.1} parent=51 // pred_region
          %398 = dma.done %s391, 2048
        $region60: #{tpu_custom_call.1} parent=51 // pred_fallthru
          _
        // Predicated region
        $region61: #{tpu_custom_call.1} parent=51 // pred_check
          %p399 = pneg %p113
        $region62: #{tpu_custom_call.1} parent=51 // pred_check_branch
          %401 = sbr.rel (%p399) target = $region64
        $region63: #{tpu_custom_call.1} parent=51 // pred_region
          %402 = dma.done [#allocation8], 18432
        $region64: #{tpu_custom_call.1} parent=51 // pred_fallthru
          _
        // Predicated region
        $region65: #{tpu_custom_call.1} parent=51 // pred_check
          %p403 = pneg %p176
        $region66: #{tpu_custom_call.1} parent=51 // pred_check_branch
          %405 = sbr.rel (%p403) target = $region68
        $region67: #{tpu_custom_call.1} parent=51 // pred_region
          %406 = dma.done [#allocation11], 18432
        $region68: #{tpu_custom_call.1} parent=51 // pred_fallthru
          _
        %s407 = sand.u32 %s51, 1
        %s408 = scalar_lea.sflag [#allocation5], %s407
        %s409 = sand.u32 %s51, 1
        %s410 = smul.addr %s409, 128
        %s411 = scalar_lea.vmem [#allocation4], %s410
        %p412 = pneg %p64
        %p413 = pneg %p61
        %s414 = sand.u32 %s29, 1
        %s415 = scalar_lea.sflag [#allocation8], %s414
        %s416 = sand.u32 %s79, 1
        %s417 = smul.addr %s416, 128
        %s418 = scalar_lea.vmem [#allocation7], %s417
        %p419 = pneg %p92
        %p420 = pneg %p89
        %p421 = pneg %p113
        %p422 = pneg %p110
        %p423 = pneg %p134
        %p424 = pneg %p131
        %p425 = pneg %p155
        %p426 = pneg %p152
        %p427 = pneg %p176
        %p428 = pneg %p173
        %p429 = pneg %p197
        %p430 = pneg %p194
        %p431 = pneg %p218
        %p432 = pneg %p215
        %p433 = pneg %p246
        %p434 = pneg %p243
        %s435 = sand.u32 %s233, 1
        %s436 = scalar_lea.sflag [#allocation6], %s435
        %s437 = sand.u32 %s233, 1
        %s438 = smul.addr %s437, 32
        %s439 = scalar_lea.vmem [#allocation12], %s438
        %s440 = smul.u32 4, %s34
        %s441 = smul.u32 4, %s34
        %v442 = vld [vmem:[%s385] sm:$0xff]
        %v443 = vld [vmem:[%s385 + $0x8] sm:$0xff]
        %v444 = vld [vmem:[%s385 + $0x10] sm:$0xff]
        %v445 = vld [vmem:[%s385 + $0x18] sm:$0xff]
        %s446 = scalar_lea.vmem %s385, 32 [#allocation4]
        %v447 = vld [vmem:[%s446] sm:$0xff]
        %v448 = vld [vmem:[%s446 + $0x8] sm:$0xff]
        %v449 = vld [vmem:[%s446 + $0x10] sm:$0xff]
        %v450 = vld [vmem:[%s446 + $0x18] sm:$0xff]
        %v451 = vmax.f32 %v442, %v447
        %v452 = vmax.f32 %v443, %v448
        %v453 = vmax.f32 %v444, %v449
        %v454 = vmax.f32 %v445, %v450
        %s455 = scalar_lea.vmem %s385, 64 [#allocation4]
        %v456 = vld [vmem:[%s455] sm:$0xff]
        %v457 = vld [vmem:[%s455 + $0x8] sm:$0xff]
        %v458 = vld [vmem:[%s455 + $0x10] sm:$0xff]
        %v459 = vld [vmem:[%s455 + $0x18] sm:$0xff]
        %s460 = scalar_lea.vmem %s385, 96 [#allocation4]
        %v461 = vld [vmem:[%s460] sm:$0xff]
        %v462 = vld [vmem:[%s460 + $0x8] sm:$0xff]
        %v463 = vld [vmem:[%s460 + $0x10] sm:$0xff]
        %v464 = vld [vmem:[%s460 + $0x18] sm:$0xff]
        %v465 = vmax.f32 %v456, %v461
        %v466 = vmax.f32 %v457, %v462
        %v467 = vmax.f32 %v458, %v463
        %v468 = vmax.f32 %v459, %v464
        %v469 = vmax.f32 %v451, %v465
        %v470 = vmax.f32 %v452, %v466
        %v471 = vmax.f32 %v453, %v467
        %v472 = vmax.f32 %v454, %v468
        %v473 = vld [vmem:[%s394] sm:$0xff]
        %v474 = vld [vmem:[%s394 + $0x8] sm:$0xff]
        %v475 = vld [vmem:[%s394 + $0x10] sm:$0xff]
        %v476 = vld [vmem:[%s394 + $0x18] sm:$0xff]
        %s477 = scalar_lea.vmem %s394, 32 [#allocation7]
        %v478 = vld [vmem:[%s477] sm:$0xff]
        %v479 = vld [vmem:[%s477 + $0x8] sm:$0xff]
        %v480 = vld [vmem:[%s477 + $0x10] sm:$0xff]
        %v481 = vld [vmem:[%s477 + $0x18] sm:$0xff]
        %v482 = vmax.f32 %v473, %v478
        %v483 = vmax.f32 %v474, %v479
        %v484 = vmax.f32 %v475, %v480
        %v485 = vmax.f32 %v476, %v481
        %s486 = scalar_lea.vmem %s394, 64 [#allocation7]
        %v487 = vld [vmem:[%s486] sm:$0xff]
        %v488 = vld [vmem:[%s486 + $0x8] sm:$0xff]
        %v489 = vld [vmem:[%s486 + $0x10] sm:$0xff]
        %v490 = vld [vmem:[%s486 + $0x18] sm:$0xff]
        %s491 = scalar_lea.vmem %s394, 96 [#allocation7]
        %v492 = vld [vmem:[%s491] sm:$0xff]
        %v493 = vld [vmem:[%s491 + $0x8] sm:$0xff]
        %v494 = vld [vmem:[%s491 + $0x10] sm:$0xff]
        %v495 = vld [vmem:[%s491 + $0x18] sm:$0xff]
        %v496 = vmax.f32 %v487, %v492
        %v497 = vmax.f32 %v488, %v493
        %v498 = vmax.f32 %v489, %v494
        %v499 = vmax.f32 %v490, %v495
        %v500 = vmax.f32 %v482, %v496
        %v501 = vmax.f32 %v483, %v497
        %v502 = vmax.f32 %v484, %v498
        %v503 = vmax.f32 %v485, %v499
        %504 = vst [vmem:[#allocation2] sm:$0x1] 0.0
        %505 = vst [vmem:[#allocation2 + $0x10] sm:$0x1] 0.0
        %506 = vst [vmem:[#allocation2 + $0x20] sm:$0x1] 0.0
        %507 = vst [vmem:[#allocation2 + $0x30] sm:$0x1] 0.0
        %508 = vst [vmem:[#allocation2 + $0x40] sm:$0x1] 0.0
        %509 = vst [vmem:[#allocation2 + $0x50] sm:$0x1] 0.0
        %510 = vst [vmem:[#allocation2 + $0x60] sm:$0x1] 0.0
        %511 = vst [vmem:[#allocation2 + $0x70] sm:$0x1] 0.0
        %512 = vst [vmem:[#allocation2 + $0x9] sm:$0x1] 0.0
        %513 = vst [vmem:[#allocation2 + $0x19] sm:$0x1] 0.0
        %514 = vst [vmem:[#allocation2 + $0x29] sm:$0x1] 0.0
        %515 = vst [vmem:[#allocation2 + $0x39] sm:$0x1] 0.0
        %516 = vst [vmem:[#allocation2 + $0x49] sm:$0x1] 0.0
        %517 = vst [vmem:[#allocation2 + $0x59] sm:$0x1] 0.0
        %518 = vst [vmem:[#allocation2 + $0x69] sm:$0x1] 0.0
        %519 = vst [vmem:[#allocation2 + $0x79] sm:$0x1] 0.0
        %520 = vst [vmem:[#allocation2 + $0x1] sm:$0xff] %v500
        %521 = vst [vmem:[#allocation2 + $0x11] sm:$0xff] %v501
        %s522 = scalar_lea.vmem [#allocation2], 32
        %523 = vst [vmem:[%s522 + $0x1] sm:$0xff] %v469
        %524 = vst [vmem:[%s522 + $0x11] sm:$0xff] %v470
        %525 = vst [vmem:[%s522 + $0x21] sm:$0xff] %v471
        %526 = vst [vmem:[%s522 + $0x31] sm:$0xff] %v472
        %s527 = scalar_lea.vmem [#allocation2], 96
        %528 = vst [vmem:[%s527 + $0x1] sm:$0xff] %v502
        %529 = vst [vmem:[%s527 + $0x11] sm:$0xff] %v503
        %v530 = vld [vmem:[#allocation2] sm:$0xff]
        %v531 = vld [vmem:[#allocation2 + $0x10] sm:$0xff]
        %v532 = vld [vmem:[#allocation2 + $0x20] sm:$0xff]
        %v533 = vld [vmem:[#allocation2 + $0x30] sm:$0xff]
        %v534 = vld [vmem:[#allocation2 + $0x40] sm:$0xff]
        %v535 = vld [vmem:[#allocation2 + $0x50] sm:$0xff]
        %v536 = vld [vmem:[#allocation2 + $0x1] sm:$0xff]
        %v537 = vld [vmem:[#allocation2 + $0x11] sm:$0xff]
        %v538 = vld [vmem:[#allocation2 + $0x21] sm:$0xff]
        %v539 = vld [vmem:[#allocation2 + $0x31] sm:$0xff]
        %v540 = vld [vmem:[#allocation2 + $0x41] sm:$0xff]
        %v541 = vld [vmem:[#allocation2 + $0x51] sm:$0xff]
        %v542 = vld [vmem:[#allocation2 + $0x2] sm:$0xff]
        %v543 = vld [vmem:[#allocation2 + $0x12] sm:$0xff]
        %v544 = vld [vmem:[#allocation2 + $0x22] sm:$0xff]
        %v545 = vld [vmem:[#allocation2 + $0x32] sm:$0xff]
        %v546 = vld [vmem:[#allocation2 + $0x42] sm:$0xff]
        %v547 = vld [vmem:[#allocation2 + $0x52] sm:$0xff]
        %v548 = vld [vmem:[#allocation9] sm:$0xff]
        %v549 = vld [vmem:[#allocation9 + $0x8] sm:$0xff]
        %v550 = vld [vmem:[#allocation9 + $0x10] sm:$0xff]
        %v551 = vld [vmem:[#allocation9 + $0x18] sm:$0xff]
        %v552 = vld [vmem:[#allocation9 + $0x20] sm:$0xff]
        %v553 = vld [vmem:[#allocation9 + $0x28] sm:$0xff]
        %v554 = vld [vmem:[#allocation9 + $0x30] sm:$0xff]
        %v555 = vld [vmem:[#allocation9 + $0x38] sm:$0xff]
        %v556 = vld [vmem:[#allocation9 + $0x40] sm:$0xff]
        %v557 = vld [vmem:[#allocation9 + $0x48] sm:$0xff]
        %v558 = vld [vmem:[#allocation9 + $0x50] sm:$0xff]
        %v559 = vld [vmem:[#allocation9 + $0x58] sm:$0xff]
        %v560 = vld [vmem:[#allocation9 + $0x60] sm:$0xff]
        %v561 = vld [vmem:[#allocation9 + $0x68] sm:$0xff]
        %v562 = vld [vmem:[#allocation9 + $0x70] sm:$0xff]
        %v563 = vld [vmem:[#allocation9 + $0x78] sm:$0xff]
        %v564 = vld [vmem:[#allocation9 + $0x80] sm:$0xff]
        %v565 = vld [vmem:[#allocation9 + $0x88] sm:$0xff]
        %v566 = vld [vmem:[#allocation9 + $0x90] sm:$0xff]
        %v567 = vld [vmem:[#allocation9 + $0x98] sm:$0xff]
        %v568 = vld [vmem:[#allocation9 + $0xa0] sm:$0xff]
        %v569 = vld [vmem:[#allocation9 + $0xa8] sm:$0xff]
        %v570 = vld [vmem:[#allocation9 + $0xb0] sm:$0xff]
        %v571 = vld [vmem:[#allocation9 + $0xb8] sm:$0xff]
        %v572 = vld [vmem:[#allocation9 + $0xc0] sm:$0xff]
        %v573 = vld [vmem:[#allocation9 + $0xc8] sm:$0xff]
        %v574 = vld [vmem:[#allocation9 + $0xd0] sm:$0xff]
        %v575 = vld [vmem:[#allocation9 + $0xd8] sm:$0xff]
        %v576 = vld [vmem:[#allocation9 + $0xe0] sm:$0xff]
        %v577 = vld [vmem:[#allocation9 + $0xe8] sm:$0xff]
        %v578 = vld [vmem:[#allocation9 + $0xf0] sm:$0xff]
        %v579 = vld [vmem:[#allocation9 + $0xf8] sm:$0xff]
        %v580 = vld [vmem:[#allocation9 + $0x100] sm:$0xff]
        %v581 = vld [vmem:[#allocation9 + $0x108] sm:$0xff]
        %v582 = vld [vmem:[#allocation9 + $0x110] sm:$0xff]
        %v583 = vld [vmem:[#allocation9 + $0x118] sm:$0xff]
        %v584 = vld [vmem:[#allocation9 + $0x120] sm:$0xff]
        %v585 = vld [vmem:[#allocation9 + $0x128] sm:$0xff]
        %v586 = vld [vmem:[#allocation9 + $0x130] sm:$0xff]
        %v587 = vld [vmem:[#allocation9 + $0x138] sm:$0xff]
        %v588 = vld [vmem:[#allocation9 + $0x140] sm:$0xff]
        %v589 = vld [vmem:[#allocation9 + $0x148] sm:$0xff]
        %v590 = vld [vmem:[#allocation9 + $0x150] sm:$0xff]
        %v591 = vld [vmem:[#allocation9 + $0x158] sm:$0xff]
        %v592 = vld [vmem:[#allocation9 + $0x160] sm:$0xff]
        %v593 = vld [vmem:[#allocation9 + $0x168] sm:$0xff]
        %v594 = vld [vmem:[#allocation9 + $0x170] sm:$0xff]
        %v595 = vld [vmem:[#allocation9 + $0x178] sm:$0xff]
        %s596 = scalar_lea.vmem [#allocation2], 16
        %v597 = vld [vmem:[%s596] sm:$0xff]
        %v598 = vld [vmem:[%s596 + $0x10] sm:$0xff]
        %v599 = vld [vmem:[%s596 + $0x20] sm:$0xff]
        %v600 = vld [vmem:[%s596 + $0x30] sm:$0xff]
        %v601 = vld [vmem:[%s596 + $0x40] sm:$0xff]
        %v602 = vld [vmem:[%s596 + $0x50] sm:$0xff]
        %v603 = vld [vmem:[%s596 + $0x1] sm:$0xff]
        %v604 = vld [vmem:[%s596 + $0x11] sm:$0xff]
        %v605 = vld [vmem:[%s596 + $0x21] sm:$0xff]
        %v606 = vld [vmem:[%s596 + $0x31] sm:$0xff]
        %v607 = vld [vmem:[%s596 + $0x41] sm:$0xff]
        %v608 = vld [vmem:[%s596 + $0x51] sm:$0xff]
        %v609 = vld [vmem:[%s596 + $0x2] sm:$0xff]
        %v610 = vld [vmem:[%s596 + $0x12] sm:$0xff]
        %v611 = vld [vmem:[%s596 + $0x22] sm:$0xff]
        %v612 = vld [vmem:[%s596 + $0x32] sm:$0xff]
        %v613 = vld [vmem:[%s596 + $0x42] sm:$0xff]
        %v614 = vld [vmem:[%s596 + $0x52] sm:$0xff]
        %v615 = vld [vmem:[#allocation9 + $0x180] sm:$0xff]
        %v616 = vld [vmem:[#allocation9 + $0x188] sm:$0xff]
        %v617 = vld [vmem:[#allocation9 + $0x190] sm:$0xff]
        %v618 = vld [vmem:[#allocation9 + $0x198] sm:$0xff]
        %v619 = vld [vmem:[#allocation9 + $0x1a0] sm:$0xff]
        %v620 = vld [vmem:[#allocation9 + $0x1a8] sm:$0xff]
        %v621 = vld [vmem:[#allocation9 + $0x1b0] sm:$0xff]
        %v622 = vld [vmem:[#allocation9 + $0x1b8] sm:$0xff]
        %v623 = vld [vmem:[#allocation9 + $0x1c0] sm:$0xff]
        %v624 = vld [vmem:[#allocation9 + $0x1c8] sm:$0xff]
        %v625 = vld [vmem:[#allocation9 + $0x1d0] sm:$0xff]
        %v626 = vld [vmem:[#allocation9 + $0x1d8] sm:$0xff]
        %v627 = vld [vmem:[#allocation9 + $0x1e0] sm:$0xff]
        %v628 = vld [vmem:[#allocation9 + $0x1e8] sm:$0xff]
        %v629 = vld [vmem:[#allocation9 + $0x1f0] sm:$0xff]
        %v630 = vld [vmem:[#allocation9 + $0x1f8] sm:$0xff]
        %v631 = vld [vmem:[#allocation9 + $0x200] sm:$0xff]
        %v632 = vld [vmem:[#allocation9 + $0x208] sm:$0xff]
        %v633 = vld [vmem:[#allocation9 + $0x210] sm:$0xff]
        %v634 = vld [vmem:[#allocation9 + $0x218] sm:$0xff]
        %v635 = vld [vmem:[#allocation9 + $0x220] sm:$0xff]
        %v636 = vld [vmem:[#allocation9 + $0x228] sm:$0xff]
        %v637 = vld [vmem:[#allocation9 + $0x230] sm:$0xff]
        %v638 = vld [vmem:[#allocation9 + $0x238] sm:$0xff]
        %v639 = vld [vmem:[#allocation9 + $0x240] sm:$0xff]
        %v640 = vld [vmem:[#allocation9 + $0x248] sm:$0xff]
        %v641 = vld [vmem:[#allocation9 + $0x250] sm:$0xff]
        %v642 = vld [vmem:[#allocation9 + $0x258] sm:$0xff]
        %v643 = vld [vmem:[#allocation9 + $0x260] sm:$0xff]
        %v644 = vld [vmem:[#allocation9 + $0x268] sm:$0xff]
        %v645 = vld [vmem:[#allocation9 + $0x270] sm:$0xff]
        %v646 = vld [vmem:[#allocation9 + $0x278] sm:$0xff]
        %v647 = vld [vmem:[#allocation9 + $0x280] sm:$0xff]
        %v648 = vld [vmem:[#allocation9 + $0x288] sm:$0xff]
        %v649 = vld [vmem:[#allocation9 + $0x290] sm:$0xff]
        %v650 = vld [vmem:[#allocation9 + $0x298] sm:$0xff]
        %v651 = vld [vmem:[#allocation9 + $0x2a0] sm:$0xff]
        %v652 = vld [vmem:[#allocation9 + $0x2a8] sm:$0xff]
        %v653 = vld [vmem:[#allocation9 + $0x2b0] sm:$0xff]
        %v654 = vld [vmem:[#allocation9 + $0x2b8] sm:$0xff]
        %v655 = vld [vmem:[#allocation9 + $0x2c0] sm:$0xff]
        %v656 = vld [vmem:[#allocation9 + $0x2c8] sm:$0xff]
        %v657 = vld [vmem:[#allocation9 + $0x2d0] sm:$0xff]
        %v658 = vld [vmem:[#allocation9 + $0x2d8] sm:$0xff]
        %v659 = vld [vmem:[#allocation9 + $0x2e0] sm:$0xff]
        %v660 = vld [vmem:[#allocation9 + $0x2e8] sm:$0xff]
        %v661 = vld [vmem:[#allocation9 + $0x2f0] sm:$0xff]
        %v662 = vld [vmem:[#allocation9 + $0x2f8] sm:$0xff]
        %663 = vmatprep.subr.mxu0 0.0
        %664 = vmatpush1.msra.mxu0 %v615
        %665 = vmatprep.subr.mxu0 0.0
        %666 = vmatpush1.msra.mxu0 %v616
        %667 = vmatprep.subr.mxu0 0.0
        %668 = vmatpush1.msra.mxu0 %v617
        %669 = vmatprep.subr.mxu0 0.0
        %670 = vmatpush1.msra.mxu0 %v618
        %671 = vmatprep.subr.mxu0 0.0
        %672 = vmatpush1.msra.mxu0 %v619
        %673 = vmatprep.subr.mxu0 0.0
        %674 = vmatpush1.msra.mxu0 %v620
        %675 = vmatprep.subr.mxu0 0.0
        %676 = vmatpush1.msra.mxu0 %v621
        %677 = vmatprep.subr.mxu0 0.0
        %678 = vmatpush1.msra.mxu0 %v622
        %679 = vmatprep.subr.mxu0 0.0
        %680 = vmatpush1.msra.mxu0 %v623
        %681 = vmatprep.subr.mxu0 0.0
        %682 = vmatpush1.msra.mxu0 %v624
        %683 = vmatprep.subr.mxu0 0.0
        %684 = vmatpush1.msra.mxu0 %v625
        %685 = vmatprep.subr.mxu0 0.0
        %686 = vmatpush1.msra.mxu0 %v626
        %687 = vmatprep.subr.mxu0 0.0
        %688 = vmatpush1.msra.mxu0 %v627
        %689 = vmatprep.subr.mxu0 0.0
        %690 = vmatpush1.msra.mxu0 %v628
        %691 = vmatprep.subr.mxu0 0.0
        %692 = vmatpush1.msra.mxu0 %v629
        %693 = vmatprep.subr.mxu0 0.0
        %694 = vmatpush1.msra.mxu0 %v630
        %695 = vmatprep.subr.mxu0 0.0
        %696 = vmatpush1.msra.mxu0 %v631
        %697 = vmatprep.subr.mxu0 0.0
        %698 = vmatpush1.msra.mxu0 %v632
        %699 = vmatprep.subr.mxu0 0.0
        %700 = vmatpush1.msra.mxu0 %v633
        %701 = vmatprep.subr.mxu0 0.0
        %702 = vmatpush1.msra.mxu0 %v634
        %703 = vmatprep.subr.mxu0 0.0
        %704 = vmatpush1.msra.mxu0 %v635
        %705 = vmatprep.subr.mxu0 0.0
        %706 = vmatpush1.msra.mxu0 %v636
        %707 = vmatprep.subr.mxu0 0.0
        %708 = vmatpush1.msra.mxu0 %v637
        %709 = vmatprep.subr.mxu0 0.0
        %710 = vmatpush1.msra.mxu0 %v638
        %711 = vmatprep.subr.mxu0 0.0
        %712 = vmatpush1.msra.mxu0 %v639
        %713 = vmatprep.subr.mxu0 0.0
        %714 = vmatpush1.msra.mxu0 %v640
        %715 = vmatprep.subr.mxu0 0.0
        %716 = vmatpush1.msra.mxu0 %v641
        %717 = vmatprep.subr.mxu0 0.0
        %718 = vmatpush1.msra.mxu0 %v642
        %719 = vmatprep.subr.mxu0 0.0
        %720 = vmatpush1.msra.mxu0 %v643
        %721 = vmatprep.subr.mxu0 0.0
        %722 = vmatpush1.msra.mxu0 %v644
        %723 = vmatprep.subr.mxu0 0.0
        %724 = vmatpush1.msra.mxu0 %v645
        %725 = vmatprep.subr.mxu0 0.0
        %726 = vmatpush1.msra.mxu0 %v646
        %727 = vmatprep.mubr.f32.mxu0 %v603
        %728 = vmatmul.mubr.f32.gmra.mrb[0].mxu0 %v597
        %v729 = vpop.f32.mrb[0].mxu0
        %v730 = vadd.f32 0.0, %v729
        %v731 = vpop.f32.mrb[0].mxu0
        %732 = vmatprep.mubr.f32.mxu0 %v604
        %733 = vmatmul.mubr.f32.gmra.mrb[0].mxu0 %v598
        %v734 = vpop.f32.mrb[0].mxu0
        %v735 = vadd.f32 0.0, %v734
        %v736 = vpop.f32.mrb[0].mxu0
        %737 = vmatprep.mubr.f32.mxu0 %v605
        %738 = vmatmul.mubr.f32.gmra.mrb[0].mxu0 %v599
        %v739 = vpop.f32.mrb[0].mxu0
        %v740 = vadd.f32 0.0, %v739
        %v741 = vpop.f32.mrb[0].mxu0
        %742 = vmatprep.mubr.f32.mxu0 %v606
        %743 = vmatmul.mubr.f32.gmra.mrb[0].mxu0 %v600
        %v744 = vpop.f32.mrb[0].mxu0
        %v745 = vadd.f32 0.0, %v744
        %v746 = vpop.f32.mrb[0].mxu0
        %747 = vmatprep.mubr.f32.mxu0 %v607
        %748 = vmatmul.mubr.f32.gmra.mrb[0].mxu0 %v601
        %v749 = vpop.f32.mrb[0].mxu0
        %v750 = vadd.f32 0.0, %v749
        %v751 = vpop.f32.mrb[0].mxu0
        %752 = vmatprep.mubr.f32.mxu0 %v608
        %753 = vmatmul.mubr.f32.gmra.mrb[0].mxu0 %v602
        %v754 = vpop.f32.mrb[0].mxu0
        %v755 = vadd.f32 0.0, %v754
        %v756 = vpop.f32.mrb[0].mxu0
        %757 = vdwg.mxu0
        %758 = vmatprep.subr.mxu0 0.0
        %759 = vmatpush1.msra.mxu0 %v647
        %760 = vmatprep.subr.mxu0 0.0
        %761 = vmatpush1.msra.mxu0 %v648
        %762 = vmatprep.subr.mxu0 0.0
        %763 = vmatpush1.msra.mxu0 %v649
        %764 = vmatprep.subr.mxu0 0.0
        %765 = vmatpush1.msra.mxu0 %v650
        %766 = vmatprep.subr.mxu0 0.0
        %767 = vmatpush1.msra.mxu0 %v651
        %768 = vmatprep.subr.mxu0 0.0
        %769 = vmatpush1.msra.mxu0 %v652
        %770 = vmatprep.subr.mxu0 0.0
        %771 = vmatpush1.msra.mxu0 %v653
        %772 = vmatprep.subr.mxu0 0.0
        %773 = vmatpush1.msra.mxu0 %v654
        %774 = vmatprep.subr.mxu0 0.0
        %775 = vmatpush1.msra.mxu0 %v655
        %776 = vmatprep.subr.mxu0 0.0
        %777 = vmatpush1.msra.mxu0 %v656
        %778 = vmatprep.subr.mxu0 0.0
        %779 = vmatpush1.msra.mxu0 %v657
        %780 = vmatprep.subr.mxu0 0.0
        %781 = vmatpush1.msra.mxu0 %v658
        %782 = vmatprep.subr.mxu0 0.0
        %783 = vmatpush1.msra.mxu0 %v659
        %784 = vmatprep.subr.mxu0 0.0
        %785 = vmatpush1.msra.mxu0 %v660
        %786 = vmatprep.subr.mxu0 0.0
        %787 = vmatpush1.msra.mxu0 %v661
        %788 = vmatprep.subr.mxu0 0.0
        %789 = vmatpush1.msra.mxu0 %v662
        %790 = vmatprep.subr.mxu0 0.0
        %791 = vmatpush1.msra.mxu0 0.0
        %792 = vmatprep.subr.mxu0 0.0
        %793 = vmatpush1.msra.mxu0 0.0
        %794 = vmatprep.subr.mxu0 0.0
        %795 = vmatpush1.msra.mxu0 0.0
        %796 = vmatprep.subr.mxu0 0.0
        %797 = vmatpush1.msra.mxu0 0.0
        %798 = vmatprep.subr.mxu0 0.0
        %799 = vmatpush1.msra.mxu0 0.0
        %800 = vmatprep.subr.mxu0 0.0
        %801 = vmatpush1.msra.mxu0 0.0
        %802 = vmatprep.subr.mxu0 0.0
        %803 = vmatpush1.msra.mxu0 0.0
        %804 = vmatprep.subr.mxu0 0.0
        %805 = vmatpush1.msra.mxu0 0.0
        %806 = vmatprep.subr.mxu0 0.0
        %807 = vmatpush1.msra.mxu0 0.0
        %808 = vmatprep.subr.mxu0 0.0
        %809 = vmatpush1.msra.mxu0 0.0
        %810 = vmatprep.subr.mxu0 0.0
        %811 = vmatpush1.msra.mxu0 0.0
        %812 = vmatprep.subr.mxu0 0.0
        %813 = vmatpush1.msra.mxu0 0.0
        %814 = vmatprep.subr.mxu0 0.0
        %815 = vmatpush1.msra.mxu0 0.0
        %816 = vmatprep.subr.mxu0 0.0
        %817 = vmatpush1.msra.mxu0 0.0
        %818 = vmatprep.subr.mxu0 0.0
        %819 = vmatpush1.msra.mxu0 0.0
        %820 = vmatprep.subr.mxu0 0.0
        %821 = vmatpush1.msra.mxu0 0.0
        %822 = vmatprep.mubr.f32.mxu0 0.0
        %823 = vmatmul.mubr.f32.gmra.mrb[0].mxu0 %v609
        %v824 = vpop.f32.mrb[0].mxu0
        %v825 = vadd.f32 %v730, %v824
        %v826 = vpop.f32.mrb[0].mxu0
        %827 = vmatprep.mubr.f32.mxu0 0.0
        %828 = vmatmul.mubr.f32.gmra.mrb[0].mxu0 %v610
        %v829 = vpop.f32.mrb[0].mxu0
        %v830 = vadd.f32 %v735, %v829
        %v831 = vpop.f32.mrb[0].mxu0
        %832 = vmatprep.mubr.f32.mxu0 0.0
        %833 = vmatmul.mubr.f32.gmra.mrb[0].mxu0 %v611
        %v834 = vpop.f32.mrb[0].mxu0
        %v835 = vadd.f32 %v740, %v834
        %v836 = vpop.f32.mrb[0].mxu0
        %837 = vmatprep.mubr.f32.mxu0 0.0
        %838 = vmatmul.mubr.f32.gmra.mrb[0].mxu0 %v612
        %v839 = vpop.f32.mrb[0].mxu0
        %v840 = vadd.f32 %v745, %v839
        %v841 = vpop.f32.mrb[0].mxu0
        %842 = vmatprep.mubr.f32.mxu0 0.0
        %843 = vmatmul.mubr.f32.gmra.mrb[0].mxu0 %v613
        %v844 = vpop.f32.mrb[0].mxu0
        %v845 = vadd.f32 %v750, %v844
        %v846 = vpop.f32.mrb[0].mxu0
        %847 = vmatprep.mubr.f32.mxu0 0.0
        %848 = vmatmul.mubr.f32.gmra.mrb[0].mxu0 %v614
        %v849 = vpop.f32.mrb[0].mxu0
        %v850 = vadd.f32 %v755, %v849
        %v851 = vpop.f32.mrb[0].mxu0
        %852 = vdwg.mxu0
        %853 = vmatprep.subr.mxu0 0.0
        %854 = vmatpush1.msra.mxu0 %v548
        %855 = vmatprep.subr.mxu0 0.0
        %856 = vmatpush1.msra.mxu0 %v549
        %857 = vmatprep.subr.mxu0 0.0
        %858 = vmatpush1.msra.mxu0 %v550
        %859 = vmatprep.subr.mxu0 0.0
        %860 = vmatpush1.msra.mxu0 %v551
        %861 = vmatprep.subr.mxu0 0.0
        %862 = vmatpush1.msra.mxu0 %v552
        %863 = vmatprep.subr.mxu0 0.0
        %864 = vmatpush1.msra.mxu0 %v553
        %865 = vmatprep.subr.mxu0 0.0
        %866 = vmatpush1.msra.mxu0 %v554
        %867 = vmatprep.subr.mxu0 0.0
        %868 = vmatpush1.msra.mxu0 %v555
        %869 = vmatprep.subr.mxu0 0.0
        %870 = vmatpush1.msra.mxu0 %v556
        %871 = vmatprep.subr.mxu0 0.0
        %872 = vmatpush1.msra.mxu0 %v557
        %873 = vmatprep.subr.mxu0 0.0
        %874 = vmatpush1.msra.mxu0 %v558
        %875 = vmatprep.subr.mxu0 0.0
        %876 = vmatpush1.msra.mxu0 %v559
        %877 = vmatprep.subr.mxu0 0.0
        %878 = vmatpush1.msra.mxu0 %v560
        %879 = vmatprep.subr.mxu0 0.0
        %880 = vmatpush1.msra.mxu0 %v561
        %881 = vmatprep.subr.mxu0 0.0
        %882 = vmatpush1.msra.mxu0 %v562
        %883 = vmatprep.subr.mxu0 0.0
        %884 = vmatpush1.msra.mxu0 %v563
        %885 = vmatprep.subr.mxu0 0.0
        %886 = vmatpush1.msra.mxu0 %v564
        %887 = vmatprep.subr.mxu0 0.0
        %888 = vmatpush1.msra.mxu0 %v565
        %889 = vmatprep.subr.mxu0 0.0
        %890 = vmatpush1.msra.mxu0 %v566
        %891 = vmatprep.subr.mxu0 0.0
        %892 = vmatpush1.msra.mxu0 %v567
        %893 = vmatprep.subr.mxu0 0.0
        %894 = vmatpush1.msra.mxu0 %v568
        %895 = vmatprep.subr.mxu0 0.0
        %896 = vmatpush1.msra.mxu0 %v569
        %897 = vmatprep.subr.mxu0 0.0
        %898 = vmatpush1.msra.mxu0 %v570
        %899 = vmatprep.subr.mxu0 0.0
        %900 = vmatpush1.msra.mxu0 %v571
        %901 = vmatprep.subr.mxu0 0.0
        %902 = vmatpush1.msra.mxu0 %v572
        %903 = vmatprep.subr.mxu0 0.0
        %904 = vmatpush1.msra.mxu0 %v573
        %905 = vmatprep.subr.mxu0 0.0
        %906 = vmatpush1.msra.mxu0 %v574
        %907 = vmatprep.subr.mxu0 0.0
        %908 = vmatpush1.msra.mxu0 %v575
        %909 = vmatprep.subr.mxu0 0.0
        %910 = vmatpush1.msra.mxu0 %v576
        %911 = vmatprep.subr.mxu0 0.0
        %912 = vmatpush1.msra.mxu0 %v577
        %913 = vmatprep.subr.mxu0 0.0
        %914 = vmatpush1.msra.mxu0 %v578
        %915 = vmatprep.subr.mxu0 0.0
        %916 = vmatpush1.msra.mxu0 %v579
        %917 = vmatprep.mubr.f32.mxu0 %v536
        %918 = vmatmul.mubr.f32.gmra.mrb[0].mxu0 %v530
        %v919 = vpop.f32.mrb[0].mxu0
        %v920 = vadd.f32 %v825, %v919
        %v921 = vpop.f32.mrb[0].mxu0
        %922 = vmatprep.mubr.f32.mxu0 %v537
        %923 = vmatmul.mubr.f32.gmra.mrb[0].mxu0 %v531
        %v924 = vpop.f32.mrb[0].mxu0
        %v925 = vadd.f32 %v830, %v924
        %v926 = vpop.f32.mrb[0].mxu0
        %927 = vmatprep.mubr.f32.mxu0 %v538
        %928 = vmatmul.mubr.f32.gmra.mrb[0].mxu0 %v532
        %v929 = vpop.f32.mrb[0].mxu0
        %v930 = vadd.f32 %v835, %v929
        %v931 = vpop.f32.mrb[0].mxu0
        %932 = vmatprep.mubr.f32.mxu0 %v539
        %933 = vmatmul.mubr.f32.gmra.mrb[0].mxu0 %v533
        %v934 = vpop.f32.mrb[0].mxu0
        %v935 = vadd.f32 %v840, %v934
        %v936 = vpop.f32.mrb[0].mxu0
        %937 = vmatprep.mubr.f32.mxu0 %v540
        %938 = vmatmul.mubr.f32.gmra.mrb[0].mxu0 %v534
        %v939 = vpop.f32.mrb[0].mxu0
        %v940 = vadd.f32 %v845, %v939
        %v941 = vpop.f32.mrb[0].mxu0
        %942 = vmatprep.mubr.f32.mxu0 %v541
        %943 = vmatmul.mubr.f32.gmra.mrb[0].mxu0 %v535
        %v944 = vpop.f32.mrb[0].mxu0
        %v945 = vadd.f32 %v850, %v944
        %v946 = vpop.f32.mrb[0].mxu0
        %947 = vdwg.mxu0
        %948 = vmatprep.subr.mxu0 0.0
        %949 = vmatpush1.msra.mxu0 %v580
        %950 = vmatprep.subr.mxu0 0.0
        %951 = vmatpush1.msra.mxu0 %v581
        %952 = vmatprep.subr.mxu0 0.0
        %953 = vmatpush1.msra.mxu0 %v582
        %954 = vmatprep.subr.mxu0 0.0
        %955 = vmatpush1.msra.mxu0 %v583
        %956 = vmatprep.subr.mxu0 0.0
        %957 = vmatpush1.msra.mxu0 %v584
        %958 = vmatprep.subr.mxu0 0.0
        %959 = vmatpush1.msra.mxu0 %v585
        %960 = vmatprep.subr.mxu0 0.0
        %961 = vmatpush1.msra.mxu0 %v586
        %962 = vmatprep.subr.mxu0 0.0
        %963 = vmatpush1.msra.mxu0 %v587
        %964 = vmatprep.subr.mxu0 0.0
        %965 = vmatpush1.msra.mxu0 %v588
        %966 = vmatprep.subr.mxu0 0.0
        %967 = vmatpush1.msra.mxu0 %v589
        %968 = vmatprep.subr.mxu0 0.0
        %969 = vmatpush1.msra.mxu0 %v590
        %970 = vmatprep.subr.mxu0 0.0
        %971 = vmatpush1.msra.mxu0 %v591
        %972 = vmatprep.subr.mxu0 0.0
        %973 = vmatpush1.msra.mxu0 %v592
        %974 = vmatprep.subr.mxu0 0.0
        %975 = vmatpush1.msra.mxu0 %v593
        %976 = vmatprep.subr.mxu0 0.0
        %977 = vmatpush1.msra.mxu0 %v594
        %978 = vmatprep.subr.mxu0 0.0
        %979 = vmatpush1.msra.mxu0 %v595
        %980 = vmatprep.subr.mxu0 0.0
        %981 = vmatpush1.msra.mxu0 0.0
        %982 = vmatprep.subr.mxu0 0.0
        %983 = vmatpush1.msra.mxu0 0.0
        %984 = vmatprep.subr.mxu0 0.0
        %985 = vmatpush1.msra.mxu0 0.0
        %986 = vmatprep.subr.mxu0 0.0
        %987 = vmatpush1.msra.mxu0 0.0
        %988 = vmatprep.subr.mxu0 0.0
        %989 = vmatpush1.msra.mxu0 0.0
        %990 = vmatprep.subr.mxu0 0.0
        %991 = vmatpush1.msra.mxu0 0.0
        %992 = vmatprep.subr.mxu0 0.0
        %993 = vmatpush1.msra.mxu0 0.0
        %994 = vmatprep.subr.mxu0 0.0
        %995 = vmatpush1.msra.mxu0 0.0
        %996 = vmatprep.subr.mxu0 0.0
        %997 = vmatpush1.msra.mxu0 0.0
        %998 = vmatprep.subr.mxu0 0.0
        %999 = vmatpush1.msra.mxu0 0.0
        %1000 = vmatprep.subr.mxu0 0.0
        %1001 = vmatpush1.msra.mxu0 0.0
        %1002 = vmatprep.subr.mxu0 0.0
        %1003 = vmatpush1.msra.mxu0 0.0
        %1004 = vmatprep.subr.mxu0 0.0
        %1005 = vmatpush1.msra.mxu0 0.0
        %1006 = vmatprep.subr.mxu0 0.0
        %1007 = vmatpush1.msra.mxu0 0.0
        %1008 = vmatprep.subr.mxu0 0.0
        %1009 = vmatpush1.msra.mxu0 0.0
        %1010 = vmatprep.subr.mxu0 0.0
        %1011 = vmatpush1.msra.mxu0 0.0
        %1012 = vmatprep.mubr.f32.mxu0 0.0
        %1013 = vmatmul.mubr.f32.gmra.mrb[0].mxu0 %v542
        %v1014 = vpop.f32.mrb[0].mxu0
        %v1015 = vadd.f32 %v920, %v1014
        %v1016 = vpop.f32.mrb[0].mxu0
        %1017 = vmatprep.mubr.f32.mxu0 0.0
        %1018 = vmatmul.mubr.f32.gmra.mrb[0].mxu0 %v543
        %v1019 = vpop.f32.mrb[0].mxu0
        %v1020 = vadd.f32 %v925, %v1019
        %v1021 = vpop.f32.mrb[0].mxu0
        %1022 = vmatprep.mubr.f32.mxu0 0.0
        %1023 = vmatmul.mubr.f32.gmra.mrb[0].mxu0 %v544
        %v1024 = vpop.f32.mrb[0].mxu0
        %v1025 = vadd.f32 %v930, %v1024
        %v1026 = vpop.f32.mrb[0].mxu0
        %1027 = vmatprep.mubr.f32.mxu0 0.0
        %1028 = vmatmul.mubr.f32.gmra.mrb[0].mxu0 %v545
        %v1029 = vpop.f32.mrb[0].mxu0
        %v1030 = vadd.f32 %v935, %v1029
        %v1031 = vpop.f32.mrb[0].mxu0
        %1032 = vmatprep.mubr.f32.mxu0 0.0
        %1033 = vmatmul.mubr.f32.gmra.mrb[0].mxu0 %v546
        %v1034 = vpop.f32.mrb[0].mxu0
        %v1035 = vadd.f32 %v940, %v1034
        %v1036 = vpop.f32.mrb[0].mxu0
        %1037 = vmatprep.mubr.f32.mxu0 0.0
        %1038 = vmatmul.mubr.f32.gmra.mrb[0].mxu0 %v547
        %v1039 = vpop.f32.mrb[0].mxu0
        %v1040 = vadd.f32 %v945, %v1039
        %v1041 = vpop.f32.mrb[0].mxu0
        %1042 = vdwg.mxu0
        %v1043 = vld [vmem:[%s522] sm:$0xff]
        %v1044 = vld [vmem:[%s522 + $0x10] sm:$0xff]
        %v1045 = vld [vmem:[%s522 + $0x20] sm:$0xff]
        %v1046 = vld [vmem:[%s522 + $0x30] sm:$0xff]
        %v1047 = vld [vmem:[%s522 + $0x40] sm:$0xff]
        %v1048 = vld [vmem:[%s522 + $0x50] sm:$0xff]
        %v1049 = vld [vmem:[%s522 + $0x1] sm:$0xff]
        %v1050 = vld [vmem:[%s522 + $0x11] sm:$0xff]
        %v1051 = vld [vmem:[%s522 + $0x21] sm:$0xff]
        %v1052 = vld [vmem:[%s522 + $0x31] sm:$0xff]
        %v1053 = vld [vmem:[%s522 + $0x41] sm:$0xff]
        %v1054 = vld [vmem:[%s522 + $0x51] sm:$0xff]
        %v1055 = vld [vmem:[%s522 + $0x2] sm:$0xff]
        %v1056 = vld [vmem:[%s522 + $0x12] sm:$0xff]
        %v1057 = vld [vmem:[%s522 + $0x22] sm:$0xff]
        %v1058 = vld [vmem:[%s522 + $0x32] sm:$0xff]
        %v1059 = vld [vmem:[%s522 + $0x42] sm:$0xff]
        %v1060 = vld [vmem:[%s522 + $0x52] sm:$0xff]
        %v1061 = vld [vmem:[#allocation9 + $0x300] sm:$0xff]
        %v1062 = vld [vmem:[#allocation9 + $0x308] sm:$0xff]
        %v1063 = vld [vmem:[#allocation9 + $0x310] sm:$0xff]
        %v1064 = vld [vmem:[#allocation9 + $0x318] sm:$0xff]
        %v1065 = vld [vmem:[#allocation9 + $0x320] sm:$0xff]
        %v1066 = vld [vmem:[#allocation9 + $0x328] sm:$0xff]
        %v1067 = vld [vmem:[#allocation9 + $0x330] sm:$0xff]
        %v1068 = vld [vmem:[#allocation9 + $0x338] sm:$0xff]
        %v1069 = vld [vmem:[#allocation9 + $0x340] sm:$0xff]
        %v1070 = vld [vmem:[#allocation9 + $0x348] sm:$0xff]
        %v1071 = vld [vmem:[#allocation9 + $0x350] sm:$0xff]
        %v1072 = vld [vmem:[#allocation9 + $0x358] sm:$0xff]
        %v1073 = vld [vmem:[#allocation9 + $0x360] sm:$0xff]
        %v1074 = vld [vmem:[#allocation9 + $0x368] sm:$0xff]
        %v1075 = vld [vmem:[#allocation9 + $0x370] sm:$0xff]
        %v1076 = vld [vmem:[#allocation9 + $0x378] sm:$0xff]
        %v1077 = vld [vmem:[#allocation9 + $0x380] sm:$0xff]
        %v1078 = vld [vmem:[#allocation9 + $0x388] sm:$0xff]
        %v1079 = vld [vmem:[#allocation9 + $0x390] sm:$0xff]
        %v1080 = vld [vmem:[#allocation9 + $0x398] sm:$0xff]
        %v1081 = vld [vmem:[#allocation9 + $0x3a0] sm:$0xff]
        %v1082 = vld [vmem:[#allocation9 + $0x3a8] sm:$0xff]
        %v1083 = vld [vmem:[#allocation9 + $0x3b0] sm:$0xff]
        %v1084 = vld [vmem:[#allocation9 + $0x3b8] sm:$0xff]
        %v1085 = vld [vmem:[#allocation9 + $0x3c0] sm:$0xff]
        %v1086 = vld [vmem:[#allocation9 + $0x3c8] sm:$0xff]
        %v1087 = vld [vmem:[#allocation9 + $0x3d0] sm:$0xff]
        %v1088 = vld [vmem:[#allocation9 + $0x3d8] sm:$0xff]
        %v1089 = vld [vmem:[#allocation9 + $0x3e0] sm:$0xff]
        %v1090 = vld [vmem:[#allocation9 + $0x3e8] sm:$0xff]
        %v1091 = vld [vmem:[#allocation9 + $0x3f0] sm:$0xff]
        %v1092 = vld [vmem:[#allocation9 + $0x3f8] sm:$0xff]
        %v1093 = vld [vmem:[#allocation9 + $0x400] sm:$0xff]
        %v1094 = vld [vmem:[#allocation9 + $0x408] sm:$0xff]
        %v1095 = vld [vmem:[#allocation9 + $0x410] sm:$0xff]
        %v1096 = vld [vmem:[#allocation9 + $0x418] sm:$0xff]
        %v1097 = vld [vmem:[#allocation9 + $0x420] sm:$0xff]
        %v1098 = vld [vmem:[#allocation9 + $0x428] sm:$0xff]
        %v1099 = vld [vmem:[#allocation9 + $0x430] sm:$0xff]
        %v1100 = vld [vmem:[#allocation9 + $0x438] sm:$0xff]
        %v1101 = vld [vmem:[#allocation9 + $0x440] sm:$0xff]
        %v1102 = vld [vmem:[#allocation9 + $0x448] sm:$0xff]
        %v1103 = vld [vmem:[#allocation9 + $0x450] sm:$0xff]
        %v1104 = vld [vmem:[#allocation9 + $0x458] sm:$0xff]
        %v1105 = vld [vmem:[#allocation9 + $0x460] sm:$0xff]
        %v1106 = vld [vmem:[#allocation9 + $0x468] sm:$0xff]
        %v1107 = vld [vmem:[#allocation9 + $0x470] sm:$0xff]
        %v1108 = vld [vmem:[#allocation9 + $0x478] sm:$0xff]
        %1109 = vmatprep.subr.mxu0 0.0
        %1110 = vmatpush1.msra.mxu0 %v1061
        %1111 = vmatprep.subr.mxu0 0.0
        %1112 = vmatpush1.msra.mxu0 %v1062
        %1113 = vmatprep.subr.mxu0 0.0
        %1114 = vmatpush1.msra.mxu0 %v1063
        %1115 = vmatprep.subr.mxu0 0.0
        %1116 = vmatpush1.msra.mxu0 %v1064
        %1117 = vmatprep.subr.mxu0 0.0
        %1118 = vmatpush1.msra.mxu0 %v1065
        %1119 = vmatprep.subr.mxu0 0.0
        %1120 = vmatpush1.msra.mxu0 %v1066
        %1121 = vmatprep.subr.mxu0 0.0
        %1122 = vmatpush1.msra.mxu0 %v1067
        %1123 = vmatprep.subr.mxu0 0.0
        %1124 = vmatpush1.msra.mxu0 %v1068
        %1125 = vmatprep.subr.mxu0 0.0
        %1126 = vmatpush1.msra.mxu0 %v1069
        %1127 = vmatprep.subr.mxu0 0.0
        %1128 = vmatpush1.msra.mxu0 %v1070
        %1129 = vmatprep.subr.mxu0 0.0
        %1130 = vmatpush1.msra.mxu0 %v1071
        %1131 = vmatprep.subr.mxu0 0.0
        %1132 = vmatpush1.msra.mxu0 %v1072
        %1133 = vmatprep.subr.mxu0 0.0
        %1134 = vmatpush1.msra.mxu0 %v1073
        %1135 = vmatprep.subr.mxu0 0.0
        %1136 = vmatpush1.msra.mxu0 %v1074
        %1137 = vmatprep.subr.mxu0 0.0
        %1138 = vmatpush1.msra.mxu0 %v1075
        %1139 = vmatprep.subr.mxu0 0.0
        %1140 = vmatpush1.msra.mxu0 %v1076
        %1141 = vmatprep.subr.mxu0 0.0
        %1142 = vmatpush1.msra.mxu0 %v1077
        %1143 = vmatprep.subr.mxu0 0.0
        %1144 = vmatpush1.msra.mxu0 %v1078
        %1145 = vmatprep.subr.mxu0 0.0
        %1146 = vmatpush1.msra.mxu0 %v1079
        %1147 = vmatprep.subr.mxu0 0.0
        %1148 = vmatpush1.msra.mxu0 %v1080
        %1149 = vmatprep.subr.mxu0 0.0
        %1150 = vmatpush1.msra.mxu0 %v1081
        %1151 = vmatprep.subr.mxu0 0.0
        %1152 = vmatpush1.msra.mxu0 %v1082
        %1153 = vmatprep.subr.mxu0 0.0
        %1154 = vmatpush1.msra.mxu0 %v1083
        %1155 = vmatprep.subr.mxu0 0.0
        %1156 = vmatpush1.msra.mxu0 %v1084
        %1157 = vmatprep.subr.mxu0 0.0
        %1158 = vmatpush1.msra.mxu0 %v1085
        %1159 = vmatprep.subr.mxu0 0.0
        %1160 = vmatpush1.msra.mxu0 %v1086
        %1161 = vmatprep.subr.mxu0 0.0
        %1162 = vmatpush1.msra.mxu0 %v1087
        %1163 = vmatprep.subr.mxu0 0.0
        %1164 = vmatpush1.msra.mxu0 %v1088
        %1165 = vmatprep.subr.mxu0 0.0
        %1166 = vmatpush1.msra.mxu0 %v1089
        %1167 = vmatprep.subr.mxu0 0.0
        %1168 = vmatpush1.msra.mxu0 %v1090
        %1169 = vmatprep.subr.mxu0 0.0
        %1170 = vmatpush1.msra.mxu0 %v1091
        %1171 = vmatprep.subr.mxu0 0.0
        %1172 = vmatpush1.msra.mxu0 %v1092
        %1173 = vmatprep.mubr.f32.mxu0 %v1049
        %1174 = vmatmul.mubr.f32.gmra.mrb[0].mxu0 %v1043
        %v1175 = vpop.f32.mrb[0].mxu0
        %v1176 = vadd.f32 0.0, %v1175
        %v1177 = vpop.f32.mrb[0].mxu0
        %1178 = vmatprep.mubr.f32.mxu0 %v1050
        %1179 = vmatmul.mubr.f32.gmra.mrb[0].mxu0 %v1044
        %v1180 = vpop.f32.mrb[0].mxu0
        %v1181 = vadd.f32 0.0, %v1180
        %v1182 = vpop.f32.mrb[0].mxu0
        %1183 = vmatprep.mubr.f32.mxu0 %v1051
        %1184 = vmatmul.mubr.f32.gmra.mrb[0].mxu0 %v1045
        %v1185 = vpop.f32.mrb[0].mxu0
        %v1186 = vadd.f32 0.0, %v1185
        %v1187 = vpop.f32.mrb[0].mxu0
        %1188 = vmatprep.mubr.f32.mxu0 %v1052
        %1189 = vmatmul.mubr.f32.gmra.mrb[0].mxu0 %v1046
        %v1190 = vpop.f32.mrb[0].mxu0
        %v1191 = vadd.f32 0.0, %v1190
        %v1192 = vpop.f32.mrb[0].mxu0
        %1193 = vmatprep.mubr.f32.mxu0 %v1053
        %1194 = vmatmul.mubr.f32.gmra.mrb[0].mxu0 %v1047
        %v1195 = vpop.f32.mrb[0].mxu0
        %v1196 = vadd.f32 0.0, %v1195
        %v1197 = vpop.f32.mrb[0].mxu0
        %1198 = vmatprep.mubr.f32.mxu0 %v1054
        %1199 = vmatmul.mubr.f32.gmra.mrb[0].mxu0 %v1048
        %v1200 = vpop.f32.mrb[0].mxu0
        %v1201 = vadd.f32 0.0, %v1200
        %v1202 = vpop.f32.mrb[0].mxu0
        %1203 = vdwg.mxu0
        %1204 = vmatprep.subr.mxu0 0.0
        %1205 = vmatpush1.msra.mxu0 %v1093
        %1206 = vmatprep.subr.mxu0 0.0
        %1207 = vmatpush1.msra.mxu0 %v1094
        %1208 = vmatprep.subr.mxu0 0.0
        %1209 = vmatpush1.msra.mxu0 %v1095
        %1210 = vmatprep.subr.mxu0 0.0
        %1211 = vmatpush1.msra.mxu0 %v1096
        %1212 = vmatprep.subr.mxu0 0.0
        %1213 = vmatpush1.msra.mxu0 %v1097
        %1214 = vmatprep.subr.mxu0 0.0
        %1215 = vmatpush1.msra.mxu0 %v1098
        %1216 = vmatprep.subr.mxu0 0.0
        %1217 = vmatpush1.msra.mxu0 %v1099
        %1218 = vmatprep.subr.mxu0 0.0
        %1219 = vmatpush1.msra.mxu0 %v1100
        %1220 = vmatprep.subr.mxu0 0.0
        %1221 = vmatpush1.msra.mxu0 %v1101
        %1222 = vmatprep.subr.mxu0 0.0
        %1223 = vmatpush1.msra.mxu0 %v1102
        %1224 = vmatprep.subr.mxu0 0.0
        %1225 = vmatpush1.msra.mxu0 %v1103
        %1226 = vmatprep.subr.mxu0 0.0
        %1227 = vmatpush1.msra.mxu0 %v1104
        %1228 = vmatprep.subr.mxu0 0.0
        %1229 = vmatpush1.msra.mxu0 %v1105
        %1230 = vmatprep.subr.mxu0 0.0
        %1231 = vmatpush1.msra.mxu0 %v1106
        %1232 = vmatprep.subr.mxu0 0.0
        %1233 = vmatpush1.msra.mxu0 %v1107
        %1234 = vmatprep.subr.mxu0 0.0
        %1235 = vmatpush1.msra.mxu0 %v1108
        %1236 = vmatprep.subr.mxu0 0.0
        %1237 = vmatpush1.msra.mxu0 0.0
        %1238 = vmatprep.subr.mxu0 0.0
        %1239 = vmatpush1.msra.mxu0 0.0
        %1240 = vmatprep.subr.mxu0 0.0
        %1241 = vmatpush1.msra.mxu0 0.0
        %1242 = vmatprep.subr.mxu0 0.0
        %1243 = vmatpush1.msra.mxu0 0.0
        %1244 = vmatprep.subr.mxu0 0.0
        %1245 = vmatpush1.msra.mxu0 0.0
        %1246 = vmatprep.subr.mxu0 0.0
        %1247 = vmatpush1.msra.mxu0 0.0
        %1248 = vmatprep.subr.mxu0 0.0
        %1249 = vmatpush1.msra.mxu0 0.0
        %1250 = vmatprep.subr.mxu0 0.0
        %1251 = vmatpush1.msra.mxu0 0.0
        %1252 = vmatprep.subr.mxu0 0.0
        %1253 = vmatpush1.msra.mxu0 0.0
        %1254 = vmatprep.subr.mxu0 0.0
        %1255 = vmatpush1.msra.mxu0 0.0
        %1256 = vmatprep.subr.mxu0 0.0
        %1257 = vmatpush1.msra.mxu0 0.0
        %1258 = vmatprep.subr.mxu0 0.0
        %1259 = vmatpush1.msra.mxu0 0.0
        %1260 = vmatprep.subr.mxu0 0.0
        %1261 = vmatpush1.msra.mxu0 0.0
        %1262 = vmatprep.subr.mxu0 0.0
        %1263 = vmatpush1.msra.mxu0 0.0
        %1264 = vmatprep.subr.mxu0 0.0
        %1265 = vmatpush1.msra.mxu0 0.0
        %1266 = vmatprep.subr.mxu0 0.0
        %1267 = vmatpush1.msra.mxu0 0.0
        %1268 = vmatprep.mubr.f32.mxu0 0.0
        %1269 = vmatmul.mubr.f32.gmra.mrb[0].mxu0 %v1055
        %v1270 = vpop.f32.mrb[0].mxu0
        %v1271 = vadd.f32 %v1176, %v1270
        %v1272 = vpop.f32.mrb[0].mxu0
        %1273 = vmatprep.mubr.f32.mxu0 0.0
        %1274 = vmatmul.mubr.f32.gmra.mrb[0].mxu0 %v1056
        %v1275 = vpop.f32.mrb[0].mxu0
        %v1276 = vadd.f32 %v1181, %v1275
        %v1277 = vpop.f32.mrb[0].mxu0
        %1278 = vmatprep.mubr.f32.mxu0 0.0
        %1279 = vmatmul.mubr.f32.gmra.mrb[0].mxu0 %v1057
        %v1280 = vpop.f32.mrb[0].mxu0
        %v1281 = vadd.f32 %v1186, %v1280
        %v1282 = vpop.f32.mrb[0].mxu0
        %1283 = vmatprep.mubr.f32.mxu0 0.0
        %1284 = vmatmul.mubr.f32.gmra.mrb[0].mxu0 %v1058
        %v1285 = vpop.f32.mrb[0].mxu0
        %v1286 = vadd.f32 %v1191, %v1285
        %v1287 = vpop.f32.mrb[0].mxu0
        %1288 = vmatprep.mubr.f32.mxu0 0.0
        %1289 = vmatmul.mubr.f32.gmra.mrb[0].mxu0 %v1059
        %v1290 = vpop.f32.mrb[0].mxu0
        %v1291 = vadd.f32 %v1196, %v1290
        %v1292 = vpop.f32.mrb[0].mxu0
        %1293 = vmatprep.mubr.f32.mxu0 0.0
        %1294 = vmatmul.mubr.f32.gmra.mrb[0].mxu0 %v1060
        %v1295 = vpop.f32.mrb[0].mxu0
        %v1296 = vadd.f32 %v1201, %v1295
        %v1297 = vpop.f32.mrb[0].mxu0
        %1298 = vdwg.mxu0
        %v1299 = vadd.f32 %v1015, %v1271
        %v1300 = vadd.f32 %v1020, %v1276
        %v1301 = vadd.f32 %v1025, %v1281
        %v1302 = vadd.f32 %v1030, %v1286
        %v1303 = vadd.f32 %v1035, %v1291
        %v1304 = vadd.f32 %v1040, %v1296
        %v1305 = vld [vmem:[%s3] sm:$0x1]
        %v1307 = vlaneseq
        %v1308 = vshrl.u32 %v1307, 7
        %v1309 = vsub.s32 0, %v1308
        %v1310 = vrot.slane %v1305, %v1309
        %v1312 = vmul.f32 %v1299, %v1310
        %v1313 = vmul.f32 %v1300, %v1310
        %v1314 = vmul.f32 %v1301, %v1310
        %v1315 = vmul.f32 %v1302, %v1310
        %v1316 = vmul.f32 %v1303, %v1310
        %v1317 = vmul.f32 %v1304, %v1310
        %v1318 = vld [vmem:[%s4] sm:$0x1]
        %v1320 = vlaneseq
        %v1321 = vshrl.u32 %v1320, 7
        %v1322 = vsub.s32 0, %v1321
        %v1323 = vrot.slane %v1318, %v1322
        %v1325 = vadd.f32 %v1312, %v1323
        %v1326 = vadd.f32 %v1313, %v1323
        %v1327 = vadd.f32 %v1314, %v1323
        %v1328 = vadd.f32 %v1315, %v1323
        %v1329 = vadd.f32 %v1316, %v1323
        %v1330 = vadd.f32 %v1317, %v1323
        %v1331 = vmax.f32 %v1325, 0.0
        %v1332 = vmax.f32 %v1326, 0.0
        %v1333 = vmax.f32 %v1327, 0.0
        %v1334 = vmax.f32 %v1328, 0.0
        %v1335 = vmax.f32 %v1329, 0.0
        %v1336 = vmax.f32 %v1330, 0.0
        %1337 = vst [vmem:[#allocation3] sm:$0x1] 0.0
        %1338 = vst [vmem:[#allocation3 + $0x10] sm:$0x1] 0.0
        %1339 = vst [vmem:[#allocation3 + $0x20] sm:$0x1] 0.0
        %1340 = vst [vmem:[#allocation3 + $0x30] sm:$0x1] 0.0
        %1341 = vst [vmem:[#allocation3 + $0x40] sm:$0x1] 0.0
        %1342 = vst [vmem:[#allocation3 + $0x50] sm:$0x1] 0.0
        %1343 = vst [vmem:[#allocation3 + $0x9] sm:$0x1] 0.0
        %1344 = vst [vmem:[#allocation3 + $0x19] sm:$0x1] 0.0
        %1345 = vst [vmem:[#allocation3 + $0x29] sm:$0x1] 0.0
        %1346 = vst [vmem:[#allocation3 + $0x39] sm:$0x1] 0.0
        %1347 = vst [vmem:[#allocation3 + $0x49] sm:$0x1] 0.0
        %1348 = vst [vmem:[#allocation3 + $0x59] sm:$0x1] 0.0
        %1349 = vst [vmem:[#allocation3 + $0x1] sm:$0xff] %v1331
        %1350 = vst [vmem:[#allocation3 + $0x11] sm:$0xff] %v1332
        %1351 = vst [vmem:[#allocation3 + $0x21] sm:$0xff] %v1333
        %1352 = vst [vmem:[#allocation3 + $0x31] sm:$0xff] %v1334
        %1353 = vst [vmem:[#allocation3 + $0x41] sm:$0xff] %v1335
        %1354 = vst [vmem:[#allocation3 + $0x51] sm:$0xff] %v1336
        %p1355 = scmp.eq.s32.totalorder %s34, 0
        // Predicated region
        $region69: #{tpu_custom_call.1} parent=51 // pred_check
          %p1356 = pneg %p1355
        $region70: #{tpu_custom_call.1} parent=51 // pred_check_branch
          %1358 = sbr.rel (%p1356) target = $region72
        $region71: #{tpu_custom_call.1} parent=51 // pred_region
          %1359 = vst [vmem:[#allocation3] sm:$0xff] 0.0
          %1360 = vst [vmem:[#allocation3 + $0x8] sm:$0x3] 0.0
        $region72: #{tpu_custom_call.1} parent=51 // pred_fallthru
          _
        %p1361 = scmp.eq.s32.totalorder %s34, 1
        // Predicated region
        $region73: #{tpu_custom_call.1} parent=51 // pred_check
          %p1362 = pneg %p1361
        $region74: #{tpu_custom_call.1} parent=51 // pred_check_branch
          %1364 = sbr.rel (%p1362) target = $region76
        $region75: #{tpu_custom_call.1} parent=51 // pred_region
          %s1365 = scalar_lea.vmem [#allocation3], 80
          %1366 = vst [vmem:[%s1365] sm:$0xff] 0.0
          %1367 = vst [vmem:[%s1365 + $0x8] sm:$0x3] 0.0
        $region76: #{tpu_custom_call.1} parent=51 // pred_fallthru
          _
        %v1368 = vld [vmem:[#allocation3] sm:$0xff]
        %v1369 = vld [vmem:[#allocation3 + $0x10] sm:$0xff]
        %v1370 = vld [vmem:[#allocation3 + $0x20] sm:$0xff]
        %v1371 = vld [vmem:[#allocation3 + $0x30] sm:$0xff]
        %v1372 = vld [vmem:[#allocation3 + $0x1] sm:$0xff]
        %v1373 = vld [vmem:[#allocation3 + $0x11] sm:$0xff]
        %v1374 = vld [vmem:[#allocation3 + $0x21] sm:$0xff]
        %v1375 = vld [vmem:[#allocation3 + $0x31] sm:$0xff]
        %v1376 = vld [vmem:[#allocation3 + $0x2] sm:$0xff]
        %v1377 = vld [vmem:[#allocation3 + $0x12] sm:$0xff]
        %v1378 = vld [vmem:[#allocation3 + $0x22] sm:$0xff]
        %v1379 = vld [vmem:[#allocation3 + $0x32] sm:$0xff]
        %v1380 = vld [vmem:[#allocation10] sm:$0xff]
        %v1381 = vld [vmem:[#allocation10 + $0x8] sm:$0xff]
        %v1382 = vld [vmem:[#allocation10 + $0x10] sm:$0xff]
        %v1383 = vld [vmem:[#allocation10 + $0x18] sm:$0xff]
        %v1384 = vld [vmem:[#allocation10 + $0x20] sm:$0xff]
        %v1385 = vld [vmem:[#allocation10 + $0x28] sm:$0xff]
        %v1386 = vld [vmem:[#allocation10 + $0x30] sm:$0xff]
        %v1387 = vld [vmem:[#allocation10 + $0x38] sm:$0xff]
        %v1388 = vld [vmem:[#allocation10 + $0x40] sm:$0xff]
        %v1389 = vld [vmem:[#allocation10 + $0x48] sm:$0xff]
        %v1390 = vld [vmem:[#allocation10 + $0x50] sm:$0xff]
        %v1391 = vld [vmem:[#allocation10 + $0x58] sm:$0xff]
        %v1392 = vld [vmem:[#allocation10 + $0x60] sm:$0xff]
        %v1393 = vld [vmem:[#allocation10 + $0x68] sm:$0xff]
        %v1394 = vld [vmem:[#allocation10 + $0x70] sm:$0xff]
        %v1395 = vld [vmem:[#allocation10 + $0x78] sm:$0xff]
        %v1396 = vld [vmem:[#allocation10 + $0x80] sm:$0xff]
        %v1397 = vld [vmem:[#allocation10 + $0x88] sm:$0xff]
        %v1398 = vld [vmem:[#allocation10 + $0x90] sm:$0xff]
        %v1399 = vld [vmem:[#allocation10 + $0x98] sm:$0xff]
        %v1400 = vld [vmem:[#allocation10 + $0xa0] sm:$0xff]
        %v1401 = vld [vmem:[#allocation10 + $0xa8] sm:$0xff]
        %v1402 = vld [vmem:[#allocation10 + $0xb0] sm:$0xff]
        %v1403 = vld [vmem:[#allocation10 + $0xb8] sm:$0xff]
        %v1404 = vld [vmem:[#allocation10 + $0xc0] sm:$0xff]
        %v1405 = vld [vmem:[#allocation10 + $0xc8] sm:$0xff]
        %v1406 = vld [vmem:[#allocation10 + $0xd0] sm:$0xff]
        %v1407 = vld [vmem:[#allocation10 + $0xd8] sm:$0xff]
        %v1408 = vld [vmem:[#allocation10 + $0xe0] sm:$0xff]
        %v1409 = vld [vmem:[#allocation10 + $0xe8] sm:$0xff]
        %v1410 = vld [vmem:[#allocation10 + $0xf0] sm:$0xff]
        %v1411 = vld [vmem:[#allocation10 + $0xf8] sm:$0xff]
        %v1412 = vld [vmem:[#allocation10 + $0x100] sm:$0xff]
        %v1413 = vld [vmem:[#allocation10 + $0x108] sm:$0xff]
        %v1414 = vld [vmem:[#allocation10 + $0x110] sm:$0xff]
        %v1415 = vld [vmem:[#allocation10 + $0x118] sm:$0xff]
        %v1416 = vld [vmem:[#allocation10 + $0x120] sm:$0xff]
        %v1417 = vld [vmem:[#allocation10 + $0x128] sm:$0xff]
        %v1418 = vld [vmem:[#allocation10 + $0x130] sm:$0xff]
        %v1419 = vld [vmem:[#allocation10 + $0x138] sm:$0xff]
        %v1420 = vld [vmem:[#allocation10 + $0x140] sm:$0xff]
        %v1421 = vld [vmem:[#allocation10 + $0x148] sm:$0xff]
        %v1422 = vld [vmem:[#allocation10 + $0x150] sm:$0xff]
        %v1423 = vld [vmem:[#allocation10 + $0x158] sm:$0xff]
        %v1424 = vld [vmem:[#allocation10 + $0x160] sm:$0xff]
        %v1425 = vld [vmem:[#allocation10 + $0x168] sm:$0xff]
        %v1426 = vld [vmem:[#allocation10 + $0x170] sm:$0xff]
        %v1427 = vld [vmem:[#allocation10 + $0x178] sm:$0xff]
        %s1428 = scalar_lea.vmem [#allocation3], 16
        %v1429 = vld [vmem:[%s1428] sm:$0xff]
        %v1430 = vld [vmem:[%s1428 + $0x10] sm:$0xff]
        %v1431 = vld [vmem:[%s1428 + $0x20] sm:$0xff]
        %v1432 = vld [vmem:[%s1428 + $0x30] sm:$0xff]
        %v1433 = vld [vmem:[%s1428 + $0x1] sm:$0xff]
        %v1434 = vld [vmem:[%s1428 + $0x11] sm:$0xff]
        %v1435 = vld [vmem:[%s1428 + $0x21] sm:$0xff]
        %v1436 = vld [vmem:[%s1428 + $0x31] sm:$0xff]
        %v1437 = vld [vmem:[%s1428 + $0x2] sm:$0xff]
        %v1438 = vld [vmem:[%s1428 + $0x12] sm:$0xff]
        %v1439 = vld [vmem:[%s1428 + $0x22] sm:$0xff]
        %v1440 = vld [vmem:[%s1428 + $0x32] sm:$0xff]
        %v1441 = vld [vmem:[#allocation10 + $0x180] sm:$0xff]
        %v1442 = vld [vmem:[#allocation10 + $0x188] sm:$0xff]
        %v1443 = vld [vmem:[#allocation10 + $0x190] sm:$0xff]
        %v1444 = vld [vmem:[#allocation10 + $0x198] sm:$0xff]
        %v1445 = vld [vmem:[#allocation10 + $0x1a0] sm:$0xff]
        %v1446 = vld [vmem:[#allocation10 + $0x1a8] sm:$0xff]
        %v1447 = vld [vmem:[#allocation10 + $0x1b0] sm:$0xff]
        %v1448 = vld [vmem:[#allocation10 + $0x1b8] sm:$0xff]
        %v1449 = vld [vmem:[#allocation10 + $0x1c0] sm:$0xff]
        %v1450 = vld [vmem:[#allocation10 + $0x1c8] sm:$0xff]
        %v1451 = vld [vmem:[#allocation10 + $0x1d0] sm:$0xff]
        %v1452 = vld [vmem:[#allocation10 + $0x1d8] sm:$0xff]
        %v1453 = vld [vmem:[#allocation10 + $0x1e0] sm:$0xff]
        %v1454 = vld [vmem:[#allocation10 + $0x1e8] sm:$0xff]
        %v1455 = vld [vmem:[#allocation10 + $0x1f0] sm:$0xff]
        %v1456 = vld [vmem:[#allocation10 + $0x1f8] sm:$0xff]
        %v1457 = vld [vmem:[#allocation10 + $0x200] sm:$0xff]
        %v1458 = vld [vmem:[#allocation10 + $0x208] sm:$0xff]
        %v1459 = vld [vmem:[#allocation10 + $0x210] sm:$0xff]
        %v1460 = vld [vmem:[#allocation10 + $0x218] sm:$0xff]
        %v1461 = vld [vmem:[#allocation10 + $0x220] sm:$0xff]
        %v1462 = vld [vmem:[#allocation10 + $0x228] sm:$0xff]
        %v1463 = vld [vmem:[#allocation10 + $0x230] sm:$0xff]
        %v1464 = vld [vmem:[#allocation10 + $0x238] sm:$0xff]
        %v1465 = vld [vmem:[#allocation10 + $0x240] sm:$0xff]
        %v1466 = vld [vmem:[#allocation10 + $0x248] sm:$0xff]
        %v1467 = vld [vmem:[#allocation10 + $0x250] sm:$0xff]
        %v1468 = vld [vmem:[#allocation10 + $0x258] sm:$0xff]
        %v1469 = vld [vmem:[#allocation10 + $0x260] sm:$0xff]
        %v1470 = vld [vmem:[#allocation10 + $0x268] sm:$0xff]
        %v1471 = vld [vmem:[#allocation10 + $0x270] sm:$0xff]
        %v1472 = vld [vmem:[#allocation10 + $0x278] sm:$0xff]
        %v1473 = vld [vmem:[#allocation10 + $0x280] sm:$0xff]
        %v1474 = vld [vmem:[#allocation10 + $0x288] sm:$0xff]
        %v1475 = vld [vmem:[#allocation10 + $0x290] sm:$0xff]
        %v1476 = vld [vmem:[#allocation10 + $0x298] sm:$0xff]
        %v1477 = vld [vmem:[#allocation10 + $0x2a0] sm:$0xff]
        %v1478 = vld [vmem:[#allocation10 + $0x2a8] sm:$0xff]
        %v1479 = vld [vmem:[#allocation10 + $0x2b0] sm:$0xff]
        %v1480 = vld [vmem:[#allocation10 + $0x2b8] sm:$0xff]
        %v1481 = vld [vmem:[#allocation10 + $0x2c0] sm:$0xff]
        %v1482 = vld [vmem:[#allocation10 + $0x2c8] sm:$0xff]
        %v1483 = vld [vmem:[#allocation10 + $0x2d0] sm:$0xff]
        %v1484 = vld [vmem:[#allocation10 + $0x2d8] sm:$0xff]
        %v1485 = vld [vmem:[#allocation10 + $0x2e0] sm:$0xff]
        %v1486 = vld [vmem:[#allocation10 + $0x2e8] sm:$0xff]
        %v1487 = vld [vmem:[#allocation10 + $0x2f0] sm:$0xff]
        %v1488 = vld [vmem:[#allocation10 + $0x2f8] sm:$0xff]
        %1489 = vmatprep.subr.mxu0 0.0
        %1490 = vmatpush1.msra.mxu0 %v1441
        %1491 = vmatprep.subr.mxu0 0.0
        %1492 = vmatpush1.msra.mxu0 %v1442
        %1493 = vmatprep.subr.mxu0 0.0
        %1494 = vmatpush1.msra.mxu0 %v1443
        %1495 = vmatprep.subr.mxu0 0.0
        %1496 = vmatpush1.msra.mxu0 %v1444
        %1497 = vmatprep.subr.mxu0 0.0
        %1498 = vmatpush1.msra.mxu0 %v1445
        %1499 = vmatprep.subr.mxu0 0.0
        %1500 = vmatpush1.msra.mxu0 %v1446
        %1501 = vmatprep.subr.mxu0 0.0
        %1502 = vmatpush1.msra.mxu0 %v1447
        %1503 = vmatprep.subr.mxu0 0.0
        %1504 = vmatpush1.msra.mxu0 %v1448
        %1505 = vmatprep.subr.mxu0 0.0
        %1506 = vmatpush1.msra.mxu0 %v1449
        %1507 = vmatprep.subr.mxu0 0.0
        %1508 = vmatpush1.msra.mxu0 %v1450
        %1509 = vmatprep.subr.mxu0 0.0
        %1510 = vmatpush1.msra.mxu0 %v1451
        %1511 = vmatprep.subr.mxu0 0.0
        %1512 = vmatpush1.msra.mxu0 %v1452
        %1513 = vmatprep.subr.mxu0 0.0
        %1514 = vmatpush1.msra.mxu0 %v1453
        %1515 = vmatprep.subr.mxu0 0.0
        %1516 = vmatpush1.msra.mxu0 %v1454
        %1517 = vmatprep.subr.mxu0 0.0
        %1518 = vmatpush1.msra.mxu0 %v1455
        %1519 = vmatprep.subr.mxu0 0.0
        %1520 = vmatpush1.msra.mxu0 %v1456
        %1521 = vmatprep.subr.mxu0 0.0
        %1522 = vmatpush1.msra.mxu0 %v1457
        %1523 = vmatprep.subr.mxu0 0.0
        %1524 = vmatpush1.msra.mxu0 %v1458
        %1525 = vmatprep.subr.mxu0 0.0
        %1526 = vmatpush1.msra.mxu0 %v1459
        %1527 = vmatprep.subr.mxu0 0.0
        %1528 = vmatpush1.msra.mxu0 %v1460
        %1529 = vmatprep.subr.mxu0 0.0
        %1530 = vmatpush1.msra.mxu0 %v1461
        %1531 = vmatprep.subr.mxu0 0.0
        %1532 = vmatpush1.msra.mxu0 %v1462
        %1533 = vmatprep.subr.mxu0 0.0
        %1534 = vmatpush1.msra.mxu0 %v1463
        %1535 = vmatprep.subr.mxu0 0.0
        %1536 = vmatpush1.msra.mxu0 %v1464
        %1537 = vmatprep.subr.mxu0 0.0
        %1538 = vmatpush1.msra.mxu0 %v1465
        %1539 = vmatprep.subr.mxu0 0.0
        %1540 = vmatpush1.msra.mxu0 %v1466
        %1541 = vmatprep.subr.mxu0 0.0
        %1542 = vmatpush1.msra.mxu0 %v1467
        %1543 = vmatprep.subr.mxu0 0.0
        %1544 = vmatpush1.msra.mxu0 %v1468
        %1545 = vmatprep.subr.mxu0 0.0
        %1546 = vmatpush1.msra.mxu0 %v1469
        %1547 = vmatprep.subr.mxu0 0.0
        %1548 = vmatpush1.msra.mxu0 %v1470
        %1549 = vmatprep.subr.mxu0 0.0
        %1550 = vmatpush1.msra.mxu0 %v1471
        %1551 = vmatprep.subr.mxu0 0.0
        %1552 = vmatpush1.msra.mxu0 %v1472
        %1553 = vmatprep.mubr.f32.mxu0 %v1433
        %1554 = vmatmul.mubr.f32.gmra.mrb[0].mxu0 %v1429
        %v1555 = vpop.f32.mrb[0].mxu0
        %v1556 = vadd.f32 0.0, %v1555
        %v1557 = vpop.f32.mrb[0].mxu0
        %1558 = vmatprep.mubr.f32.mxu0 %v1434
        %1559 = vmatmul.mubr.f32.gmra.mrb[0].mxu0 %v1430
        %v1560 = vpop.f32.mrb[0].mxu0
        %v1561 = vadd.f32 0.0, %v1560
        %v1562 = vpop.f32.mrb[0].mxu0
        %1563 = vmatprep.mubr.f32.mxu0 %v1435
        %1564 = vmatmul.mubr.f32.gmra.mrb[0].mxu0 %v1431
        %v1565 = vpop.f32.mrb[0].mxu0
        %v1566 = vadd.f32 0.0, %v1565
        %v1567 = vpop.f32.mrb[0].mxu0
        %1568 = vmatprep.mubr.f32.mxu0 %v1436
        %1569 = vmatmul.mubr.f32.gmra.mrb[0].mxu0 %v1432
        %v1570 = vpop.f32.mrb[0].mxu0
        %v1571 = vadd.f32 0.0, %v1570
        %v1572 = vpop.f32.mrb[0].mxu0
        %1573 = vdwg.mxu0
        %1574 = vmatprep.subr.mxu0 0.0
        %1575 = vmatpush1.msra.mxu0 %v1473
        %1576 = vmatprep.subr.mxu0 0.0
        %1577 = vmatpush1.msra.mxu0 %v1474
        %1578 = vmatprep.subr.mxu0 0.0
        %1579 = vmatpush1.msra.mxu0 %v1475
        %1580 = vmatprep.subr.mxu0 0.0
        %1581 = vmatpush1.msra.mxu0 %v1476
        %1582 = vmatprep.subr.mxu0 0.0
        %1583 = vmatpush1.msra.mxu0 %v1477
        %1584 = vmatprep.subr.mxu0 0.0
        %1585 = vmatpush1.msra.mxu0 %v1478
        %1586 = vmatprep.subr.mxu0 0.0
        %1587 = vmatpush1.msra.mxu0 %v1479
        %1588 = vmatprep.subr.mxu0 0.0
        %1589 = vmatpush1.msra.mxu0 %v1480
        %1590 = vmatprep.subr.mxu0 0.0
        %1591 = vmatpush1.msra.mxu0 %v1481
        %1592 = vmatprep.subr.mxu0 0.0
        %1593 = vmatpush1.msra.mxu0 %v1482
        %1594 = vmatprep.subr.mxu0 0.0
        %1595 = vmatpush1.msra.mxu0 %v1483
        %1596 = vmatprep.subr.mxu0 0.0
        %1597 = vmatpush1.msra.mxu0 %v1484
        %1598 = vmatprep.subr.mxu0 0.0
        %1599 = vmatpush1.msra.mxu0 %v1485
        %1600 = vmatprep.subr.mxu0 0.0
        %1601 = vmatpush1.msra.mxu0 %v1486
        %1602 = vmatprep.subr.mxu0 0.0
        %1603 = vmatpush1.msra.mxu0 %v1487
        %1604 = vmatprep.subr.mxu0 0.0
        %1605 = vmatpush1.msra.mxu0 %v1488
        %1606 = vmatprep.subr.mxu0 0.0
        %1607 = vmatpush1.msra.mxu0 0.0
        %1608 = vmatprep.subr.mxu0 0.0
        %1609 = vmatpush1.msra.mxu0 0.0
        %1610 = vmatprep.subr.mxu0 0.0
        %1611 = vmatpush1.msra.mxu0 0.0
        %1612 = vmatprep.subr.mxu0 0.0
        %1613 = vmatpush1.msra.mxu0 0.0
        %1614 = vmatprep.subr.mxu0 0.0
        %1615 = vmatpush1.msra.mxu0 0.0
        %1616 = vmatprep.subr.mxu0 0.0
        %1617 = vmatpush1.msra.mxu0 0.0
        %1618 = vmatprep.subr.mxu0 0.0
        %1619 = vmatpush1.msra.mxu0 0.0
        %1620 = vmatprep.subr.mxu0 0.0
        %1621 = vmatpush1.msra.mxu0 0.0
        %1622 = vmatprep.subr.mxu0 0.0
        %1623 = vmatpush1.msra.mxu0 0.0
        %1624 = vmatprep.subr.mxu0 0.0
        %1625 = vmatpush1.msra.mxu0 0.0
        %1626 = vmatprep.subr.mxu0 0.0
        %1627 = vmatpush1.msra.mxu0 0.0
        %1628 = vmatprep.subr.mxu0 0.0
        %1629 = vmatpush1.msra.mxu0 0.0
        %1630 = vmatprep.subr.mxu0 0.0
        %1631 = vmatpush1.msra.mxu0 0.0
        %1632 = vmatprep.subr.mxu0 0.0
        %1633 = vmatpush1.msra.mxu0 0.0
        %1634 = vmatprep.subr.mxu0 0.0
        %1635 = vmatpush1.msra.mxu0 0.0
        %1636 = vmatprep.subr.mxu0 0.0
        %1637 = vmatpush1.msra.mxu0 0.0
        %1638 = vmatprep.mubr.f32.mxu0 0.0
        %1639 = vmatmul.mubr.f32.gmra.mrb[0].mxu0 %v1437
        %v1640 = vpop.f32.mrb[0].mxu0
        %v1641 = vadd.f32 %v1556, %v1640
        %v1642 = vpop.f32.mrb[0].mxu0
        %1643 = vmatprep.mubr.f32.mxu0 0.0
        %1644 = vmatmul.mubr.f32.gmra.mrb[0].mxu0 %v1438
        %v1645 = vpop.f32.mrb[0].mxu0
        %v1646 = vadd.f32 %v1561, %v1645
        %v1647 = vpop.f32.mrb[0].mxu0
        %1648 = vmatprep.mubr.f32.mxu0 0.0
        %1649 = vmatmul.mubr.f32.gmra.mrb[0].mxu0 %v1439
        %v1650 = vpop.f32.mrb[0].mxu0
        %v1651 = vadd.f32 %v1566, %v1650
        %v1652 = vpop.f32.mrb[0].mxu0
        %1653 = vmatprep.mubr.f32.mxu0 0.0
        %1654 = vmatmul.mubr.f32.gmra.mrb[0].mxu0 %v1440
        %v1655 = vpop.f32.mrb[0].mxu0
        %v1656 = vadd.f32 %v1571, %v1655
        %v1657 = vpop.f32.mrb[0].mxu0
        %1658 = vdwg.mxu0
        %1659 = vmatprep.subr.mxu0 0.0
        %1660 = vmatpush1.msra.mxu0 %v1380
        %1661 = vmatprep.subr.mxu0 0.0
        %1662 = vmatpush1.msra.mxu0 %v1381
        %1663 = vmatprep.subr.mxu0 0.0
        %1664 = vmatpush1.msra.mxu0 %v1382
        %1665 = vmatprep.subr.mxu0 0.0
        %1666 = vmatpush1.msra.mxu0 %v1383
        %1667 = vmatprep.subr.mxu0 0.0
        %1668 = vmatpush1.msra.mxu0 %v1384
        %1669 = vmatprep.subr.mxu0 0.0
        %1670 = vmatpush1.msra.mxu0 %v1385
        %1671 = vmatprep.subr.mxu0 0.0
        %1672 = vmatpush1.msra.mxu0 %v1386
        %1673 = vmatprep.subr.mxu0 0.0
        %1674 = vmatpush1.msra.mxu0 %v1387
        %1675 = vmatprep.subr.mxu0 0.0
        %1676 = vmatpush1.msra.mxu0 %v1388
        %1677 = vmatprep.subr.mxu0 0.0
        %1678 = vmatpush1.msra.mxu0 %v1389
        %1679 = vmatprep.subr.mxu0 0.0
        %1680 = vmatpush1.msra.mxu0 %v1390
        %1681 = vmatprep.subr.mxu0 0.0
        %1682 = vmatpush1.msra.mxu0 %v1391
        %1683 = vmatprep.subr.mxu0 0.0
        %1684 = vmatpush1.msra.mxu0 %v1392
        %1685 = vmatprep.subr.mxu0 0.0
        %1686 = vmatpush1.msra.mxu0 %v1393
        %1687 = vmatprep.subr.mxu0 0.0
        %1688 = vmatpush1.msra.mxu0 %v1394
        %1689 = vmatprep.subr.mxu0 0.0
        %1690 = vmatpush1.msra.mxu0 %v1395
        %1691 = vmatprep.subr.mxu0 0.0
        %1692 = vmatpush1.msra.mxu0 %v1396
        %1693 = vmatprep.subr.mxu0 0.0
        %1694 = vmatpush1.msra.mxu0 %v1397
        %1695 = vmatprep.subr.mxu0 0.0
        %1696 = vmatpush1.msra.mxu0 %v1398
        %1697 = vmatprep.subr.mxu0 0.0
        %1698 = vmatpush1.msra.mxu0 %v1399
        %1699 = vmatprep.subr.mxu0 0.0
        %1700 = vmatpush1.msra.mxu0 %v1400
        %1701 = vmatprep.subr.mxu0 0.0
        %1702 = vmatpush1.msra.mxu0 %v1401
        %1703 = vmatprep.subr.mxu0 0.0
        %1704 = vmatpush1.msra.mxu0 %v1402
        %1705 = vmatprep.subr.mxu0 0.0
        %1706 = vmatpush1.msra.mxu0 %v1403
        %1707 = vmatprep.subr.mxu0 0.0
        %1708 = vmatpush1.msra.mxu0 %v1404
        %1709 = vmatprep.subr.mxu0 0.0
        %1710 = vmatpush1.msra.mxu0 %v1405
        %1711 = vmatprep.subr.mxu0 0.0
        %1712 = vmatpush1.msra.mxu0 %v1406
        %1713 = vmatprep.subr.mxu0 0.0
        %1714 = vmatpush1.msra.mxu0 %v1407
        %1715 = vmatprep.subr.mxu0 0.0
        %1716 = vmatpush1.msra.mxu0 %v1408
        %1717 = vmatprep.subr.mxu0 0.0
        %1718 = vmatpush1.msra.mxu0 %v1409
        %1719 = vmatprep.subr.mxu0 0.0
        %1720 = vmatpush1.msra.mxu0 %v1410
        %1721 = vmatprep.subr.mxu0 0.0
        %1722 = vmatpush1.msra.mxu0 %v1411
        %1723 = vmatprep.mubr.f32.mxu0 %v1372
        %1724 = vmatmul.mubr.f32.gmra.mrb[0].mxu0 %v1368
        %v1725 = vpop.f32.mrb[0].mxu0
        %v1726 = vadd.f32 %v1641, %v1725
        %v1727 = vpop.f32.mrb[0].mxu0
        %1728 = vmatprep.mubr.f32.mxu0 %v1373
        %1729 = vmatmul.mubr.f32.gmra.mrb[0].mxu0 %v1369
        %v1730 = vpop.f32.mrb[0].mxu0
        %v1731 = vadd.f32 %v1646, %v1730
        %v1732 = vpop.f32.mrb[0].mxu0
        %1733 = vmatprep.mubr.f32.mxu0 %v1374
        %1734 = vmatmul.mubr.f32.gmra.mrb[0].mxu0 %v1370
        %v1735 = vpop.f32.mrb[0].mxu0
        %v1736 = vadd.f32 %v1651, %v1735
        %v1737 = vpop.f32.mrb[0].mxu0
        %1738 = vmatprep.mubr.f32.mxu0 %v1375
        %1739 = vmatmul.mubr.f32.gmra.mrb[0].mxu0 %v1371
        %v1740 = vpop.f32.mrb[0].mxu0
        %v1741 = vadd.f32 %v1656, %v1740
        %v1742 = vpop.f32.mrb[0].mxu0
        %1743 = vdwg.mxu0
        %1744 = vmatprep.subr.mxu0 0.0
        %1745 = vmatpush1.msra.mxu0 %v1412
        %1746 = vmatprep.subr.mxu0 0.0
        %1747 = vmatpush1.msra.mxu0 %v1413
        %1748 = vmatprep.subr.mxu0 0.0
        %1749 = vmatpush1.msra.mxu0 %v1414
        %1750 = vmatprep.subr.mxu0 0.0
        %1751 = vmatpush1.msra.mxu0 %v1415
        %1752 = vmatprep.subr.mxu0 0.0
        %1753 = vmatpush1.msra.mxu0 %v1416
        %1754 = vmatprep.subr.mxu0 0.0
        %1755 = vmatpush1.msra.mxu0 %v1417
        %1756 = vmatprep.subr.mxu0 0.0
        %1757 = vmatpush1.msra.mxu0 %v1418
        %1758 = vmatprep.subr.mxu0 0.0
        %1759 = vmatpush1.msra.mxu0 %v1419
        %1760 = vmatprep.subr.mxu0 0.0
        %1761 = vmatpush1.msra.mxu0 %v1420
        %1762 = vmatprep.subr.mxu0 0.0
        %1763 = vmatpush1.msra.mxu0 %v1421
        %1764 = vmatprep.subr.mxu0 0.0
        %1765 = vmatpush1.msra.mxu0 %v1422
        %1766 = vmatprep.subr.mxu0 0.0
        %1767 = vmatpush1.msra.mxu0 %v1423
        %1768 = vmatprep.subr.mxu0 0.0
        %1769 = vmatpush1.msra.mxu0 %v1424
        %1770 = vmatprep.subr.mxu0 0.0
        %1771 = vmatpush1.msra.mxu0 %v1425
        %1772 = vmatprep.subr.mxu0 0.0
        %1773 = vmatpush1.msra.mxu0 %v1426
        %1774 = vmatprep.subr.mxu0 0.0
        %1775 = vmatpush1.msra.mxu0 %v1427
        %1776 = vmatprep.subr.mxu0 0.0
        %1777 = vmatpush1.msra.mxu0 0.0
        %1778 = vmatprep.subr.mxu0 0.0
        %1779 = vmatpush1.msra.mxu0 0.0
        %1780 = vmatprep.subr.mxu0 0.0
        %1781 = vmatpush1.msra.mxu0 0.0
        %1782 = vmatprep.subr.mxu0 0.0
        %1783 = vmatpush1.msra.mxu0 0.0
        %1784 = vmatprep.subr.mxu0 0.0
        %1785 = vmatpush1.msra.mxu0 0.0
        %1786 = vmatprep.subr.mxu0 0.0
        %1787 = vmatpush1.msra.mxu0 0.0
        %1788 = vmatprep.subr.mxu0 0.0
        %1789 = vmatpush1.msra.mxu0 0.0
        %1790 = vmatprep.subr.mxu0 0.0
        %1791 = vmatpush1.msra.mxu0 0.0
        %1792 = vmatprep.subr.mxu0 0.0
        %1793 = vmatpush1.msra.mxu0 0.0
        %1794 = vmatprep.subr.mxu0 0.0
        %1795 = vmatpush1.msra.mxu0 0.0
        %1796 = vmatprep.subr.mxu0 0.0
        %1797 = vmatpush1.msra.mxu0 0.0
        %1798 = vmatprep.subr.mxu0 0.0
        %1799 = vmatpush1.msra.mxu0 0.0
        %1800 = vmatprep.subr.mxu0 0.0
        %1801 = vmatpush1.msra.mxu0 0.0
        %1802 = vmatprep.subr.mxu0 0.0
        %1803 = vmatpush1.msra.mxu0 0.0
        %1804 = vmatprep.subr.mxu0 0.0
        %1805 = vmatpush1.msra.mxu0 0.0
        %1806 = vmatprep.subr.mxu0 0.0
        %1807 = vmatpush1.msra.mxu0 0.0
        %1808 = vmatprep.mubr.f32.mxu0 0.0
        %1809 = vmatmul.mubr.f32.gmra.mrb[0].mxu0 %v1376
        %v1810 = vpop.f32.mrb[0].mxu0
        %v1811 = vadd.f32 %v1726, %v1810
        %v1812 = vpop.f32.mrb[0].mxu0
        %1813 = vmatprep.mubr.f32.mxu0 0.0
        %1814 = vmatmul.mubr.f32.gmra.mrb[0].mxu0 %v1377
        %v1815 = vpop.f32.mrb[0].mxu0
        %v1816 = vadd.f32 %v1731, %v1815
        %v1817 = vpop.f32.mrb[0].mxu0
        %1818 = vmatprep.mubr.f32.mxu0 0.0
        %1819 = vmatmul.mubr.f32.gmra.mrb[0].mxu0 %v1378
        %v1820 = vpop.f32.mrb[0].mxu0
        %v1821 = vadd.f32 %v1736, %v1820
        %v1822 = vpop.f32.mrb[0].mxu0
        %1823 = vmatprep.mubr.f32.mxu0 0.0
        %1824 = vmatmul.mubr.f32.gmra.mrb[0].mxu0 %v1379
        %v1825 = vpop.f32.mrb[0].mxu0
        %v1826 = vadd.f32 %v1741, %v1825
        %v1827 = vpop.f32.mrb[0].mxu0
        %1828 = vdwg.mxu0
        %s1829 = scalar_lea.vmem [#allocation3], 32
        %v1830 = vld [vmem:[%s1829] sm:$0xff]
        %v1831 = vld [vmem:[%s1829 + $0x10] sm:$0xff]
        %v1832 = vld [vmem:[%s1829 + $0x20] sm:$0xff]
        %v1833 = vld [vmem:[%s1829 + $0x30] sm:$0xff]
        %v1834 = vld [vmem:[%s1829 + $0x1] sm:$0xff]
        %v1835 = vld [vmem:[%s1829 + $0x11] sm:$0xff]
        %v1836 = vld [vmem:[%s1829 + $0x21] sm:$0xff]
        %v1837 = vld [vmem:[%s1829 + $0x31] sm:$0xff]
        %v1838 = vld [vmem:[%s1829 + $0x2] sm:$0xff]
        %v1839 = vld [vmem:[%s1829 + $0x12] sm:$0xff]
        %v1840 = vld [vmem:[%s1829 + $0x22] sm:$0xff]
        %v1841 = vld [vmem:[%s1829 + $0x32] sm:$0xff]
        %v1842 = vld [vmem:[#allocation10 + $0x300] sm:$0xff]
        %v1843 = vld [vmem:[#allocation10 + $0x308] sm:$0xff]
        %v1844 = vld [vmem:[#allocation10 + $0x310] sm:$0xff]
        %v1845 = vld [vmem:[#allocation10 + $0x318] sm:$0xff]
        %v1846 = vld [vmem:[#allocation10 + $0x320] sm:$0xff]
        %v1847 = vld [vmem:[#allocation10 + $0x328] sm:$0xff]
        %v1848 = vld [vmem:[#allocation10 + $0x330] sm:$0xff]
        %v1849 = vld [vmem:[#allocation10 + $0x338] sm:$0xff]
        %v1850 = vld [vmem:[#allocation10 + $0x340] sm:$0xff]
        %v1851 = vld [vmem:[#allocation10 + $0x348] sm:$0xff]
        %v1852 = vld [vmem:[#allocation10 + $0x350] sm:$0xff]
        %v1853 = vld [vmem:[#allocation10 + $0x358] sm:$0xff]
        %v1854 = vld [vmem:[#allocation10 + $0x360] sm:$0xff]
        %v1855 = vld [vmem:[#allocation10 + $0x368] sm:$0xff]
        %v1856 = vld [vmem:[#allocation10 + $0x370] sm:$0xff]
        %v1857 = vld [vmem:[#allocation10 + $0x378] sm:$0xff]
        %v1858 = vld [vmem:[#allocation10 + $0x380] sm:$0xff]
        %v1859 = vld [vmem:[#allocation10 + $0x388] sm:$0xff]
        %v1860 = vld [vmem:[#allocation10 + $0x390] sm:$0xff]
        %v1861 = vld [vmem:[#allocation10 + $0x398] sm:$0xff]
        %v1862 = vld [vmem:[#allocation10 + $0x3a0] sm:$0xff]
        %v1863 = vld [vmem:[#allocation10 + $0x3a8] sm:$0xff]
        %v1864 = vld [vmem:[#allocation10 + $0x3b0] sm:$0xff]
        %v1865 = vld [vmem:[#allocation10 + $0x3b8] sm:$0xff]
        %v1866 = vld [vmem:[#allocation10 + $0x3c0] sm:$0xff]
        %v1867 = vld [vmem:[#allocation10 + $0x3c8] sm:$0xff]
        %v1868 = vld [vmem:[#allocation10 + $0x3d0] sm:$0xff]
        %v1869 = vld [vmem:[#allocation10 + $0x3d8] sm:$0xff]
        %v1870 = vld [vmem:[#allocation10 + $0x3e0] sm:$0xff]
        %v1871 = vld [vmem:[#allocation10 + $0x3e8] sm:$0xff]
        %v1872 = vld [vmem:[#allocation10 + $0x3f0] sm:$0xff]
        %v1873 = vld [vmem:[#allocation10 + $0x3f8] sm:$0xff]
        %v1874 = vld [vmem:[#allocation10 + $0x400] sm:$0xff]
        %v1875 = vld [vmem:[#allocation10 + $0x408] sm:$0xff]
        %v1876 = vld [vmem:[#allocation10 + $0x410] sm:$0xff]
        %v1877 = vld [vmem:[#allocation10 + $0x418] sm:$0xff]
        %v1878 = vld [vmem:[#allocation10 + $0x420] sm:$0xff]
        %v1879 = vld [vmem:[#allocation10 + $0x428] sm:$0xff]
        %v1880 = vld [vmem:[#allocation10 + $0x430] sm:$0xff]
        %v1881 = vld [vmem:[#allocation10 + $0x438] sm:$0xff]
        %v1882 = vld [vmem:[#allocation10 + $0x440] sm:$0xff]
        %v1883 = vld [vmem:[#allocation10 + $0x448] sm:$0xff]
        %v1884 = vld [vmem:[#allocation10 + $0x450] sm:$0xff]
        %v1885 = vld [vmem:[#allocation10 + $0x458] sm:$0xff]
        %v1886 = vld [vmem:[#allocation10 + $0x460] sm:$0xff]
        %v1887 = vld [vmem:[#allocation10 + $0x468] sm:$0xff]
        %v1888 = vld [vmem:[#allocation10 + $0x470] sm:$0xff]
        %v1889 = vld [vmem:[#allocation10 + $0x478] sm:$0xff]
        %1890 = vmatprep.subr.mxu0 0.0
        %1891 = vmatpush1.msra.mxu0 %v1842
        %1892 = vmatprep.subr.mxu0 0.0
        %1893 = vmatpush1.msra.mxu0 %v1843
        %1894 = vmatprep.subr.mxu0 0.0
        %1895 = vmatpush1.msra.mxu0 %v1844
        %1896 = vmatprep.subr.mxu0 0.0
        %1897 = vmatpush1.msra.mxu0 %v1845
        %1898 = vmatprep.subr.mxu0 0.0
        %1899 = vmatpush1.msra.mxu0 %v1846
        %1900 = vmatprep.subr.mxu0 0.0
        %1901 = vmatpush1.msra.mxu0 %v1847
        %1902 = vmatprep.subr.mxu0 0.0
        %1903 = vmatpush1.msra.mxu0 %v1848
        %1904 = vmatprep.subr.mxu0 0.0
        %1905 = vmatpush1.msra.mxu0 %v1849
        %1906 = vmatprep.subr.mxu0 0.0
        %1907 = vmatpush1.msra.mxu0 %v1850
        %1908 = vmatprep.subr.mxu0 0.0
        %1909 = vmatpush1.msra.mxu0 %v1851
        %1910 = vmatprep.subr.mxu0 0.0
        %1911 = vmatpush1.msra.mxu0 %v1852
        %1912 = vmatprep.subr.mxu0 0.0
        %1913 = vmatpush1.msra.mxu0 %v1853
        %1914 = vmatprep.subr.mxu0 0.0
        %1915 = vmatpush1.msra.mxu0 %v1854
        %1916 = vmatprep.subr.mxu0 0.0
        %1917 = vmatpush1.msra.mxu0 %v1855
        %1918 = vmatprep.subr.mxu0 0.0
        %1919 = vmatpush1.msra.mxu0 %v1856
        %1920 = vmatprep.subr.mxu0 0.0
        %1921 = vmatpush1.msra.mxu0 %v1857
        %1922 = vmatprep.subr.mxu0 0.0
        %1923 = vmatpush1.msra.mxu0 %v1858
        %1924 = vmatprep.subr.mxu0 0.0
        %1925 = vmatpush1.msra.mxu0 %v1859
        %1926 = vmatprep.subr.mxu0 0.0
        %1927 = vmatpush1.msra.mxu0 %v1860
        %1928 = vmatprep.subr.mxu0 0.0
        %1929 = vmatpush1.msra.mxu0 %v1861
        %1930 = vmatprep.subr.mxu0 0.0
        %1931 = vmatpush1.msra.mxu0 %v1862
        %1932 = vmatprep.subr.mxu0 0.0
        %1933 = vmatpush1.msra.mxu0 %v1863
        %1934 = vmatprep.subr.mxu0 0.0
        %1935 = vmatpush1.msra.mxu0 %v1864
        %1936 = vmatprep.subr.mxu0 0.0
        %1937 = vmatpush1.msra.mxu0 %v1865
        %1938 = vmatprep.subr.mxu0 0.0
        %1939 = vmatpush1.msra.mxu0 %v1866
        %1940 = vmatprep.subr.mxu0 0.0
        %1941 = vmatpush1.msra.mxu0 %v1867
        %1942 = vmatprep.subr.mxu0 0.0
        %1943 = vmatpush1.msra.mxu0 %v1868
        %1944 = vmatprep.subr.mxu0 0.0
        %1945 = vmatpush1.msra.mxu0 %v1869
        %1946 = vmatprep.subr.mxu0 0.0
        %1947 = vmatpush1.msra.mxu0 %v1870
        %1948 = vmatprep.subr.mxu0 0.0
        %1949 = vmatpush1.msra.mxu0 %v1871
        %1950 = vmatprep.subr.mxu0 0.0
        %1951 = vmatpush1.msra.mxu0 %v1872
        %1952 = vmatprep.subr.mxu0 0.0
        %1953 = vmatpush1.msra.mxu0 %v1873
        %1954 = vmatprep.mubr.f32.mxu0 %v1834
        %1955 = vmatmul.mubr.f32.gmra.mrb[0].mxu0 %v1830
        %v1956 = vpop.f32.mrb[0].mxu0
        %v1957 = vadd.f32 0.0, %v1956
        %v1958 = vpop.f32.mrb[0].mxu0
        %1959 = vmatprep.mubr.f32.mxu0 %v1835
        %1960 = vmatmul.mubr.f32.gmra.mrb[0].mxu0 %v1831
        %v1961 = vpop.f32.mrb[0].mxu0
        %v1962 = vadd.f32 0.0, %v1961
        %v1963 = vpop.f32.mrb[0].mxu0
        %1964 = vmatprep.mubr.f32.mxu0 %v1836
        %1965 = vmatmul.mubr.f32.gmra.mrb[0].mxu0 %v1832
        %v1966 = vpop.f32.mrb[0].mxu0
        %v1967 = vadd.f32 0.0, %v1966
        %v1968 = vpop.f32.mrb[0].mxu0
        %1969 = vmatprep.mubr.f32.mxu0 %v1837
        %1970 = vmatmul.mubr.f32.gmra.mrb[0].mxu0 %v1833
        %v1971 = vpop.f32.mrb[0].mxu0
        %v1972 = vadd.f32 0.0, %v1971
        %v1973 = vpop.f32.mrb[0].mxu0
        %1974 = vdwg.mxu0
        %1975 = vmatprep.subr.mxu0 0.0
        %1976 = vmatpush1.msra.mxu0 %v1874
        %1977 = vmatprep.subr.mxu0 0.0
        %1978 = vmatpush1.msra.mxu0 %v1875
        %1979 = vmatprep.subr.mxu0 0.0
        %1980 = vmatpush1.msra.mxu0 %v1876
        %1981 = vmatprep.subr.mxu0 0.0
        %1982 = vmatpush1.msra.mxu0 %v1877
        %1983 = vmatprep.subr.mxu0 0.0
        %1984 = vmatpush1.msra.mxu0 %v1878
        %1985 = vmatprep.subr.mxu0 0.0
        %1986 = vmatpush1.msra.mxu0 %v1879
        %1987 = vmatprep.subr.mxu0 0.0
        %1988 = vmatpush1.msra.mxu0 %v1880
        %1989 = vmatprep.subr.mxu0 0.0
        %1990 = vmatpush1.msra.mxu0 %v1881
        %1991 = vmatprep.subr.mxu0 0.0
        %1992 = vmatpush1.msra.mxu0 %v1882
        %1993 = vmatprep.subr.mxu0 0.0
        %1994 = vmatpush1.msra.mxu0 %v1883
        %1995 = vmatprep.subr.mxu0 0.0
        %1996 = vmatpush1.msra.mxu0 %v1884
        %1997 = vmatprep.subr.mxu0 0.0
        %1998 = vmatpush1.msra.mxu0 %v1885
        %1999 = vmatprep.subr.mxu0 0.0
        %2000 = vmatpush1.msra.mxu0 %v1886
        %2001 = vmatprep.subr.mxu0 0.0
        %2002 = vmatpush1.msra.mxu0 %v1887
        %2003 = vmatprep.subr.mxu0 0.0
        %2004 = vmatpush1.msra.mxu0 %v1888
        %2005 = vmatprep.subr.mxu0 0.0
        %2006 = vmatpush1.msra.mxu0 %v1889
        %2007 = vmatprep.subr.mxu0 0.0
        %2008 = vmatpush1.msra.mxu0 0.0
        %2009 = vmatprep.subr.mxu0 0.0
        %2010 = vmatpush1.msra.mxu0 0.0
        %2011 = vmatprep.subr.mxu0 0.0
        %2012 = vmatpush1.msra.mxu0 0.0
        %2013 = vmatprep.subr.mxu0 0.0
        %2014 = vmatpush1.msra.mxu0 0.0
        %2015 = vmatprep.subr.mxu0 0.0
        %2016 = vmatpush1.msra.mxu0 0.0
        %2017 = vmatprep.subr.mxu0 0.0
        %2018 = vmatpush1.msra.mxu0 0.0
        %2019 = vmatprep.subr.mxu0 0.0
        %2020 = vmatpush1.msra.mxu0 0.0
        %2021 = vmatprep.subr.mxu0 0.0
        %2022 = vmatpush1.msra.mxu0 0.0
        %2023 = vmatprep.subr.mxu0 0.0
        %2024 = vmatpush1.msra.mxu0 0.0
        %2025 = vmatprep.subr.mxu0 0.0
        %2026 = vmatpush1.msra.mxu0 0.0
        %2027 = vmatprep.subr.mxu0 0.0
        %2028 = vmatpush1.msra.mxu0 0.0
        %2029 = vmatprep.subr.mxu0 0.0
        %2030 = vmatpush1.msra.mxu0 0.0
        %2031 = vmatprep.subr.mxu0 0.0
        %2032 = vmatpush1.msra.mxu0 0.0
        %2033 = vmatprep.subr.mxu0 0.0
        %2034 = vmatpush1.msra.mxu0 0.0
        %2035 = vmatprep.subr.mxu0 0.0
        %2036 = vmatpush1.msra.mxu0 0.0
        %2037 = vmatprep.subr.mxu0 0.0
        %2038 = vmatpush1.msra.mxu0 0.0
        %2039 = vmatprep.mubr.f32.mxu0 0.0
        %2040 = vmatmul.mubr.f32.gmra.mrb[0].mxu0 %v1838
        %v2041 = vpop.f32.mrb[0].mxu0
        %v2042 = vadd.f32 %v1957, %v2041
        %v2043 = vpop.f32.mrb[0].mxu0
        %2044 = vmatprep.mubr.f32.mxu0 0.0
        %2045 = vmatmul.mubr.f32.gmra.mrb[0].mxu0 %v1839
        %v2046 = vpop.f32.mrb[0].mxu0
        %v2047 = vadd.f32 %v1962, %v2046
        %v2048 = vpop.f32.mrb[0].mxu0
        %2049 = vmatprep.mubr.f32.mxu0 0.0
        %2050 = vmatmul.mubr.f32.gmra.mrb[0].mxu0 %v1840
        %v2051 = vpop.f32.mrb[0].mxu0
        %v2052 = vadd.f32 %v1967, %v2051
        %v2053 = vpop.f32.mrb[0].mxu0
        %2054 = vmatprep.mubr.f32.mxu0 0.0
        %2055 = vmatmul.mubr.f32.gmra.mrb[0].mxu0 %v1841
        %v2056 = vpop.f32.mrb[0].mxu0
        %v2057 = vadd.f32 %v1972, %v2056
        %v2058 = vpop.f32.mrb[0].mxu0
        %2059 = vdwg.mxu0
        %v2060 = vadd.f32 %v1811, %v2042
        %v2061 = vadd.f32 %v1816, %v2047
        %v2062 = vadd.f32 %v1821, %v2052
        %v2063 = vadd.f32 %v1826, %v2057
        %v2064 = vld [vmem:[%s6] sm:$0x1]
        %v2066 = vlaneseq
        %v2067 = vshrl.u32 %v2066, 7
        %v2068 = vsub.s32 0, %v2067
        %v2069 = vrot.slane %v2064, %v2068
        %v2071 = vmul.f32 %v2060, %v2069
        %v2072 = vmul.f32 %v2061, %v2069
        %v2073 = vmul.f32 %v2062, %v2069
        %v2074 = vmul.f32 %v2063, %v2069
        %v2075 = vld [vmem:[%s7] sm:$0x1]
        %v2077 = vlaneseq
        %v2078 = vshrl.u32 %v2077, 7
        %v2079 = vsub.s32 0, %v2078
        %v2080 = vrot.slane %v2075, %v2079
        %v2082 = vadd.f32 %v2071, %v2080
        %v2083 = vadd.f32 %v2072, %v2080
        %v2084 = vadd.f32 %v2073, %v2080
        %v2085 = vadd.f32 %v2074, %v2080
        %v2086 = vmax.f32 %v2082, 0.0
        %v2087 = vmax.f32 %v2083, 0.0
        %v2088 = vmax.f32 %v2084, 0.0
        %v2089 = vmax.f32 %v2085, 0.0
        %2090 = vst [vmem:[%s439] sm:$0xff] %v2086
        %2091 = vst [vmem:[%s439 + $0x8] sm:$0xff] %v2087
        %2092 = vst [vmem:[%s439 + $0x10] sm:$0xff] %v2088
        %2093 = vst [vmem:[%s439 + $0x18] sm:$0xff] %v2089
        %s2094 = sand.u32 %s233, 1
        %s2095 = scalar_lea.sflag [#allocation6], %s2094
        %s2096 = sand.u32 %s233, 1
        %s2097 = smul.addr %s2096, 32
        %s2098 = scalar_lea.vmem [#allocation12], %s2097
        // Predicated region
        $region77: #{tpu_custom_call.1} parent=51 // pred_check
          %p2099 = pneg %p243
        $region78: #{tpu_custom_call.1} parent=51 // pred_check_branch
          %2101 = sbr.rel (%p2099) target = $region80
        $region79: #{tpu_custom_call.1} parent=51 // pred_region
          %s2102 = smul.u32 4, %s34
          %s2104 = ssub.s32 512, 512
          %2105 = vsyncadd %s2095, %s2104
          %s2106 = smul.addr %s33, 8
          %s2107 = sadd.s32 %s2102, %s2106
          %s2108 = smul.addr %s2107, 128
          %s2109 = scalar_lea.hbm %s8, %s2108
          %s2110 = sshll.u32 %s2098, 4
          %s2111 = int_to_ptr.vmem [resolvable:$true] %s2110
          %2116 = dma.vmem_to_hbm [thread:$0]  %s2111, 512, %s2109, %s2095, 128, 128, 8
        $region80: #{tpu_custom_call.1} parent=51 // pred_fallthru
          _
      $region52: #{tpu_custom_call.1} parent=5 // pred_fallthru
        _
      %p2117 = scmp.le.s32.totalorder 2, %s24
      // Predicated region
      $region81: #{tpu_custom_call.1} parent=5 // pred_check
        %p2118 = pneg %p2117
      $region82: #{tpu_custom_call.1} parent=5 // pred_check_branch
        %2120 = sbr.rel (%p2118) target = $region84
      $region83: #{tpu_custom_call.1} parent=5 // pred_region
        %s2121 = ssub.s32 %s24, 2
        // Predicated region
        $region85: #{tpu_custom_call.1} parent=83 // pred_check
          %p2122 = pneg %p249
        $region86: #{tpu_custom_call.1} parent=83 // pred_check_branch
          %2124 = sbr.rel (%p2122) target = $region88
        $region87: #{tpu_custom_call.1} parent=83 // pred_region
          %s2125 = sand.u32 %s234, 1
          %s2126 = scalar_lea.sflag [#allocation6], %s2125
          %s2127 = sand.u32 %s234, 1
          %s2128 = smul.addr %s2127, 32
          %s2129 = scalar_lea.vmem [#allocation12], %s2128
          %2130 = dma.done %s2126, 512
        $region88: #{tpu_custom_call.1} parent=83 // pred_fallthru
          _
      $region84: #{tpu_custom_call.1} parent=5 // pred_fallthru
        _
    $region6: #{tpu_custom_call.1} parent=1 // loop_footer
      %s28 = sadd.s32 1, %s24
    $region7: #{tpu_custom_call.1} parent=1 // loop_footer_branch
      %23 = sbr.rel target = $region3
    $region8: #{tpu_custom_call.1} parent=1 // loop_exit
      _
    %2131 = vsyncpa [#allocation5], 1
    %s2132 = scalar_lea.sflag [#allocation5], 1
    %2133 = vsyncpa %s2132, 1
    %2134 = vsyncpa [#allocation8], 1
    %s2135 = scalar_lea.sflag [#allocation8], 1
    %2136 = vsyncpa %s2135, 1
    %2137 = vsyncpa [#allocation11], 1
    %2138 = vsyncpa [#allocation6], 1
    %s2139 = scalar_lea.sflag [#allocation6], 1
    %2140 = vsyncpa %s2139, 1

</llo_original>
